<compile_context>
chip_gen: v7x
topology: tpu7x:2x2x1
jax: 0.10.0
libtpu: 0.0.40
codegen_flags: <defaults>
</compile_context>

<pallas_src>
import jax
import jax.numpy as jnp
import numpy as np
from jax.experimental import pallas as pl
from jax.experimental.pallas import tpu as pltpu

HIDDEN = 512  # dense1 output width (nn.Linear(text_emb_size, 512))


def _mlp_head_kernel(x_ref, w1_ref, b1_ref, dw_ref, db_ref, o_ref):
    # dense1: bf16 operands, f32 accumulation on the MXU; bias + ReLU on the VPU.
    h = jnp.dot(x_ref[...], w1_ref[...], preferred_element_type=jnp.float32)
    h = jnp.maximum(h + b1_ref[...], 0.0)                       # (TILE_B, 512) f32

    # 2-class head collapsed to a logit difference: delta = z0 - z1  -> (TILE_B, 1)
    delta = jnp.dot(h, dw_ref[...], preferred_element_type=jnp.float32) + db_ref[...]

    # log_softmax closed form for 2 classes (numerically stable softplus):
    #   logp1 = -softplus(delta),  logp0 = delta + logp1
    sp = jnp.maximum(delta, 0.0) + jnp.log1p(jnp.exp(-jnp.abs(delta)))
    logp1 = -sp                                                  # (TILE_B, 1)

    # Assemble the (TILE_B, 2) output block with VPU-only ops (no concat/transpose):
    # column 0 gets delta + logp1 (= logp0), column 1 gets logp1.
    lane = jax.lax.broadcasted_iota(jnp.int32, o_ref.shape, 1)   # 0 / 1 per class lane
    o_ref[...] = (logp1 + jnp.where(lane == 0, delta, 0.0)).astype(o_ref.dtype)


def segmentation_final_pallas(x, w1, b1, w2, b2, *, tile_b=512):
    """x: (B, E) float32 text embeddings -> (B, 2) log-probabilities."""
    B, E = x.shape

    # Pad the batch to a multiple of tile_b so the last block is full (padded rows
    # are computed on and sliced off; they cannot produce NaNs).
    n_blocks = pl.cdiv(B, tile_b)
    Bp = n_blocks * tile_b
    if Bp != B:
        x = jnp.pad(x, ((0, Bp - B), (0, 0)))

    # bf16 for the large matmul operands (x, w1); everything else stays f32.
    x_bf = x.astype(jnp.bfloat16)
    w1_bf = w1.astype(jnp.bfloat16)
    b1_2d = b1.reshape(1, HIDDEN).astype(jnp.float32)
    # 2-class head -> single logit-difference column.
    dw = (w2[:, 0] - w2[:, 1]).reshape(HIDDEN, 1).astype(jnp.float32)
    db = (b2[0] - b2[1]).reshape(1, 1).astype(jnp.float32)

    cost = pl.CostEstimate(
        flops=int(2 * Bp * E * HIDDEN + 2 * Bp * HIDDEN),
        transcendentals=int(2 * Bp),  # exp + log1p per row
        bytes_accessed=int(Bp * E * 2 + E * HIDDEN * 2 + HIDDEN * 4
                           + HIDDEN * 4 + 4 + Bp * 2 * 4),
    )

    out = pl.pallas_call(
        _mlp_head_kernel,
        out_shape=jax.ShapeDtypeStruct((Bp, 2), jnp.float32),
        grid=(n_blocks,),
        in_specs=[
            pl.BlockSpec((tile_b, E), lambda i: (i, 0)),    # x: tiled over batch
            pl.BlockSpec((E, HIDDEN), lambda i: (0, 0)),    # w1: VMEM-resident
            pl.BlockSpec((1, HIDDEN), lambda i: (0, 0)),    # b1: VMEM-resident
            pl.BlockSpec((HIDDEN, 1), lambda i: (0, 0)),    # dw: VMEM-resident
            pl.BlockSpec((1, 1), lambda i: (0, 0)),         # db
        ],
        out_specs=pl.BlockSpec((tile_b, 2), lambda i: (i, 0)),
        compiler_params=pltpu.CompilerParams(
            dimension_semantics=("parallel",),  # shard batch tiles across v7x's 2 TCs
        ),
        cost_estimate=cost,
    )(x_bf, w1_bf, b1_2d, dw, db)
    return out[:B]


def text_module(instructions, emb_table):
    """Placeholder text encoder: embedding lookup + mean pool over sequence.

    instructions: (B, S) int32 token ids -> (B, E) float32 embeddings.
    """
    # TODO(synk): the real text_module is injected externally in PyTorch; this
    # deterministic stand-in (embedding gather + mean pool) stays in plain JAX glue.
    emb = jnp.take(emb_table, instructions, axis=0)  # (B, S, E)
    return jnp.mean(emb, axis=1)                     # (B, E)


def _init_params(key, text_emb_size, vocab_size):
    k0, k1, k2, k3, k4, k5 = jax.random.split(key, 6)
    # nn.Linear-style uniform(-1/sqrt(fan_in), 1/sqrt(fan_in)) init, deterministic.
    lim1 = 1.0 / np.sqrt(text_emb_size)
    lim2 = 1.0 / np.sqrt(HIDDEN)
    emb_table = jax.random.normal(k0, (vocab_size, text_emb_size), jnp.float32) * 0.02
    w1 = jax.random.uniform(k1, (text_emb_size, HIDDEN), jnp.float32, -lim1, lim1)
    b1 = jax.random.uniform(k2, (HIDDEN,), jnp.float32, -lim1, lim1)
    w2 = jax.random.uniform(k3, (HIDDEN, 2), jnp.float32, -lim2, lim2)
    b2 = jax.random.uniform(k4, (2,), jnp.float32, -lim2, lim2)
    return emb_table, w1, b1, w2, b2, k5


def _reference(x, w1, b1, w2, b2):
    h = jnp.maximum(x @ w1 + b1, 0.0)
    logits = h @ w2 + b2
    return jax.nn.log_softmax(logits, axis=-1)


if __name__ == "__main__":
    B, S, E, VOCAB = 2, 8, 32, 64

    key = jax.random.PRNGKey(0)
    emb_table, w1, b1, w2, b2, key = _init_params(key, E, VOCAB)

    # Deterministic example "instructions": integer token ids (B, S).
    instructions = jax.random.randint(key, (B, S), 0, VOCAB, dtype=jnp.int32)

    # Glue: text_module in plain JAX.
    x = text_module(instructions, emb_table)  # (B, E) float32

    # Hot path in Pallas.
    out = segmentation_final_pallas(x, w1, b1, w2, b2)
    out = jax.block_until_ready(out)

    # Loosened tolerance vs the f32 reference because x/w1 feed the MXU in bf16.
    ref = _reference(x, w1, b1, w2, b2)
    np.testing.assert_allclose(np.asarray(out), np.asarray(ref), rtol=2e-2, atol=2e-2)

    print("KERNEL_OK")
</pallas_src>

<mosaic_0001>
module attributes {stable_mosaic.version = 11 : i64} {
  func.func @_mlp_head_kernel(%arg0: i32, %arg1: memref<512x32xbf16, #tpu.memory_space<vmem>>, %arg2: memref<32x512xbf16, #tpu.memory_space<vmem>>, %arg3: memref<1x512xf32, #tpu.memory_space<vmem>>, %arg4: memref<512x1xf32, #tpu.memory_space<vmem>>, %arg5: memref<1x1xf32, #tpu.memory_space<vmem>>, %arg6: memref<512x2xf32, #tpu.memory_space<vmem>>) attributes {dimension_semantics = [#tpu.dimension_semantics<parallel>], iteration_bounds = array<i64: 1>, scalar_prefetch = 0 : i64, scratch_operands = 0 : i64, tpu.core_type = #tpu.core_type<tc>, window_params = [{transform_indices = @transform_0, window_bounds = array<i64: 512, 32>}, {pipeline_mode = #tpu.pipeline_mode<synchronous>, transform_indices = @transform_1, window_bounds = array<i64: 32, 512>}, {pipeline_mode = #tpu.pipeline_mode<synchronous>, transform_indices = @transform_2, window_bounds = array<i64: 1, 512>}, {pipeline_mode = #tpu.pipeline_mode<synchronous>, transform_indices = @transform_3, window_bounds = array<i64: 512, 1>}, {pipeline_mode = #tpu.pipeline_mode<synchronous>, transform_indices = @transform_4, window_bounds = array<i64: 1, 1>}, {transform_indices = @transform_5, window_bounds = array<i64: 512, 2>}]} {
    %c0 = arith.constant 0 : index
    %c0_0 = arith.constant 0 : index
    %0 = vector.load %arg1[%c0, %c0_0] : memref<512x32xbf16, #tpu.memory_space<vmem>>, vector<512x32xbf16>
    %c0_1 = arith.constant 0 : index
    %c0_2 = arith.constant 0 : index
    %1 = vector.load %arg2[%c0_1, %c0_2] : memref<32x512xbf16, #tpu.memory_space<vmem>>, vector<32x512xbf16>
    %cst = arith.constant dense<0.000000e+00> : vector<512x512xf32>
    %2 = tpu.matmul %0, %1, %cst {dimension_numbers = #tpu.dot_dimension_numbers<[1], [0], [0], [1], [0, 0, 1, 1], [], []>} : vector<512x32xbf16>, vector<32x512xbf16>, vector<512x512xf32> -> vector<512x512xf32>
    %c0_3 = arith.constant 0 : index
    %c0_4 = arith.constant 0 : index
    %3 = vector.load %arg3[%c0_3, %c0_4] : memref<1x512xf32, #tpu.memory_space<vmem>>, vector<1x512xf32>
    %4 = vector.broadcast %3 : vector<1x512xf32> to vector<512x512xf32>
    %5 = arith.addf %2, %4 : vector<512x512xf32>
    %cst_5 = arith.constant 0.000000e+00 : f32
    %6 = vector.broadcast %cst_5 : f32 to vector<512x512xf32>
    %7 = arith.maximumf %5, %6 : vector<512x512xf32>
    %c0_6 = arith.constant 0 : index
    %c0_7 = arith.constant 0 : index
    %8 = vector.load %arg4[%c0_6, %c0_7] : memref<512x1xf32, #tpu.memory_space<vmem>>, vector<512x1xf32>
    %cst_8 = arith.constant dense<0.000000e+00> : vector<512x1xf32>
    %9 = tpu.matmul %7, %8, %cst_8 {dimension_numbers = #tpu.dot_dimension_numbers<[1], [0], [0], [1], [0, 0, 1, 1], [], []>} : vector<512x512xf32>, vector<512x1xf32>, vector<512x1xf32> -> vector<512x1xf32>
    %c0_9 = arith.constant 0 : index
    %c0_10 = arith.constant 0 : index
    %10 = vector.load %arg5[%c0_9, %c0_10] : memref<1x1xf32, #tpu.memory_space<vmem>>, vector<1x1xf32>
    %11 = vector.broadcast %10 : vector<1x1xf32> to vector<512x1xf32>
    %12 = arith.addf %9, %11 : vector<512x1xf32>
    %cst_11 = arith.constant 0.000000e+00 : f32
    %13 = vector.broadcast %cst_11 : f32 to vector<512x1xf32>
    %14 = arith.maximumf %12, %13 : vector<512x1xf32>
    %15 = math.absf %12 : vector<512x1xf32>
    %cst_12 = arith.constant 0.000000e+00 : f32
    %16 = vector.broadcast %cst_12 : f32 to vector<512x1xf32>
    %17 = arith.subf %16, %15 : vector<512x1xf32>
    %18 = math.exp %17 : vector<512x1xf32>
    %19 = math.log1p %18 : vector<512x1xf32>
    %20 = arith.addf %14, %19 : vector<512x1xf32>
    %cst_13 = arith.constant 0.000000e+00 : f32
    %21 = vector.broadcast %cst_13 : f32 to vector<512x1xf32>
    %22 = arith.subf %21, %20 : vector<512x1xf32>
    %23 = tpu.iota {dimensions = array<i32: 1>} : vector<512x2xi32>
    %c0_i32 = arith.constant 0 : i32
    %24 = vector.broadcast %c0_i32 : i32 to vector<512x2xi32>
    %25 = arith.cmpi eq, %23, %24 : vector<512x2xi32>
    %cst_14 = arith.constant 0.000000e+00 : f32
    %26 = vector.shape_cast %12 : vector<512x1xf32> to vector<512x1xf32>
    %27 = vector.broadcast %26 : vector<512x1xf32> to vector<512x2xf32>
    %28 = vector.broadcast %cst_14 : f32 to vector<512x2xf32>
    %29 = arith.select %25, %27, %28 : vector<512x2xi1>, vector<512x2xf32>
    %30 = vector.broadcast %22 : vector<512x1xf32> to vector<512x2xf32>
    %31 = arith.addf %30, %29 : vector<512x2xf32>
    %c0_15 = arith.constant 0 : index
    %c0_16 = arith.constant 0 : index
    %32 = vector.load %arg6[%c0_15, %c0_16] : memref<512x2xf32, #tpu.memory_space<vmem>>, vector<512x2xf32>
    tpu.vector_store %arg6[%c0_15, %c0_16], %31 {strides = array<i32>} : memref<512x2xf32, #tpu.memory_space<vmem>>, vector<512x2xf32>,
    return
  }
  func.func @transform_0(%arg0: i32) -> (i32, i32) {
    %c0_i32 = arith.constant 0 : i32
    %c0_i32_0 = arith.constant 0 : i32
    return %arg0, %c0_i32 : i32, i32
  }
  func.func @transform_1(%arg0: i32) -> (i32, i32) {
    %c0_i32 = arith.constant 0 : i32
    %c0_i32_0 = arith.constant 0 : i32
    %c0_i32_1 = arith.constant 0 : i32
    return %c0_i32, %c0_i32_0 : i32, i32
  }
  func.func @transform_2(%arg0: i32) -> (i32, i32) {
    %c0_i32 = arith.constant 0 : i32
    %c0_i32_0 = arith.constant 0 : i32
    %c0_i32_1 = arith.constant 0 : i32
    return %c0_i32, %c0_i32_0 : i32, i32
  }
  func.func @transform_3(%arg0: i32) -> (i32, i32) {
    %c0_i32 = arith.constant 0 : i32
    %c0_i32_0 = arith.constant 0 : i32
    %c0_i32_1 = arith.constant 0 : i32
    return %c0_i32, %c0_i32_0 : i32, i32
  }
  func.func @transform_4(%arg0: i32) -> (i32, i32) {
    %c0_i32 = arith.constant 0 : i32
    %c0_i32_0 = arith.constant 0 : i32
    %c0_i32_1 = arith.constant 0 : i32
    return %c0_i32, %c0_i32_0 : i32, i32
  }
  func.func @transform_5(%arg0: i32) -> (i32, i32) {
    %c0_i32 = arith.constant 0 : i32
    %c0_i32_0 = arith.constant 0 : i32
    return %arg0, %c0_i32 : i32, i32
  }
}

</mosaic_0001>

<llo_original>
// kernel: tpu_custom_call.1
$region0: #{tpu_custom_call.1}
  #allocation0 [shape = 'u32[]', space=smem, size = 0x4, offset = 0x4, fixed_abs, tag = 'smem constant byte address 0x4 - core index']
  #allocation1 [shape = 'u32[144,128]{1,0:T(1,128)}', space=vmem, size = 0x12000, scoped, tag = 'internal scratch']
  #allocation2 [shape = 'f32[1,1]{1,0:T(1,128)S(1)}', space=vmem, size = 0x200, scoped, tag = 'scoped memory for tpu_custom_call.1']
  %s0 = inlined_call_operand.vmem [shape: bf16[512,32], index: 0, kind: input, shape index: {}]
  %s1 = inlined_call_operand.vmem [shape: bf16[32,512], index: 1, kind: input, shape index: {}]
  %s2 = inlined_call_operand.vmem [shape: f32[1,512], index: 2, kind: input, shape index: {}]
  %s3 = inlined_call_operand.vmem [shape: f32[512,1], index: 3, kind: input, shape index: {}]
  %s4 = inlined_call_operand.<no memory space> [shape: f32[1,1], index: 4, kind: input, shape index: {}]
  %s5 = inlined_call_operand.vmem [shape: f32[512,2], index: 5, kind: output, shape index: {}]
  %s6 = sld [smem:[#allocation0]]
  $region30: #{tpu_custom_call.1} parent=0
    _
  %s8 = ssub.s32 1, %s6
  %s9 = scalar_select 0, %s8, %s6
  %v10 = vstv %s4
  %11 = vst [vmem:[#allocation2] sm:$0x1] %v10
  // Predicated region
  $region2: #{tpu_custom_call.1} parent=0 // pred_check
    _
  $region3: #{tpu_custom_call.1} parent=0 // pred_check_branch
    %13 = sbr.rel (0) target = $region5
  $region4: #{tpu_custom_call.1} parent=0 // pred_region
    _
  $region5: #{tpu_custom_call.1} parent=0 // pred_fallthru
    _
  // Predicated region
  $region6: #{tpu_custom_call.1} parent=0 // pred_check
    _
  $region7: #{tpu_custom_call.1} parent=0 // pred_check_branch
    %15 = sbr.rel (0) target = $region9
  $region8: #{tpu_custom_call.1} parent=0 // pred_region
    _
  $region9: #{tpu_custom_call.1} parent=0 // pred_fallthru
    _
  // Predicated region
  $region10: #{tpu_custom_call.1} parent=0 // pred_check
    _
  $region11: #{tpu_custom_call.1} parent=0 // pred_check_branch
    %17 = sbr.rel (0) target = $region13
  $region12: #{tpu_custom_call.1} parent=0 // pred_region
    _
  $region13: #{tpu_custom_call.1} parent=0 // pred_fallthru
    _
  // Predicated region
  $region14: #{tpu_custom_call.1} parent=0 // pred_check
    _
  $region15: #{tpu_custom_call.1} parent=0 // pred_check_branch
    %19 = sbr.rel (0) target = $region17
  $region16: #{tpu_custom_call.1} parent=0 // pred_region
    _
  $region17: #{tpu_custom_call.1} parent=0 // pred_fallthru
    _
  // Predicated region
  $region18: #{tpu_custom_call.1} parent=0 // pred_check
    _
  $region19: #{tpu_custom_call.1} parent=0 // pred_check_branch
    %21 = sbr.rel (0) target = $region21
  $region20: #{tpu_custom_call.1} parent=0 // pred_region
    _
  $region21: #{tpu_custom_call.1} parent=0 // pred_fallthru
    _
  %v23 = vld [vmem:[%s0] sm:$0xf]
  %v24 = vld [vmem:[%s0 + $0x4] sm:$0xf]
  %v25 = vld [vmem:[%s0 + $0x8] sm:$0xf]
  %v26 = vld [vmem:[%s0 + $0xc] sm:$0xf]
  %v27 = vld [vmem:[%s0 + $0x10] sm:$0xf]
  %v28 = vld [vmem:[%s0 + $0x14] sm:$0xf]
  %v29 = vld [vmem:[%s0 + $0x18] sm:$0xf]
  %v30 = vld [vmem:[%s0 + $0x1c] sm:$0xf]
  %v31 = vld [vmem:[%s0 + $0x20] sm:$0xf]
  %v32 = vld [vmem:[%s0 + $0x24] sm:$0xf]
  %v33 = vld [vmem:[%s0 + $0x28] sm:$0xf]
  %v34 = vld [vmem:[%s0 + $0x2c] sm:$0xf]
  %v35 = vld [vmem:[%s0 + $0x30] sm:$0xf]
  %v36 = vld [vmem:[%s0 + $0x34] sm:$0xf]
  %v37 = vld [vmem:[%s0 + $0x38] sm:$0xf]
  %v38 = vld [vmem:[%s0 + $0x3c] sm:$0xf]
  %v39 = vld [vmem:[%s0 + $0x40] sm:$0xf]
  %v40 = vld [vmem:[%s0 + $0x44] sm:$0xf]
  %v41 = vld [vmem:[%s0 + $0x48] sm:$0xf]
  %v42 = vld [vmem:[%s0 + $0x4c] sm:$0xf]
  %v43 = vld [vmem:[%s0 + $0x50] sm:$0xf]
  %v44 = vld [vmem:[%s0 + $0x54] sm:$0xf]
  %v45 = vld [vmem:[%s0 + $0x58] sm:$0xf]
  %v46 = vld [vmem:[%s0 + $0x5c] sm:$0xf]
  %v47 = vld [vmem:[%s0 + $0x60] sm:$0xf]
  %v48 = vld [vmem:[%s0 + $0x64] sm:$0xf]
  %v49 = vld [vmem:[%s0 + $0x68] sm:$0xf]
  %v50 = vld [vmem:[%s0 + $0x6c] sm:$0xf]
  %v51 = vld [vmem:[%s0 + $0x70] sm:$0xf]
  %v52 = vld [vmem:[%s0 + $0x74] sm:$0xf]
  %v53 = vld [vmem:[%s0 + $0x78] sm:$0xf]
  %v54 = vld [vmem:[%s0 + $0x7c] sm:$0xf]
  %v55 = vld [vmem:[%s0 + $0x80] sm:$0xf]
  %v56 = vld [vmem:[%s0 + $0x84] sm:$0xf]
  %v57 = vld [vmem:[%s0 + $0x88] sm:$0xf]
  %v58 = vld [vmem:[%s0 + $0x8c] sm:$0xf]
  %v59 = vld [vmem:[%s0 + $0x90] sm:$0xf]
  %v60 = vld [vmem:[%s0 + $0x94] sm:$0xf]
  %v61 = vld [vmem:[%s0 + $0x98] sm:$0xf]
  %v62 = vld [vmem:[%s0 + $0x9c] sm:$0xf]
  %v63 = vld [vmem:[%s0 + $0xa0] sm:$0xf]
  %v64 = vld [vmem:[%s0 + $0xa4] sm:$0xf]
  %v65 = vld [vmem:[%s0 + $0xa8] sm:$0xf]
  %v66 = vld [vmem:[%s0 + $0xac] sm:$0xf]
  %v67 = vld [vmem:[%s0 + $0xb0] sm:$0xf]
  %v68 = vld [vmem:[%s0 + $0xb4] sm:$0xf]
  %v69 = vld [vmem:[%s0 + $0xb8] sm:$0xf]
  %v70 = vld [vmem:[%s0 + $0xbc] sm:$0xf]
  %v71 = vld [vmem:[%s0 + $0xc0] sm:$0xf]
  %v72 = vld [vmem:[%s0 + $0xc4] sm:$0xf]
  %v73 = vld [vmem:[%s0 + $0xc8] sm:$0xf]
  %v74 = vld [vmem:[%s0 + $0xcc] sm:$0xf]
  %v75 = vld [vmem:[%s0 + $0xd0] sm:$0xf]
  %v76 = vld [vmem:[%s0 + $0xd4] sm:$0xf]
  %v77 = vld [vmem:[%s0 + $0xd8] sm:$0xf]
  %v78 = vld [vmem:[%s0 + $0xdc] sm:$0xf]
  %v79 = vld [vmem:[%s0 + $0xe0] sm:$0xf]
  %v80 = vld [vmem:[%s0 + $0xe4] sm:$0xf]
  %v81 = vld [vmem:[%s0 + $0xe8] sm:$0xf]
  %v82 = vld [vmem:[%s0 + $0xec] sm:$0xf]
  %v83 = vld [vmem:[%s0 + $0xf0] sm:$0xf]
  %v84 = vld [vmem:[%s0 + $0xf4] sm:$0xf]
  %v85 = vld [vmem:[%s0 + $0xf8] sm:$0xf]
  %v86 = vld [vmem:[%s0 + $0xfc] sm:$0xf]
  %v87 = vld [vmem:[%s1] sm:$0xff]
  %v88 = vld [vmem:[%s1 + $0x8] sm:$0xff]
  %v89 = vld [vmem:[%s1 + $0x10] sm:$0xff]
  %v90 = vld [vmem:[%s1 + $0x18] sm:$0xff]
  %v91 = vld [vmem:[%s1 + $0x20] sm:$0xff]
  %v92 = vld [vmem:[%s1 + $0x28] sm:$0xff]
  %v93 = vld [vmem:[%s1 + $0x30] sm:$0xff]
  %v94 = vld [vmem:[%s1 + $0x38] sm:$0xff]
  %v95 = vld [vmem:[%s2] sm:$0xf]
  %v97 = vlaneseq
  %v98 = vshrl.u32 %v97, 7
  %v99 = vsub.s32 0, %v98
  %v100 = vrot.slane %v95, %v99
  %v101 = vlaneseq
  %v102 = vshrl.u32 %v101, 7
  %v103 = vsub.s32 1, %v102
  %v104 = vrot.slane %v95, %v103
  %v105 = vlaneseq
  %v106 = vshrl.u32 %v105, 7
  %v107 = vsub.s32 2, %v106
  %v108 = vrot.slane %v95, %v107
  %v109 = vlaneseq
  %v110 = vshrl.u32 %v109, 7
  %v111 = vsub.s32 3, %v110
  %v112 = vrot.slane %v95, %v111
  %v181 = vunpack.c.l.b16 %v23
  %v182 = vunpack.c.l.b16 %v24
  %v183 = vunpack.c.l.b16 %v25
  %v184 = vunpack.c.l.b16 %v26
  %v185 = vunpack.c.l.b16 %v27
  %v186 = vunpack.c.l.b16 %v28
  %v187 = vunpack.c.l.b16 %v29
  %v188 = vunpack.c.l.b16 %v30
  %v189 = vunpack.c.l.b16 %v31
  %v190 = vunpack.c.l.b16 %v32
  %v191 = vunpack.c.l.b16 %v33
  %v192 = vunpack.c.l.b16 %v34
  %v193 = vunpack.c.l.b16 %v35
  %v194 = vunpack.c.l.b16 %v36
  %v195 = vunpack.c.l.b16 %v37
  %v196 = vunpack.c.l.b16 %v38
  %v197 = vunpack.c.l.b16 %v39
  %v198 = vunpack.c.l.b16 %v40
  %v199 = vunpack.c.l.b16 %v41
  %v200 = vunpack.c.l.b16 %v42
  %v201 = vunpack.c.l.b16 %v43
  %v202 = vunpack.c.l.b16 %v44
  %v203 = vunpack.c.l.b16 %v45
  %v204 = vunpack.c.l.b16 %v46
  %v205 = vunpack.c.l.b16 %v47
  %v206 = vunpack.c.l.b16 %v48
  %v207 = vunpack.c.l.b16 %v49
  %v208 = vunpack.c.l.b16 %v50
  %v209 = vunpack.c.l.b16 %v51
  %v210 = vunpack.c.l.b16 %v52
  %v211 = vunpack.c.l.b16 %v53
  %v212 = vunpack.c.l.b16 %v54
  %v213 = vunpack.c.l.b16 %v55
  %v214 = vunpack.c.l.b16 %v56
  %v215 = vunpack.c.l.b16 %v57
  %v216 = vunpack.c.l.b16 %v58
  %v217 = vunpack.c.l.b16 %v59
  %v218 = vunpack.c.l.b16 %v60
  %v219 = vunpack.c.l.b16 %v61
  %v220 = vunpack.c.l.b16 %v62
  %v221 = vunpack.c.l.b16 %v63
  %v222 = vunpack.c.l.b16 %v64
  %v223 = vunpack.c.l.b16 %v65
  %v224 = vunpack.c.l.b16 %v66
  %v225 = vunpack.c.l.b16 %v67
  %v226 = vunpack.c.l.b16 %v68
  %v227 = vunpack.c.l.b16 %v69
  %v228 = vunpack.c.l.b16 %v70
  %v229 = vunpack.c.l.b16 %v71
  %v230 = vunpack.c.l.b16 %v72
  %v231 = vunpack.c.l.b16 %v73
  %v232 = vunpack.c.l.b16 %v74
  %v233 = vunpack.c.l.b16 %v75
  %v234 = vunpack.c.l.b16 %v76
  %v235 = vunpack.c.l.b16 %v77
  %v236 = vunpack.c.l.b16 %v78
  %v237 = vunpack.c.l.b16 %v79
  %v238 = vunpack.c.l.b16 %v80
  %v239 = vunpack.c.l.b16 %v81
  %v240 = vunpack.c.l.b16 %v82
  %v241 = vunpack.c.l.b16 %v83
  %v242 = vunpack.c.l.b16 %v84
  %v243 = vunpack.c.l.b16 %v85
  %v244 = vunpack.c.l.b16 %v86
  %v245 = vpack.c.b16 %v182, %v181
  %v246 = vpack.c.b16 %v184, %v183
  %v247 = vpack.c.b16 %v186, %v185
  %v248 = vpack.c.b16 %v188, %v187
  %v249 = vpack.c.b16 %v190, %v189
  %v250 = vpack.c.b16 %v192, %v191
  %v251 = vpack.c.b16 %v194, %v193
  %v252 = vpack.c.b16 %v196, %v195
  %v253 = vpack.c.b16 %v198, %v197
  %v254 = vpack.c.b16 %v200, %v199
  %v255 = vpack.c.b16 %v202, %v201
  %v256 = vpack.c.b16 %v204, %v203
  %v257 = vpack.c.b16 %v206, %v205
  %v258 = vpack.c.b16 %v208, %v207
  %v259 = vpack.c.b16 %v210, %v209
  %v260 = vpack.c.b16 %v212, %v211
  %v261 = vpack.c.b16 %v214, %v213
  %v262 = vpack.c.b16 %v216, %v215
  %v263 = vpack.c.b16 %v218, %v217
  %v264 = vpack.c.b16 %v220, %v219
  %v265 = vpack.c.b16 %v222, %v221
  %v266 = vpack.c.b16 %v224, %v223
  %v267 = vpack.c.b16 %v226, %v225
  %v268 = vpack.c.b16 %v228, %v227
  %v269 = vpack.c.b16 %v230, %v229
  %v270 = vpack.c.b16 %v232, %v231
  %v271 = vpack.c.b16 %v234, %v233
  %v272 = vpack.c.b16 %v236, %v235
  %v273 = vpack.c.b16 %v238, %v237
  %v274 = vpack.c.b16 %v240, %v239
  %v275 = vpack.c.b16 %v242, %v241
  %v276 = vpack.c.b16 %v244, %v243
  %v285 = vunpack.c.l.b16 %v87
  %v286 = vunpack.c.h.b16 %v87
  %v287 = vunpack.c.l.b16 %v88
  %v288 = vunpack.c.h.b16 %v88
  %v289 = vunpack.c.l.b16 %v89
  %v290 = vunpack.c.h.b16 %v89
  %v291 = vunpack.c.l.b16 %v90
  %v292 = vunpack.c.h.b16 %v90
  %v293 = vunpack.c.l.b16 %v91
  %v294 = vunpack.c.h.b16 %v91
  %v295 = vunpack.c.l.b16 %v92
  %v296 = vunpack.c.h.b16 %v92
  %v297 = vunpack.c.l.b16 %v93
  %v298 = vunpack.c.h.b16 %v93
  %v299 = vunpack.c.l.b16 %v94
  %v300 = vunpack.c.h.b16 %v94
  %v301 = vpack.c.b16 %v289, %v285
  %v302 = vpack.c.b16 %v290, %v286
  %v303 = vpack.c.b16 %v291, %v287
  %v304 = vpack.c.b16 %v292, %v288
  %v305 = vpack.c.b16 %v297, %v293
  %v306 = vpack.c.b16 %v298, %v294
  %v307 = vpack.c.b16 %v299, %v295
  %v308 = vpack.c.b16 %v300, %v296
  %vm317 = vcmask 261120
  %v319 = vsel %vm317, %v245, 0
  %v322 = vsel %vm317, %v246, 0
  %v325 = vsel %vm317, %v247, 0
  %v328 = vsel %vm317, %v248, 0
  %v331 = vsel %vm317, %v249, 0
  %v334 = vsel %vm317, %v250, 0
  %v337 = vsel %vm317, %v251, 0
  %v340 = vsel %vm317, %v252, 0
  %v343 = vsel %vm317, %v253, 0
  %v346 = vsel %vm317, %v254, 0
  %v349 = vsel %vm317, %v255, 0
  %v352 = vsel %vm317, %v256, 0
  %v355 = vsel %vm317, %v257, 0
  %v358 = vsel %vm317, %v258, 0
  %v361 = vsel %vm317, %v259, 0
  %v364 = vsel %vm317, %v260, 0
  %v367 = vsel %vm317, %v261, 0
  %v370 = vsel %vm317, %v262, 0
  %v373 = vsel %vm317, %v263, 0
  %v376 = vsel %vm317, %v264, 0
  %v379 = vsel %vm317, %v265, 0
  %v382 = vsel %vm317, %v266, 0
  %v385 = vsel %vm317, %v267, 0
  %v388 = vsel %vm317, %v268, 0
  %v391 = vsel %vm317, %v269, 0
  %v394 = vsel %vm317, %v270, 0
  %v397 = vsel %vm317, %v271, 0
  %v400 = vsel %vm317, %v272, 0
  %v403 = vsel %vm317, %v273, 0
  %v406 = vsel %vm317, %v274, 0
  %v409 = vsel %vm317, %v275, 0
  %v412 = vsel %vm317, %v276, 0
  %414 = vmatprep.subr.bf16.mxu0 %v302
  %415 = vmatpush1.bf16.msra.mxu0 %v301
  %416 = vmatprep.subr.bf16.mxu0 %v306
  %417 = vmatpush1.bf16.msra.mxu0 %v305
  %418 = vmatprep.subr.bf16.mxu0 0
  %419 = vmatpush1.bf16.msra.mxu0 0
  %420 = vmatprep.subr.bf16.mxu0 0
  %421 = vmatpush1.bf16.msra.mxu0 0
  %422 = vmatprep.subr.bf16.mxu0 0
  %423 = vmatpush1.bf16.msra.mxu0 0
  %424 = vmatprep.subr.bf16.mxu0 0
  %425 = vmatpush1.bf16.msra.mxu0 0
  %426 = vmatprep.subr.bf16.mxu0 0
  %427 = vmatpush1.bf16.msra.mxu0 0
  %428 = vmatprep.subr.bf16.mxu0 0
  %429 = vmatpush1.bf16.msra.mxu0 0
  %430 = vmatprep.subr.bf16.mxu0 0
  %431 = vmatpush1.bf16.msra.mxu0 0
  %432 = vmatprep.subr.bf16.mxu0 0
  %433 = vmatpush1.bf16.msra.mxu0 0
  %434 = vmatprep.subr.bf16.mxu0 0
  %435 = vmatpush1.bf16.msra.mxu0 0
  %436 = vmatprep.subr.bf16.mxu0 0
  %437 = vmatpush1.bf16.msra.mxu0 0
  %438 = vmatprep.subr.bf16.mxu0 0
  %439 = vmatpush1.bf16.msra.mxu0 0
  %440 = vmatprep.subr.bf16.mxu0 0
  %441 = vmatpush1.bf16.msra.mxu0 0
  %442 = vmatprep.subr.bf16.mxu0 0
  %443 = vmatpush1.bf16.msra.mxu0 0
  %444 = vmatprep.subr.bf16.mxu0 0
  %445 = vmatpush1.bf16.msra.mxu0 0
  %446 = vmatprep.mubr.bf16.mxu0 0
  %447 = vmatmul.mubr.bf16.gmra.mrb[0].mxu0 %v319
  %v448 = vpop.f32.mrb[0].mxu0
  %v449 = vadd.f32 %v100, %v448
  %v450 = vpop.f32.mrb[0].mxu0
  %v451 = vadd.f32 %v104, %v450
  %v452 = vpop.f32.mrb[0].mxu0
  %v453 = vadd.f32 %v100, %v452
  %v454 = vpop.f32.mrb[0].mxu0
  %v455 = vadd.f32 %v104, %v454
  %456 = vmatprep.mubr.bf16.mxu0 0
  %457 = vmatmul.mubr.bf16.gmra.mrb[0].mxu0 %v322
  %v458 = vpop.f32.mrb[0].mxu0
  %v459 = vadd.f32 %v100, %v458
  %v460 = vpop.f32.mrb[0].mxu0
  %v461 = vadd.f32 %v104, %v460
  %v462 = vpop.f32.mrb[0].mxu0
  %v463 = vadd.f32 %v100, %v462
  %v464 = vpop.f32.mrb[0].mxu0
  %v465 = vadd.f32 %v104, %v464
  %466 = vmatprep.mubr.bf16.mxu0 0
  %467 = vmatmul.mubr.bf16.gmra.mrb[0].mxu0 %v325
  %v468 = vpop.f32.mrb[0].mxu0
  %v469 = vadd.f32 %v100, %v468
  %v470 = vpop.f32.mrb[0].mxu0
  %v471 = vadd.f32 %v104, %v470
  %v472 = vpop.f32.mrb[0].mxu0
  %v473 = vadd.f32 %v100, %v472
  %v474 = vpop.f32.mrb[0].mxu0
  %v475 = vadd.f32 %v104, %v474
  %476 = vmatprep.mubr.bf16.mxu0 0
  %477 = vmatmul.mubr.bf16.gmra.mrb[0].mxu0 %v328
  %v478 = vpop.f32.mrb[0].mxu0
  %v479 = vadd.f32 %v100, %v478
  %v480 = vpop.f32.mrb[0].mxu0
  %v481 = vadd.f32 %v104, %v480
  %v482 = vpop.f32.mrb[0].mxu0
  %v483 = vadd.f32 %v100, %v482
  %v484 = vpop.f32.mrb[0].mxu0
  %v485 = vadd.f32 %v104, %v484
  %486 = vmatprep.mubr.bf16.mxu0 0
  %487 = vmatmul.mubr.bf16.gmra.mrb[0].mxu0 %v331
  %v488 = vpop.f32.mrb[0].mxu0
  %v489 = vadd.f32 %v100, %v488
  %v490 = vpop.f32.mrb[0].mxu0
  %v491 = vadd.f32 %v104, %v490
  %v492 = vpop.f32.mrb[0].mxu0
  %v493 = vadd.f32 %v100, %v492
  %v494 = vpop.f32.mrb[0].mxu0
  %v495 = vadd.f32 %v104, %v494
  %496 = vmatprep.mubr.bf16.mxu0 0
  %497 = vmatmul.mubr.bf16.gmra.mrb[0].mxu0 %v334
  %v498 = vpop.f32.mrb[0].mxu0
  %v499 = vadd.f32 %v100, %v498
  %v500 = vpop.f32.mrb[0].mxu0
  %v501 = vadd.f32 %v104, %v500
  %v502 = vpop.f32.mrb[0].mxu0
  %v503 = vadd.f32 %v100, %v502
  %v504 = vpop.f32.mrb[0].mxu0
  %v505 = vadd.f32 %v104, %v504
  %506 = vmatprep.mubr.bf16.mxu0 0
  %507 = vmatmul.mubr.bf16.gmra.mrb[0].mxu0 %v337
  %v508 = vpop.f32.mrb[0].mxu0
  %v509 = vadd.f32 %v100, %v508
  %v510 = vpop.f32.mrb[0].mxu0
  %v511 = vadd.f32 %v104, %v510
  %v512 = vpop.f32.mrb[0].mxu0
  %v513 = vadd.f32 %v100, %v512
  %v514 = vpop.f32.mrb[0].mxu0
  %v515 = vadd.f32 %v104, %v514
  %516 = vmatprep.mubr.bf16.mxu0 0
  %517 = vmatmul.mubr.bf16.gmra.mrb[0].mxu0 %v340
  %v518 = vpop.f32.mrb[0].mxu0
  %v519 = vadd.f32 %v100, %v518
  %v520 = vpop.f32.mrb[0].mxu0
  %v521 = vadd.f32 %v104, %v520
  %v522 = vpop.f32.mrb[0].mxu0
  %v523 = vadd.f32 %v100, %v522
  %v524 = vpop.f32.mrb[0].mxu0
  %v525 = vadd.f32 %v104, %v524
  %526 = vmatprep.mubr.bf16.mxu0 0
  %527 = vmatmul.mubr.bf16.gmra.mrb[0].mxu0 %v343
  %v528 = vpop.f32.mrb[0].mxu0
  %v529 = vadd.f32 %v100, %v528
  %v530 = vpop.f32.mrb[0].mxu0
  %v531 = vadd.f32 %v104, %v530
  %v532 = vpop.f32.mrb[0].mxu0
  %v533 = vadd.f32 %v100, %v532
  %v534 = vpop.f32.mrb[0].mxu0
  %v535 = vadd.f32 %v104, %v534
  %536 = vmatprep.mubr.bf16.mxu0 0
  %537 = vmatmul.mubr.bf16.gmra.mrb[0].mxu0 %v346
  %v538 = vpop.f32.mrb[0].mxu0
  %v539 = vadd.f32 %v100, %v538
  %v540 = vpop.f32.mrb[0].mxu0
  %v541 = vadd.f32 %v104, %v540
  %v542 = vpop.f32.mrb[0].mxu0
  %v543 = vadd.f32 %v100, %v542
  %v544 = vpop.f32.mrb[0].mxu0
  %v545 = vadd.f32 %v104, %v544
  %546 = vmatprep.mubr.bf16.mxu0 0
  %547 = vmatmul.mubr.bf16.gmra.mrb[0].mxu0 %v349
  %v548 = vpop.f32.mrb[0].mxu0
  %v549 = vadd.f32 %v100, %v548
  %v550 = vpop.f32.mrb[0].mxu0
  %v551 = vadd.f32 %v104, %v550
  %v552 = vpop.f32.mrb[0].mxu0
  %v553 = vadd.f32 %v100, %v552
  %v554 = vpop.f32.mrb[0].mxu0
  %v555 = vadd.f32 %v104, %v554
  %556 = vmatprep.mubr.bf16.mxu0 0
  %557 = vmatmul.mubr.bf16.gmra.mrb[0].mxu0 %v352
  %v558 = vpop.f32.mrb[0].mxu0
  %v559 = vadd.f32 %v100, %v558
  %v560 = vpop.f32.mrb[0].mxu0
  %v561 = vadd.f32 %v104, %v560
  %v562 = vpop.f32.mrb[0].mxu0
  %v563 = vadd.f32 %v100, %v562
  %v564 = vpop.f32.mrb[0].mxu0
  %v565 = vadd.f32 %v104, %v564
  %566 = vmatprep.mubr.bf16.mxu0 0
  %567 = vmatmul.mubr.bf16.gmra.mrb[0].mxu0 %v355
  %v568 = vpop.f32.mrb[0].mxu0
  %v569 = vadd.f32 %v100, %v568
  %v570 = vpop.f32.mrb[0].mxu0
  %v571 = vadd.f32 %v104, %v570
  %v572 = vpop.f32.mrb[0].mxu0
  %v573 = vadd.f32 %v100, %v572
  %v574 = vpop.f32.mrb[0].mxu0
  %v575 = vadd.f32 %v104, %v574
  %576 = vmatprep.mubr.bf16.mxu0 0
  %577 = vmatmul.mubr.bf16.gmra.mrb[0].mxu0 %v358
  %v578 = vpop.f32.mrb[0].mxu0
  %v579 = vadd.f32 %v100, %v578
  %v580 = vpop.f32.mrb[0].mxu0
  %v581 = vadd.f32 %v104, %v580
  %v582 = vpop.f32.mrb[0].mxu0
  %v583 = vadd.f32 %v100, %v582
  %v584 = vpop.f32.mrb[0].mxu0
  %v585 = vadd.f32 %v104, %v584
  %586 = vmatprep.mubr.bf16.mxu0 0
  %587 = vmatmul.mubr.bf16.gmra.mrb[0].mxu0 %v361
  %v588 = vpop.f32.mrb[0].mxu0
  %v589 = vadd.f32 %v100, %v588
  %v590 = vpop.f32.mrb[0].mxu0
  %v591 = vadd.f32 %v104, %v590
  %v592 = vpop.f32.mrb[0].mxu0
  %v593 = vadd.f32 %v100, %v592
  %v594 = vpop.f32.mrb[0].mxu0
  %v595 = vadd.f32 %v104, %v594
  %596 = vmatprep.mubr.bf16.mxu0 0
  %597 = vmatmul.mubr.bf16.gmra.mrb[0].mxu0 %v364
  %v598 = vpop.f32.mrb[0].mxu0
  %v599 = vadd.f32 %v100, %v598
  %v600 = vpop.f32.mrb[0].mxu0
  %v601 = vadd.f32 %v104, %v600
  %v602 = vpop.f32.mrb[0].mxu0
  %v603 = vadd.f32 %v100, %v602
  %v604 = vpop.f32.mrb[0].mxu0
  %v605 = vadd.f32 %v104, %v604
  %606 = vmatprep.mubr.bf16.mxu0 0
  %607 = vmatmul.mubr.bf16.gmra.mrb[0].mxu0 %v367
  %v608 = vpop.f32.mrb[0].mxu0
  %v609 = vadd.f32 %v100, %v608
  %v610 = vpop.f32.mrb[0].mxu0
  %v611 = vadd.f32 %v104, %v610
  %v612 = vpop.f32.mrb[0].mxu0
  %v613 = vadd.f32 %v100, %v612
  %v614 = vpop.f32.mrb[0].mxu0
  %v615 = vadd.f32 %v104, %v614
  %616 = vmatprep.mubr.bf16.mxu0 0
  %617 = vmatmul.mubr.bf16.gmra.mrb[0].mxu0 %v370
  %v618 = vpop.f32.mrb[0].mxu0
  %v619 = vadd.f32 %v100, %v618
  %v620 = vpop.f32.mrb[0].mxu0
  %v621 = vadd.f32 %v104, %v620
  %v622 = vpop.f32.mrb[0].mxu0
  %v623 = vadd.f32 %v100, %v622
  %v624 = vpop.f32.mrb[0].mxu0
  %v625 = vadd.f32 %v104, %v624
  %626 = vmatprep.mubr.bf16.mxu0 0
  %627 = vmatmul.mubr.bf16.gmra.mrb[0].mxu0 %v373
  %v628 = vpop.f32.mrb[0].mxu0
  %v629 = vadd.f32 %v100, %v628
  %v630 = vpop.f32.mrb[0].mxu0
  %v631 = vadd.f32 %v104, %v630
  %v632 = vpop.f32.mrb[0].mxu0
  %v633 = vadd.f32 %v100, %v632
  %v634 = vpop.f32.mrb[0].mxu0
  %v635 = vadd.f32 %v104, %v634
  %636 = vmatprep.mubr.bf16.mxu0 0
  %637 = vmatmul.mubr.bf16.gmra.mrb[0].mxu0 %v376
  %v638 = vpop.f32.mrb[0].mxu0
  %v639 = vadd.f32 %v100, %v638
  %v640 = vpop.f32.mrb[0].mxu0
  %v641 = vadd.f32 %v104, %v640
  %v642 = vpop.f32.mrb[0].mxu0
  %v643 = vadd.f32 %v100, %v642
  %v644 = vpop.f32.mrb[0].mxu0
  %v645 = vadd.f32 %v104, %v644
  %646 = vmatprep.mubr.bf16.mxu0 0
  %647 = vmatmul.mubr.bf16.gmra.mrb[0].mxu0 %v379
  %v648 = vpop.f32.mrb[0].mxu0
  %v649 = vadd.f32 %v100, %v648
  %v650 = vpop.f32.mrb[0].mxu0
  %v651 = vadd.f32 %v104, %v650
  %v652 = vpop.f32.mrb[0].mxu0
  %v653 = vadd.f32 %v100, %v652
  %v654 = vpop.f32.mrb[0].mxu0
  %v655 = vadd.f32 %v104, %v654
  %656 = vmatprep.mubr.bf16.mxu0 0
  %657 = vmatmul.mubr.bf16.gmra.mrb[0].mxu0 %v382
  %v658 = vpop.f32.mrb[0].mxu0
  %v659 = vadd.f32 %v100, %v658
  %v660 = vpop.f32.mrb[0].mxu0
  %v661 = vadd.f32 %v104, %v660
  %v662 = vpop.f32.mrb[0].mxu0
  %v663 = vadd.f32 %v100, %v662
  %v664 = vpop.f32.mrb[0].mxu0
  %v665 = vadd.f32 %v104, %v664
  %666 = vmatprep.mubr.bf16.mxu0 0
  %667 = vmatmul.mubr.bf16.gmra.mrb[0].mxu0 %v385
  %v668 = vpop.f32.mrb[0].mxu0
  %v669 = vadd.f32 %v100, %v668
  %v670 = vpop.f32.mrb[0].mxu0
  %v671 = vadd.f32 %v104, %v670
  %v672 = vpop.f32.mrb[0].mxu0
  %v673 = vadd.f32 %v100, %v672
  %v674 = vpop.f32.mrb[0].mxu0
  %v675 = vadd.f32 %v104, %v674
  %676 = vmatprep.mubr.bf16.mxu0 0
  %677 = vmatmul.mubr.bf16.gmra.mrb[0].mxu0 %v388
  %v678 = vpop.f32.mrb[0].mxu0
  %v679 = vadd.f32 %v100, %v678
  %v680 = vpop.f32.mrb[0].mxu0
  %v681 = vadd.f32 %v104, %v680
  %v682 = vpop.f32.mrb[0].mxu0
  %v683 = vadd.f32 %v100, %v682
  %v684 = vpop.f32.mrb[0].mxu0
  %v685 = vadd.f32 %v104, %v684
  %686 = vmatprep.mubr.bf16.mxu0 0
  %687 = vmatmul.mubr.bf16.gmra.mrb[0].mxu0 %v391
  %v688 = vpop.f32.mrb[0].mxu0
  %v689 = vadd.f32 %v100, %v688
  %v690 = vpop.f32.mrb[0].mxu0
  %v691 = vadd.f32 %v104, %v690
  %v692 = vpop.f32.mrb[0].mxu0
  %v693 = vadd.f32 %v100, %v692
  %v694 = vpop.f32.mrb[0].mxu0
  %v695 = vadd.f32 %v104, %v694
  %696 = vmatprep.mubr.bf16.mxu0 0
  %697 = vmatmul.mubr.bf16.gmra.mrb[0].mxu0 %v394
  %v698 = vpop.f32.mrb[0].mxu0
  %v699 = vadd.f32 %v100, %v698
  %v700 = vpop.f32.mrb[0].mxu0
  %v701 = vadd.f32 %v104, %v700
  %v702 = vpop.f32.mrb[0].mxu0
  %v703 = vadd.f32 %v100, %v702
  %v704 = vpop.f32.mrb[0].mxu0
  %v705 = vadd.f32 %v104, %v704
  %706 = vmatprep.mubr.bf16.mxu0 0
  %707 = vmatmul.mubr.bf16.gmra.mrb[0].mxu0 %v397
  %v708 = vpop.f32.mrb[0].mxu0
  %v709 = vadd.f32 %v100, %v708
  %v710 = vpop.f32.mrb[0].mxu0
  %v711 = vadd.f32 %v104, %v710
  %v712 = vpop.f32.mrb[0].mxu0
  %v713 = vadd.f32 %v100, %v712
  %v714 = vpop.f32.mrb[0].mxu0
  %v715 = vadd.f32 %v104, %v714
  %716 = vmatprep.mubr.bf16.mxu0 0
  %717 = vmatmul.mubr.bf16.gmra.mrb[0].mxu0 %v400
  %v718 = vpop.f32.mrb[0].mxu0
  %v719 = vadd.f32 %v100, %v718
  %v720 = vpop.f32.mrb[0].mxu0
  %v721 = vadd.f32 %v104, %v720
  %v722 = vpop.f32.mrb[0].mxu0
  %v723 = vadd.f32 %v100, %v722
  %v724 = vpop.f32.mrb[0].mxu0
  %v725 = vadd.f32 %v104, %v724
  %726 = vmatprep.mubr.bf16.mxu0 0
  %727 = vmatmul.mubr.bf16.gmra.mrb[0].mxu0 %v403
  %v728 = vpop.f32.mrb[0].mxu0
  %v729 = vadd.f32 %v100, %v728
  %v730 = vpop.f32.mrb[0].mxu0
  %v731 = vadd.f32 %v104, %v730
  %v732 = vpop.f32.mrb[0].mxu0
  %v733 = vadd.f32 %v100, %v732
  %v734 = vpop.f32.mrb[0].mxu0
  %v735 = vadd.f32 %v104, %v734
  %736 = vmatprep.mubr.bf16.mxu0 0
  %737 = vmatmul.mubr.bf16.gmra.mrb[0].mxu0 %v406
  %v738 = vpop.f32.mrb[0].mxu0
  %v739 = vadd.f32 %v100, %v738
  %v740 = vpop.f32.mrb[0].mxu0
  %v741 = vadd.f32 %v104, %v740
  %v742 = vpop.f32.mrb[0].mxu0
  %v743 = vadd.f32 %v100, %v742
  %v744 = vpop.f32.mrb[0].mxu0
  %v745 = vadd.f32 %v104, %v744
  %746 = vmatprep.mubr.bf16.mxu0 0
  %747 = vmatmul.mubr.bf16.gmra.mrb[0].mxu0 %v409
  %v748 = vpop.f32.mrb[0].mxu0
  %v749 = vadd.f32 %v100, %v748
  %v750 = vpop.f32.mrb[0].mxu0
  %v751 = vadd.f32 %v104, %v750
  %v752 = vpop.f32.mrb[0].mxu0
  %v753 = vadd.f32 %v100, %v752
  %v754 = vpop.f32.mrb[0].mxu0
  %v755 = vadd.f32 %v104, %v754
  %756 = vmatprep.mubr.bf16.mxu0 0
  %757 = vmatmul.mubr.bf16.gmra.mrb[0].mxu0 %v412
  %v758 = vpop.f32.mrb[0].mxu0
  %v759 = vadd.f32 %v100, %v758
  %v760 = vpop.f32.mrb[0].mxu0
  %v761 = vadd.f32 %v104, %v760
  %v762 = vpop.f32.mrb[0].mxu0
  %v763 = vadd.f32 %v100, %v762
  %v764 = vpop.f32.mrb[0].mxu0
  %v765 = vadd.f32 %v104, %v764
  %766 = vdwg.mxu0
  %767 = vmatprep.subr.bf16.mxu0 %v304
  %768 = vmatpush1.bf16.msra.mxu0 %v303
  %769 = vmatprep.subr.bf16.mxu0 %v308
  %770 = vmatpush1.bf16.msra.mxu0 %v307
  %771 = vmatprep.subr.bf16.mxu0 0
  %772 = vmatpush1.bf16.msra.mxu0 0
  %773 = vmatprep.subr.bf16.mxu0 0
  %774 = vmatpush1.bf16.msra.mxu0 0
  %775 = vmatprep.subr.bf16.mxu0 0
  %776 = vmatpush1.bf16.msra.mxu0 0
  %777 = vmatprep.subr.bf16.mxu0 0
  %778 = vmatpush1.bf16.msra.mxu0 0
  %779 = vmatprep.subr.bf16.mxu0 0
  %780 = vmatpush1.bf16.msra.mxu0 0
  %781 = vmatprep.subr.bf16.mxu0 0
  %782 = vmatpush1.bf16.msra.mxu0 0
  %783 = vmatprep.subr.bf16.mxu0 0
  %784 = vmatpush1.bf16.msra.mxu0 0
  %785 = vmatprep.subr.bf16.mxu0 0
  %786 = vmatpush1.bf16.msra.mxu0 0
  %787 = vmatprep.subr.bf16.mxu0 0
  %788 = vmatpush1.bf16.msra.mxu0 0
  %789 = vmatprep.subr.bf16.mxu0 0
  %790 = vmatpush1.bf16.msra.mxu0 0
  %791 = vmatprep.subr.bf16.mxu0 0
  %792 = vmatpush1.bf16.msra.mxu0 0
  %793 = vmatprep.subr.bf16.mxu0 0
  %794 = vmatpush1.bf16.msra.mxu0 0
  %795 = vmatprep.subr.bf16.mxu0 0
  %796 = vmatpush1.bf16.msra.mxu0 0
  %797 = vmatprep.subr.bf16.mxu0 0
  %798 = vmatpush1.bf16.msra.mxu0 0
  %799 = vmatprep.mubr.bf16.mxu0 0
  %800 = vmatmul.mubr.bf16.gmra.mrb[0].mxu0 %v319
  %v801 = vpop.f32.mrb[0].mxu0
  %v802 = vadd.f32 %v108, %v801
  %v803 = vpop.f32.mrb[0].mxu0
  %v804 = vadd.f32 %v112, %v803
  %v805 = vpop.f32.mrb[0].mxu0
  %v806 = vadd.f32 %v108, %v805
  %v807 = vpop.f32.mrb[0].mxu0
  %v808 = vadd.f32 %v112, %v807
  %809 = vmatprep.mubr.bf16.mxu0 0
  %810 = vmatmul.mubr.bf16.gmra.mrb[0].mxu0 %v322
  %v811 = vpop.f32.mrb[0].mxu0
  %v812 = vadd.f32 %v108, %v811
  %v813 = vpop.f32.mrb[0].mxu0
  %v814 = vadd.f32 %v112, %v813
  %v815 = vpop.f32.mrb[0].mxu0
  %v816 = vadd.f32 %v108, %v815
  %v817 = vpop.f32.mrb[0].mxu0
  %v818 = vadd.f32 %v112, %v817
  %819 = vmatprep.mubr.bf16.mxu0 0
  %820 = vmatmul.mubr.bf16.gmra.mrb[0].mxu0 %v325
  %v821 = vpop.f32.mrb[0].mxu0
  %v822 = vadd.f32 %v108, %v821
  %v823 = vpop.f32.mrb[0].mxu0
  %v824 = vadd.f32 %v112, %v823
  %v825 = vpop.f32.mrb[0].mxu0
  %v826 = vadd.f32 %v108, %v825
  %v827 = vpop.f32.mrb[0].mxu0
  %v828 = vadd.f32 %v112, %v827
  %829 = vmatprep.mubr.bf16.mxu0 0
  %830 = vmatmul.mubr.bf16.gmra.mrb[0].mxu0 %v328
  %v831 = vpop.f32.mrb[0].mxu0
  %v832 = vadd.f32 %v108, %v831
  %v833 = vpop.f32.mrb[0].mxu0
  %v834 = vadd.f32 %v112, %v833
  %v835 = vpop.f32.mrb[0].mxu0
  %v836 = vadd.f32 %v108, %v835
  %v837 = vpop.f32.mrb[0].mxu0
  %v838 = vadd.f32 %v112, %v837
  %839 = vmatprep.mubr.bf16.mxu0 0
  %840 = vmatmul.mubr.bf16.gmra.mrb[0].mxu0 %v331
  %v841 = vpop.f32.mrb[0].mxu0
  %v842 = vadd.f32 %v108, %v841
  %v843 = vpop.f32.mrb[0].mxu0
  %v844 = vadd.f32 %v112, %v843
  %v845 = vpop.f32.mrb[0].mxu0
  %v846 = vadd.f32 %v108, %v845
  %v847 = vpop.f32.mrb[0].mxu0
  %v848 = vadd.f32 %v112, %v847
  %849 = vmatprep.mubr.bf16.mxu0 0
  %850 = vmatmul.mubr.bf16.gmra.mrb[0].mxu0 %v334
  %v851 = vpop.f32.mrb[0].mxu0
  %v852 = vadd.f32 %v108, %v851
  %v853 = vpop.f32.mrb[0].mxu0
  %v854 = vadd.f32 %v112, %v853
  %v855 = vpop.f32.mrb[0].mxu0
  %v856 = vadd.f32 %v108, %v855
  %v857 = vpop.f32.mrb[0].mxu0
  %v858 = vadd.f32 %v112, %v857
  %859 = vmatprep.mubr.bf16.mxu0 0
  %860 = vmatmul.mubr.bf16.gmra.mrb[0].mxu0 %v337
  %v861 = vpop.f32.mrb[0].mxu0
  %v862 = vadd.f32 %v108, %v861
  %v863 = vpop.f32.mrb[0].mxu0
  %v864 = vadd.f32 %v112, %v863
  %v865 = vpop.f32.mrb[0].mxu0
  %v866 = vadd.f32 %v108, %v865
  %v867 = vpop.f32.mrb[0].mxu0
  %v868 = vadd.f32 %v112, %v867
  %869 = vmatprep.mubr.bf16.mxu0 0
  %870 = vmatmul.mubr.bf16.gmra.mrb[0].mxu0 %v340
  %v871 = vpop.f32.mrb[0].mxu0
  %v872 = vadd.f32 %v108, %v871
  %v873 = vpop.f32.mrb[0].mxu0
  %v874 = vadd.f32 %v112, %v873
  %v875 = vpop.f32.mrb[0].mxu0
  %v876 = vadd.f32 %v108, %v875
  %v877 = vpop.f32.mrb[0].mxu0
  %v878 = vadd.f32 %v112, %v877
  %879 = vmatprep.mubr.bf16.mxu0 0
  %880 = vmatmul.mubr.bf16.gmra.mrb[0].mxu0 %v343
  %v881 = vpop.f32.mrb[0].mxu0
  %v882 = vadd.f32 %v108, %v881
  %v883 = vpop.f32.mrb[0].mxu0
  %v884 = vadd.f32 %v112, %v883
  %v885 = vpop.f32.mrb[0].mxu0
  %v886 = vadd.f32 %v108, %v885
  %v887 = vpop.f32.mrb[0].mxu0
  %v888 = vadd.f32 %v112, %v887
  %889 = vmatprep.mubr.bf16.mxu0 0
  %890 = vmatmul.mubr.bf16.gmra.mrb[0].mxu0 %v346
  %v891 = vpop.f32.mrb[0].mxu0
  %v892 = vadd.f32 %v108, %v891
  %v893 = vpop.f32.mrb[0].mxu0
  %v894 = vadd.f32 %v112, %v893
  %v895 = vpop.f32.mrb[0].mxu0
  %v896 = vadd.f32 %v108, %v895
  %v897 = vpop.f32.mrb[0].mxu0
  %v898 = vadd.f32 %v112, %v897
  %899 = vmatprep.mubr.bf16.mxu0 0
  %900 = vmatmul.mubr.bf16.gmra.mrb[0].mxu0 %v349
  %v901 = vpop.f32.mrb[0].mxu0
  %v902 = vadd.f32 %v108, %v901
  %v903 = vpop.f32.mrb[0].mxu0
  %v904 = vadd.f32 %v112, %v903
  %v905 = vpop.f32.mrb[0].mxu0
  %v906 = vadd.f32 %v108, %v905
  %v907 = vpop.f32.mrb[0].mxu0
  %v908 = vadd.f32 %v112, %v907
  %909 = vmatprep.mubr.bf16.mxu0 0
  %910 = vmatmul.mubr.bf16.gmra.mrb[0].mxu0 %v352
  %v911 = vpop.f32.mrb[0].mxu0
  %v912 = vadd.f32 %v108, %v911
  %v913 = vpop.f32.mrb[0].mxu0
  %v914 = vadd.f32 %v112, %v913
  %v915 = vpop.f32.mrb[0].mxu0
  %v916 = vadd.f32 %v108, %v915
  %v917 = vpop.f32.mrb[0].mxu0
  %v918 = vadd.f32 %v112, %v917
  %919 = vmatprep.mubr.bf16.mxu0 0
  %920 = vmatmul.mubr.bf16.gmra.mrb[0].mxu0 %v355
  %v921 = vpop.f32.mrb[0].mxu0
  %v922 = vadd.f32 %v108, %v921
  %v923 = vpop.f32.mrb[0].mxu0
  %v924 = vadd.f32 %v112, %v923
  %v925 = vpop.f32.mrb[0].mxu0
  %v926 = vadd.f32 %v108, %v925
  %v927 = vpop.f32.mrb[0].mxu0
  %v928 = vadd.f32 %v112, %v927
  %929 = vmatprep.mubr.bf16.mxu0 0
  %930 = vmatmul.mubr.bf16.gmra.mrb[0].mxu0 %v358
  %v931 = vpop.f32.mrb[0].mxu0
  %v932 = vadd.f32 %v108, %v931
  %v933 = vpop.f32.mrb[0].mxu0
  %v934 = vadd.f32 %v112, %v933
  %v935 = vpop.f32.mrb[0].mxu0
  %v936 = vadd.f32 %v108, %v935
  %v937 = vpop.f32.mrb[0].mxu0
  %v938 = vadd.f32 %v112, %v937
  %939 = vmatprep.mubr.bf16.mxu0 0
  %940 = vmatmul.mubr.bf16.gmra.mrb[0].mxu0 %v361
  %v941 = vpop.f32.mrb[0].mxu0
  %v942 = vadd.f32 %v108, %v941
  %v943 = vpop.f32.mrb[0].mxu0
  %v944 = vadd.f32 %v112, %v943
  %v945 = vpop.f32.mrb[0].mxu0
  %v946 = vadd.f32 %v108, %v945
  %v947 = vpop.f32.mrb[0].mxu0
  %v948 = vadd.f32 %v112, %v947
  %949 = vmatprep.mubr.bf16.mxu0 0
  %950 = vmatmul.mubr.bf16.gmra.mrb[0].mxu0 %v364
  %v951 = vpop.f32.mrb[0].mxu0
  %v952 = vadd.f32 %v108, %v951
  %v953 = vpop.f32.mrb[0].mxu0
  %v954 = vadd.f32 %v112, %v953
  %v955 = vpop.f32.mrb[0].mxu0
  %v956 = vadd.f32 %v108, %v955
  %v957 = vpop.f32.mrb[0].mxu0
  %v958 = vadd.f32 %v112, %v957
  %959 = vmatprep.mubr.bf16.mxu0 0
  %960 = vmatmul.mubr.bf16.gmra.mrb[0].mxu0 %v367
  %v961 = vpop.f32.mrb[0].mxu0
  %v962 = vadd.f32 %v108, %v961
  %v963 = vpop.f32.mrb[0].mxu0
  %v964 = vadd.f32 %v112, %v963
  %v965 = vpop.f32.mrb[0].mxu0
  %v966 = vadd.f32 %v108, %v965
  %v967 = vpop.f32.mrb[0].mxu0
  %v968 = vadd.f32 %v112, %v967
  %969 = vmatprep.mubr.bf16.mxu0 0
  %970 = vmatmul.mubr.bf16.gmra.mrb[0].mxu0 %v370
  %v971 = vpop.f32.mrb[0].mxu0
  %v972 = vadd.f32 %v108, %v971
  %v973 = vpop.f32.mrb[0].mxu0
  %v974 = vadd.f32 %v112, %v973
  %v975 = vpop.f32.mrb[0].mxu0
  %v976 = vadd.f32 %v108, %v975
  %v977 = vpop.f32.mrb[0].mxu0
  %v978 = vadd.f32 %v112, %v977
  %979 = vmatprep.mubr.bf16.mxu0 0
  %980 = vmatmul.mubr.bf16.gmra.mrb[0].mxu0 %v373
  %v981 = vpop.f32.mrb[0].mxu0
  %v982 = vadd.f32 %v108, %v981
  %v983 = vpop.f32.mrb[0].mxu0
  %v984 = vadd.f32 %v112, %v983
  %v985 = vpop.f32.mrb[0].mxu0
  %v986 = vadd.f32 %v108, %v985
  %v987 = vpop.f32.mrb[0].mxu0
  %v988 = vadd.f32 %v112, %v987
  %989 = vmatprep.mubr.bf16.mxu0 0
  %990 = vmatmul.mubr.bf16.gmra.mrb[0].mxu0 %v376
  %v991 = vpop.f32.mrb[0].mxu0
  %v992 = vadd.f32 %v108, %v991
  %v993 = vpop.f32.mrb[0].mxu0
  %v994 = vadd.f32 %v112, %v993
  %v995 = vpop.f32.mrb[0].mxu0
  %v996 = vadd.f32 %v108, %v995
  %v997 = vpop.f32.mrb[0].mxu0
  %v998 = vadd.f32 %v112, %v997
  %999 = vmatprep.mubr.bf16.mxu0 0
  %1000 = vmatmul.mubr.bf16.gmra.mrb[0].mxu0 %v379
  %v1001 = vpop.f32.mrb[0].mxu0
  %v1002 = vadd.f32 %v108, %v1001
  %v1003 = vpop.f32.mrb[0].mxu0
  %v1004 = vadd.f32 %v112, %v1003
  %v1005 = vpop.f32.mrb[0].mxu0
  %v1006 = vadd.f32 %v108, %v1005
  %v1007 = vpop.f32.mrb[0].mxu0
  %v1008 = vadd.f32 %v112, %v1007
  %1009 = vmatprep.mubr.bf16.mxu0 0
  %1010 = vmatmul.mubr.bf16.gmra.mrb[0].mxu0 %v382
  %v1011 = vpop.f32.mrb[0].mxu0
  %v1012 = vadd.f32 %v108, %v1011
  %v1013 = vpop.f32.mrb[0].mxu0
  %v1014 = vadd.f32 %v112, %v1013
  %v1015 = vpop.f32.mrb[0].mxu0
  %v1016 = vadd.f32 %v108, %v1015
  %v1017 = vpop.f32.mrb[0].mxu0
  %v1018 = vadd.f32 %v112, %v1017
  %1019 = vmatprep.mubr.bf16.mxu0 0
  %1020 = vmatmul.mubr.bf16.gmra.mrb[0].mxu0 %v385
  %v1021 = vpop.f32.mrb[0].mxu0
  %v1022 = vadd.f32 %v108, %v1021
  %v1023 = vpop.f32.mrb[0].mxu0
  %v1024 = vadd.f32 %v112, %v1023
  %v1025 = vpop.f32.mrb[0].mxu0
  %v1026 = vadd.f32 %v108, %v1025
  %v1027 = vpop.f32.mrb[0].mxu0
  %v1028 = vadd.f32 %v112, %v1027
  %1029 = vmatprep.mubr.bf16.mxu0 0
  %1030 = vmatmul.mubr.bf16.gmra.mrb[0].mxu0 %v388
  %v1031 = vpop.f32.mrb[0].mxu0
  %v1032 = vadd.f32 %v108, %v1031
  %v1033 = vpop.f32.mrb[0].mxu0
  %v1034 = vadd.f32 %v112, %v1033
  %v1035 = vpop.f32.mrb[0].mxu0
  %v1036 = vadd.f32 %v108, %v1035
  %v1037 = vpop.f32.mrb[0].mxu0
  %v1038 = vadd.f32 %v112, %v1037
  %1039 = vmatprep.mubr.bf16.mxu0 0
  %1040 = vmatmul.mubr.bf16.gmra.mrb[0].mxu0 %v391
  %v1041 = vpop.f32.mrb[0].mxu0
  %v1042 = vadd.f32 %v108, %v1041
  %v1043 = vpop.f32.mrb[0].mxu0
  %v1044 = vadd.f32 %v112, %v1043
  %v1045 = vpop.f32.mrb[0].mxu0
  %v1046 = vadd.f32 %v108, %v1045
  %v1047 = vpop.f32.mrb[0].mxu0
  %v1048 = vadd.f32 %v112, %v1047
  %1049 = vmatprep.mubr.bf16.mxu0 0
  %1050 = vmatmul.mubr.bf16.gmra.mrb[0].mxu0 %v394
  %v1051 = vpop.f32.mrb[0].mxu0
  %v1052 = vadd.f32 %v108, %v1051
  %v1053 = vpop.f32.mrb[0].mxu0
  %v1054 = vadd.f32 %v112, %v1053
  %v1055 = vpop.f32.mrb[0].mxu0
  %v1056 = vadd.f32 %v108, %v1055
  %v1057 = vpop.f32.mrb[0].mxu0
  %v1058 = vadd.f32 %v112, %v1057
  %1059 = vmatprep.mubr.bf16.mxu0 0
  %1060 = vmatmul.mubr.bf16.gmra.mrb[0].mxu0 %v397
  %v1061 = vpop.f32.mrb[0].mxu0
  %v1062 = vadd.f32 %v108, %v1061
  %v1063 = vpop.f32.mrb[0].mxu0
  %v1064 = vadd.f32 %v112, %v1063
  %v1065 = vpop.f32.mrb[0].mxu0
  %v1066 = vadd.f32 %v108, %v1065
  %v1067 = vpop.f32.mrb[0].mxu0
  %v1068 = vadd.f32 %v112, %v1067
  %1069 = vmatprep.mubr.bf16.mxu0 0
  %1070 = vmatmul.mubr.bf16.gmra.mrb[0].mxu0 %v400
  %v1071 = vpop.f32.mrb[0].mxu0
  %v1072 = vadd.f32 %v108, %v1071
  %v1073 = vpop.f32.mrb[0].mxu0
  %v1074 = vadd.f32 %v112, %v1073
  %v1075 = vpop.f32.mrb[0].mxu0
  %v1076 = vadd.f32 %v108, %v1075
  %v1077 = vpop.f32.mrb[0].mxu0
  %v1078 = vadd.f32 %v112, %v1077
  %1079 = vmatprep.mubr.bf16.mxu0 0
  %1080 = vmatmul.mubr.bf16.gmra.mrb[0].mxu0 %v403
  %v1081 = vpop.f32.mrb[0].mxu0
  %v1082 = vadd.f32 %v108, %v1081
  %v1083 = vpop.f32.mrb[0].mxu0
  %v1084 = vadd.f32 %v112, %v1083
  %v1085 = vpop.f32.mrb[0].mxu0
  %v1086 = vadd.f32 %v108, %v1085
  %v1087 = vpop.f32.mrb[0].mxu0
  %v1088 = vadd.f32 %v112, %v1087
  %1089 = vmatprep.mubr.bf16.mxu0 0
  %1090 = vmatmul.mubr.bf16.gmra.mrb[0].mxu0 %v406
  %v1091 = vpop.f32.mrb[0].mxu0
  %v1092 = vadd.f32 %v108, %v1091
  %v1093 = vpop.f32.mrb[0].mxu0
  %v1094 = vadd.f32 %v112, %v1093
  %v1095 = vpop.f32.mrb[0].mxu0
  %v1096 = vadd.f32 %v108, %v1095
  %v1097 = vpop.f32.mrb[0].mxu0
  %v1098 = vadd.f32 %v112, %v1097
  %1099 = vmatprep.mubr.bf16.mxu0 0
  %1100 = vmatmul.mubr.bf16.gmra.mrb[0].mxu0 %v409
  %v1101 = vpop.f32.mrb[0].mxu0
  %v1102 = vadd.f32 %v108, %v1101
  %v1103 = vpop.f32.mrb[0].mxu0
  %v1104 = vadd.f32 %v112, %v1103
  %v1105 = vpop.f32.mrb[0].mxu0
  %v1106 = vadd.f32 %v108, %v1105
  %v1107 = vpop.f32.mrb[0].mxu0
  %v1108 = vadd.f32 %v112, %v1107
  %1109 = vmatprep.mubr.bf16.mxu0 0
  %1110 = vmatmul.mubr.bf16.gmra.mrb[0].mxu0 %v412
  %v1111 = vpop.f32.mrb[0].mxu0
  %v1112 = vadd.f32 %v108, %v1111
  %v1113 = vpop.f32.mrb[0].mxu0
  %v1114 = vadd.f32 %v112, %v1113
  %v1115 = vpop.f32.mrb[0].mxu0
  %v1116 = vadd.f32 %v108, %v1115
  %v1117 = vpop.f32.mrb[0].mxu0
  %v1118 = vadd.f32 %v112, %v1117
  %1119 = vdwg.mxu0
  %v1120 = vmax.f32 %v449, 0.0
  %v1121 = vmax.f32 %v451, 0.0
  %v1122 = vmax.f32 %v802, 0.0
  %v1123 = vmax.f32 %v804, 0.0
  %v1124 = vmax.f32 %v453, 0.0
  %v1125 = vmax.f32 %v455, 0.0
  %v1126 = vmax.f32 %v806, 0.0
  %v1127 = vmax.f32 %v808, 0.0
  %v1128 = vmax.f32 %v459, 0.0
  %v1129 = vmax.f32 %v461, 0.0
  %v1130 = vmax.f32 %v812, 0.0
  %v1131 = vmax.f32 %v814, 0.0
  %v1132 = vmax.f32 %v463, 0.0
  %v1133 = vmax.f32 %v465, 0.0
  %v1134 = vmax.f32 %v816, 0.0
  %v1135 = vmax.f32 %v818, 0.0
  %v1136 = vmax.f32 %v469, 0.0
  %v1137 = vmax.f32 %v471, 0.0
  %v1138 = vmax.f32 %v822, 0.0
  %v1139 = vmax.f32 %v824, 0.0
  %v1140 = vmax.f32 %v473, 0.0
  %v1141 = vmax.f32 %v475, 0.0
  %v1142 = vmax.f32 %v826, 0.0
  %v1143 = vmax.f32 %v828, 0.0
  %v1144 = vmax.f32 %v479, 0.0
  %v1145 = vmax.f32 %v481, 0.0
  %v1146 = vmax.f32 %v832, 0.0
  %v1147 = vmax.f32 %v834, 0.0
  %v1148 = vmax.f32 %v483, 0.0
  %v1149 = vmax.f32 %v485, 0.0
  %v1150 = vmax.f32 %v836, 0.0
  %v1151 = vmax.f32 %v838, 0.0
  %v1152 = vmax.f32 %v489, 0.0
  %v1153 = vmax.f32 %v491, 0.0
  %v1154 = vmax.f32 %v842, 0.0
  %v1155 = vmax.f32 %v844, 0.0
  %v1156 = vmax.f32 %v493, 0.0
  %v1157 = vmax.f32 %v495, 0.0
  %v1158 = vmax.f32 %v846, 0.0
  %v1159 = vmax.f32 %v848, 0.0
  %v1160 = vmax.f32 %v499, 0.0
  %v1161 = vmax.f32 %v501, 0.0
  %v1162 = vmax.f32 %v852, 0.0
  %v1163 = vmax.f32 %v854, 0.0
  %v1164 = vmax.f32 %v503, 0.0
  %v1165 = vmax.f32 %v505, 0.0
  %v1166 = vmax.f32 %v856, 0.0
  %v1167 = vmax.f32 %v858, 0.0
  %v1168 = vmax.f32 %v509, 0.0
  %v1169 = vmax.f32 %v511, 0.0
  %v1170 = vmax.f32 %v862, 0.0
  %v1171 = vmax.f32 %v864, 0.0
  %v1172 = vmax.f32 %v513, 0.0
  %v1173 = vmax.f32 %v515, 0.0
  %v1174 = vmax.f32 %v866, 0.0
  %v1175 = vmax.f32 %v868, 0.0
  %v1176 = vmax.f32 %v519, 0.0
  %v1177 = vmax.f32 %v521, 0.0
  %v1178 = vmax.f32 %v872, 0.0
  %v1179 = vmax.f32 %v874, 0.0
  %v1180 = vmax.f32 %v523, 0.0
  %v1181 = vmax.f32 %v525, 0.0
  %v1182 = vmax.f32 %v876, 0.0
  %v1183 = vmax.f32 %v878, 0.0
  %v1184 = vmax.f32 %v529, 0.0
  %v1185 = vmax.f32 %v531, 0.0
  %v1186 = vmax.f32 %v882, 0.0
  %v1187 = vmax.f32 %v884, 0.0
  %v1188 = vmax.f32 %v533, 0.0
  %v1189 = vmax.f32 %v535, 0.0
  %v1190 = vmax.f32 %v886, 0.0
  %v1191 = vmax.f32 %v888, 0.0
  %v1192 = vmax.f32 %v539, 0.0
  %v1193 = vmax.f32 %v541, 0.0
  %v1194 = vmax.f32 %v892, 0.0
  %v1195 = vmax.f32 %v894, 0.0
  %v1196 = vmax.f32 %v543, 0.0
  %v1197 = vmax.f32 %v545, 0.0
  %v1198 = vmax.f32 %v896, 0.0
  %v1199 = vmax.f32 %v898, 0.0
  %v1200 = vmax.f32 %v549, 0.0
  %v1201 = vmax.f32 %v551, 0.0
  %v1202 = vmax.f32 %v902, 0.0
  %v1203 = vmax.f32 %v904, 0.0
  %v1204 = vmax.f32 %v553, 0.0
  %v1205 = vmax.f32 %v555, 0.0
  %v1206 = vmax.f32 %v906, 0.0
  %v1207 = vmax.f32 %v908, 0.0
  %v1208 = vmax.f32 %v559, 0.0
  %v1209 = vmax.f32 %v561, 0.0
  %v1210 = vmax.f32 %v912, 0.0
  %v1211 = vmax.f32 %v914, 0.0
  %v1212 = vmax.f32 %v563, 0.0
  %v1213 = vmax.f32 %v565, 0.0
  %v1214 = vmax.f32 %v916, 0.0
  %v1215 = vmax.f32 %v918, 0.0
  %v1216 = vmax.f32 %v569, 0.0
  %v1217 = vmax.f32 %v571, 0.0
  %v1218 = vmax.f32 %v922, 0.0
  %v1219 = vmax.f32 %v924, 0.0
  %v1220 = vmax.f32 %v573, 0.0
  %v1221 = vmax.f32 %v575, 0.0
  %v1222 = vmax.f32 %v926, 0.0
  %v1223 = vmax.f32 %v928, 0.0
  %v1224 = vmax.f32 %v579, 0.0
  %v1225 = vmax.f32 %v581, 0.0
  %v1226 = vmax.f32 %v932, 0.0
  %v1227 = vmax.f32 %v934, 0.0
  %v1228 = vmax.f32 %v583, 0.0
  %v1229 = vmax.f32 %v585, 0.0
  %v1230 = vmax.f32 %v936, 0.0
  %v1231 = vmax.f32 %v938, 0.0
  %v1232 = vmax.f32 %v589, 0.0
  %v1233 = vmax.f32 %v591, 0.0
  %v1234 = vmax.f32 %v942, 0.0
  %v1235 = vmax.f32 %v944, 0.0
  %v1236 = vmax.f32 %v593, 0.0
  %v1237 = vmax.f32 %v595, 0.0
  %v1238 = vmax.f32 %v946, 0.0
  %v1239 = vmax.f32 %v948, 0.0
  %v1240 = vmax.f32 %v599, 0.0
  %v1241 = vmax.f32 %v601, 0.0
  %v1242 = vmax.f32 %v952, 0.0
  %v1243 = vmax.f32 %v954, 0.0
  %v1244 = vmax.f32 %v603, 0.0
  %v1245 = vmax.f32 %v605, 0.0
  %v1246 = vmax.f32 %v956, 0.0
  %v1247 = vmax.f32 %v958, 0.0
  %v1248 = vmax.f32 %v609, 0.0
  %v1249 = vmax.f32 %v611, 0.0
  %v1250 = vmax.f32 %v962, 0.0
  %v1251 = vmax.f32 %v964, 0.0
  %v1252 = vmax.f32 %v613, 0.0
  %v1253 = vmax.f32 %v615, 0.0
  %v1254 = vmax.f32 %v966, 0.0
  %v1255 = vmax.f32 %v968, 0.0
  %v1256 = vmax.f32 %v619, 0.0
  %v1257 = vmax.f32 %v621, 0.0
  %v1258 = vmax.f32 %v972, 0.0
  %v1259 = vmax.f32 %v974, 0.0
  %v1260 = vmax.f32 %v623, 0.0
  %v1261 = vmax.f32 %v625, 0.0
  %v1262 = vmax.f32 %v976, 0.0
  %v1263 = vmax.f32 %v978, 0.0
  %v1264 = vmax.f32 %v629, 0.0
  %v1265 = vmax.f32 %v631, 0.0
  %v1266 = vmax.f32 %v982, 0.0
  %v1267 = vmax.f32 %v984, 0.0
  %v1268 = vmax.f32 %v633, 0.0
  %v1269 = vmax.f32 %v635, 0.0
  %v1270 = vmax.f32 %v986, 0.0
  %v1271 = vmax.f32 %v988, 0.0
  %v1272 = vmax.f32 %v639, 0.0
  %v1273 = vmax.f32 %v641, 0.0
  %v1274 = vmax.f32 %v992, 0.0
  %v1275 = vmax.f32 %v994, 0.0
  %v1276 = vmax.f32 %v643, 0.0
  %v1277 = vmax.f32 %v645, 0.0
  %v1278 = vmax.f32 %v996, 0.0
  %v1279 = vmax.f32 %v998, 0.0
  %v1280 = vmax.f32 %v649, 0.0
  %v1281 = vmax.f32 %v651, 0.0
  %v1282 = vmax.f32 %v1002, 0.0
  %v1283 = vmax.f32 %v1004, 0.0
  %v1284 = vmax.f32 %v653, 0.0
  %v1285 = vmax.f32 %v655, 0.0
  %v1286 = vmax.f32 %v1006, 0.0
  %v1287 = vmax.f32 %v1008, 0.0
  %v1288 = vmax.f32 %v659, 0.0
  %v1289 = vmax.f32 %v661, 0.0
  %v1290 = vmax.f32 %v1012, 0.0
  %v1291 = vmax.f32 %v1014, 0.0
  %v1292 = vmax.f32 %v663, 0.0
  %v1293 = vmax.f32 %v665, 0.0
  %v1294 = vmax.f32 %v1016, 0.0
  %v1295 = vmax.f32 %v1018, 0.0
  %v1296 = vmax.f32 %v669, 0.0
  %v1297 = vmax.f32 %v671, 0.0
  %v1298 = vmax.f32 %v1022, 0.0
  %v1299 = vmax.f32 %v1024, 0.0
  %v1300 = vmax.f32 %v673, 0.0
  %v1301 = vmax.f32 %v675, 0.0
  %v1302 = vmax.f32 %v1026, 0.0
  %v1303 = vmax.f32 %v1028, 0.0
  %v1304 = vmax.f32 %v679, 0.0
  %v1305 = vmax.f32 %v681, 0.0
  %v1306 = vmax.f32 %v1032, 0.0
  %v1307 = vmax.f32 %v1034, 0.0
  %v1308 = vmax.f32 %v683, 0.0
  %v1309 = vmax.f32 %v685, 0.0
  %v1310 = vmax.f32 %v1036, 0.0
  %v1311 = vmax.f32 %v1038, 0.0
  %v1312 = vmax.f32 %v689, 0.0
  %v1313 = vmax.f32 %v691, 0.0
  %v1314 = vmax.f32 %v1042, 0.0
  %v1315 = vmax.f32 %v1044, 0.0
  %v1316 = vmax.f32 %v693, 0.0
  %v1317 = vmax.f32 %v695, 0.0
  %v1318 = vmax.f32 %v1046, 0.0
  %v1319 = vmax.f32 %v1048, 0.0
  %v1320 = vmax.f32 %v699, 0.0
  %v1321 = vmax.f32 %v701, 0.0
  %v1322 = vmax.f32 %v1052, 0.0
  %v1323 = vmax.f32 %v1054, 0.0
  %v1324 = vmax.f32 %v703, 0.0
  %v1325 = vmax.f32 %v705, 0.0
  %v1326 = vmax.f32 %v1056, 0.0
  %v1327 = vmax.f32 %v1058, 0.0
  %v1328 = vmax.f32 %v709, 0.0
  %v1329 = vmax.f32 %v711, 0.0
  %v1330 = vmax.f32 %v1062, 0.0
  %v1331 = vmax.f32 %v1064, 0.0
  %v1332 = vmax.f32 %v713, 0.0
  %v1333 = vmax.f32 %v715, 0.0
  %v1334 = vmax.f32 %v1066, 0.0
  %v1335 = vmax.f32 %v1068, 0.0
  %v1336 = vmax.f32 %v719, 0.0
  %v1337 = vmax.f32 %v721, 0.0
  %v1338 = vmax.f32 %v1072, 0.0
  %v1339 = vmax.f32 %v1074, 0.0
  %v1340 = vmax.f32 %v723, 0.0
  %v1341 = vmax.f32 %v725, 0.0
  %v1342 = vmax.f32 %v1076, 0.0
  %v1343 = vmax.f32 %v1078, 0.0
  %v1344 = vmax.f32 %v729, 0.0
  %v1345 = vmax.f32 %v731, 0.0
  %v1346 = vmax.f32 %v1082, 0.0
  %v1347 = vmax.f32 %v1084, 0.0
  %v1348 = vmax.f32 %v733, 0.0
  %v1349 = vmax.f32 %v735, 0.0
  %v1350 = vmax.f32 %v1086, 0.0
  %v1351 = vmax.f32 %v1088, 0.0
  %v1352 = vmax.f32 %v739, 0.0
  %v1353 = vmax.f32 %v741, 0.0
  %v1354 = vmax.f32 %v1092, 0.0
  %v1355 = vmax.f32 %v1094, 0.0
  %v1356 = vmax.f32 %v743, 0.0
  %v1357 = vmax.f32 %v745, 0.0
  %v1358 = vmax.f32 %v1096, 0.0
  %v1359 = vmax.f32 %v1098, 0.0
  %v1360 = vmax.f32 %v749, 0.0
  %v1361 = vmax.f32 %v751, 0.0
  %v1362 = vmax.f32 %v1102, 0.0
  %v1363 = vmax.f32 %v1104, 0.0
  %v1364 = vmax.f32 %v753, 0.0
  %v1365 = vmax.f32 %v755, 0.0
  %v1366 = vmax.f32 %v1106, 0.0
  %v1367 = vmax.f32 %v1108, 0.0
  %v1368 = vmax.f32 %v759, 0.0
  %v1369 = vmax.f32 %v761, 0.0
  %v1370 = vmax.f32 %v1112, 0.0
  %v1371 = vmax.f32 %v1114, 0.0
  %v1372 = vmax.f32 %v763, 0.0
  %v1373 = vmax.f32 %v765, 0.0
  %v1374 = vmax.f32 %v1116, 0.0
  %v1375 = vmax.f32 %v1118, 0.0
  %v1376 = vld [vmem:[%s3] sm:$0xff]
  %v1377 = vld [vmem:[%s3 + $0x8] sm:$0xff]
  %v1378 = vld [vmem:[%s3 + $0x10] sm:$0xff]
  %v1379 = vld [vmem:[%s3 + $0x18] sm:$0xff]
  %v1380 = vld [vmem:[%s3 + $0x20] sm:$0xff]
  %v1381 = vld [vmem:[%s3 + $0x28] sm:$0xff]
  %v1382 = vld [vmem:[%s3 + $0x30] sm:$0xff]
  %v1383 = vld [vmem:[%s3 + $0x38] sm:$0xff]
  %v1384 = vld [vmem:[%s3 + $0x40] sm:$0xff]
  %v1385 = vld [vmem:[%s3 + $0x48] sm:$0xff]
  %v1386 = vld [vmem:[%s3 + $0x50] sm:$0xff]
  %v1387 = vld [vmem:[%s3 + $0x58] sm:$0xff]
  %v1388 = vld [vmem:[%s3 + $0x60] sm:$0xff]
  %v1389 = vld [vmem:[%s3 + $0x68] sm:$0xff]
  %v1390 = vld [vmem:[%s3 + $0x70] sm:$0xff]
  %v1391 = vld [vmem:[%s3 + $0x78] sm:$0xff]
  %v1392 = vld [vmem:[%s3 + $0x80] sm:$0xff]
  %v1393 = vld [vmem:[%s3 + $0x88] sm:$0xff]
  %v1394 = vld [vmem:[%s3 + $0x90] sm:$0xff]
  %v1395 = vld [vmem:[%s3 + $0x98] sm:$0xff]
  %v1396 = vld [vmem:[%s3 + $0xa0] sm:$0xff]
  %v1397 = vld [vmem:[%s3 + $0xa8] sm:$0xff]
  %v1398 = vld [vmem:[%s3 + $0xb0] sm:$0xff]
  %v1399 = vld [vmem:[%s3 + $0xb8] sm:$0xff]
  %v1400 = vld [vmem:[%s3 + $0xc0] sm:$0xff]
  %v1401 = vld [vmem:[%s3 + $0xc8] sm:$0xff]
  %v1402 = vld [vmem:[%s3 + $0xd0] sm:$0xff]
  %v1403 = vld [vmem:[%s3 + $0xd8] sm:$0xff]
  %v1404 = vld [vmem:[%s3 + $0xe0] sm:$0xff]
  %v1405 = vld [vmem:[%s3 + $0xe8] sm:$0xff]
  %v1406 = vld [vmem:[%s3 + $0xf0] sm:$0xff]
  %v1407 = vld [vmem:[%s3 + $0xf8] sm:$0xff]
  %v1408 = vld [vmem:[%s3 + $0x100] sm:$0xff]
  %v1409 = vld [vmem:[%s3 + $0x108] sm:$0xff]
  %v1410 = vld [vmem:[%s3 + $0x110] sm:$0xff]
  %v1411 = vld [vmem:[%s3 + $0x118] sm:$0xff]
  %v1412 = vld [vmem:[%s3 + $0x120] sm:$0xff]
  %v1413 = vld [vmem:[%s3 + $0x128] sm:$0xff]
  %v1414 = vld [vmem:[%s3 + $0x130] sm:$0xff]
  %v1415 = vld [vmem:[%s3 + $0x138] sm:$0xff]
  %v1416 = vld [vmem:[%s3 + $0x140] sm:$0xff]
  %v1417 = vld [vmem:[%s3 + $0x148] sm:$0xff]
  %v1418 = vld [vmem:[%s3 + $0x150] sm:$0xff]
  %v1419 = vld [vmem:[%s3 + $0x158] sm:$0xff]
  %v1420 = vld [vmem:[%s3 + $0x160] sm:$0xff]
  %v1421 = vld [vmem:[%s3 + $0x168] sm:$0xff]
  %v1422 = vld [vmem:[%s3 + $0x170] sm:$0xff]
  %v1423 = vld [vmem:[%s3 + $0x178] sm:$0xff]
  %v1424 = vld [vmem:[%s3 + $0x180] sm:$0xff]
  %v1425 = vld [vmem:[%s3 + $0x188] sm:$0xff]
  %v1426 = vld [vmem:[%s3 + $0x190] sm:$0xff]
  %v1427 = vld [vmem:[%s3 + $0x198] sm:$0xff]
  %v1428 = vld [vmem:[%s3 + $0x1a0] sm:$0xff]
  %v1429 = vld [vmem:[%s3 + $0x1a8] sm:$0xff]
  %v1430 = vld [vmem:[%s3 + $0x1b0] sm:$0xff]
  %v1431 = vld [vmem:[%s3 + $0x1b8] sm:$0xff]
  %v1432 = vld [vmem:[%s3 + $0x1c0] sm:$0xff]
  %v1433 = vld [vmem:[%s3 + $0x1c8] sm:$0xff]
  %v1434 = vld [vmem:[%s3 + $0x1d0] sm:$0xff]
  %v1435 = vld [vmem:[%s3 + $0x1d8] sm:$0xff]
  %v1436 = vld [vmem:[%s3 + $0x1e0] sm:$0xff]
  %v1437 = vld [vmem:[%s3 + $0x1e8] sm:$0xff]
  %v1438 = vld [vmem:[%s3 + $0x1f0] sm:$0xff]
  %v1439 = vld [vmem:[%s3 + $0x1f8] sm:$0xff]
  %v1440 = vld [vmem:[#allocation2] sm:$0x1]
  %v1442 = vlaneseq
  %v1443 = vshrl.u32 %v1442, 7
  %v1444 = vsub.s32 0, %v1443
  %v1445 = vrot.slane %v1440, %v1444
  %1447 = vmatprep.subr.mxu0 0.0
  %1448 = vmatpush1.msra.mxu0 %v1376
  %1449 = vmatprep.subr.mxu0 0.0
  %1450 = vmatpush1.msra.mxu0 %v1377
  %1451 = vmatprep.subr.mxu0 0.0
  %1452 = vmatpush1.msra.mxu0 %v1378
  %1453 = vmatprep.subr.mxu0 0.0
  %1454 = vmatpush1.msra.mxu0 %v1379
  %1455 = vmatprep.subr.mxu0 0.0
  %1456 = vmatpush1.msra.mxu0 %v1380
  %1457 = vmatprep.subr.mxu0 0.0
  %1458 = vmatpush1.msra.mxu0 %v1381
  %1459 = vmatprep.subr.mxu0 0.0
  %1460 = vmatpush1.msra.mxu0 %v1382
  %1461 = vmatprep.subr.mxu0 0.0
  %1462 = vmatpush1.msra.mxu0 %v1383
  %1463 = vmatprep.subr.mxu0 0.0
  %1464 = vmatpush1.msra.mxu0 %v1384
  %1465 = vmatprep.subr.mxu0 0.0
  %1466 = vmatpush1.msra.mxu0 %v1385
  %1467 = vmatprep.subr.mxu0 0.0
  %1468 = vmatpush1.msra.mxu0 %v1386
  %1469 = vmatprep.subr.mxu0 0.0
  %1470 = vmatpush1.msra.mxu0 %v1387
  %1471 = vmatprep.subr.mxu0 0.0
  %1472 = vmatpush1.msra.mxu0 %v1388
  %1473 = vmatprep.subr.mxu0 0.0
  %1474 = vmatpush1.msra.mxu0 %v1389
  %1475 = vmatprep.subr.mxu0 0.0
  %1476 = vmatpush1.msra.mxu0 %v1390
  %1477 = vmatprep.subr.mxu0 0.0
  %1478 = vmatpush1.msra.mxu0 %v1391
  %1479 = vmatprep.subr.mxu0 0.0
  %1480 = vmatpush1.msra.mxu0 %v1392
  %1481 = vmatprep.subr.mxu0 0.0
  %1482 = vmatpush1.msra.mxu0 %v1393
  %1483 = vmatprep.subr.mxu0 0.0
  %1484 = vmatpush1.msra.mxu0 %v1394
  %1485 = vmatprep.subr.mxu0 0.0
  %1486 = vmatpush1.msra.mxu0 %v1395
  %1487 = vmatprep.subr.mxu0 0.0
  %1488 = vmatpush1.msra.mxu0 %v1396
  %1489 = vmatprep.subr.mxu0 0.0
  %1490 = vmatpush1.msra.mxu0 %v1397
  %1491 = vmatprep.subr.mxu0 0.0
  %1492 = vmatpush1.msra.mxu0 %v1398
  %1493 = vmatprep.subr.mxu0 0.0
  %1494 = vmatpush1.msra.mxu0 %v1399
  %1495 = vmatprep.subr.mxu0 0.0
  %1496 = vmatpush1.msra.mxu0 %v1400
  %1497 = vmatprep.subr.mxu0 0.0
  %1498 = vmatpush1.msra.mxu0 %v1401
  %1499 = vmatprep.subr.mxu0 0.0
  %1500 = vmatpush1.msra.mxu0 %v1402
  %1501 = vmatprep.subr.mxu0 0.0
  %1502 = vmatpush1.msra.mxu0 %v1403
  %1503 = vmatprep.subr.mxu0 0.0
  %1504 = vmatpush1.msra.mxu0 %v1404
  %1505 = vmatprep.subr.mxu0 0.0
  %1506 = vmatpush1.msra.mxu0 %v1405
  %1507 = vmatprep.subr.mxu0 0.0
  %1508 = vmatpush1.msra.mxu0 %v1406
  %1509 = vmatprep.subr.mxu0 0.0
  %1510 = vmatpush1.msra.mxu0 %v1407
  %1511 = vmatprep.mubr.f32.mxu0 %v1121
  %1512 = vmatmul.mubr.f32.gmra.mrb[0].mxu0 %v1120
  %v1513 = vpop.f32.mrb[0].mxu0
  %v1514 = vadd.f32 %v1445, %v1513
  %v1515 = vpop.f32.mrb[0].mxu0
  %1516 = vmatprep.mubr.f32.mxu0 %v1125
  %1517 = vmatmul.mubr.f32.gmra.mrb[0].mxu0 %v1124
  %v1518 = vpop.f32.mrb[0].mxu0
  %v1519 = vadd.f32 %v1445, %v1518
  %v1520 = vpop.f32.mrb[0].mxu0
  %1521 = vmatprep.mubr.f32.mxu0 %v1129
  %1522 = vmatmul.mubr.f32.gmra.mrb[0].mxu0 %v1128
  %v1523 = vpop.f32.mrb[0].mxu0
  %v1524 = vadd.f32 %v1445, %v1523
  %v1525 = vpop.f32.mrb[0].mxu0
  %1526 = vmatprep.mubr.f32.mxu0 %v1133
  %1527 = vmatmul.mubr.f32.gmra.mrb[0].mxu0 %v1132
  %v1528 = vpop.f32.mrb[0].mxu0
  %v1529 = vadd.f32 %v1445, %v1528
  %v1530 = vpop.f32.mrb[0].mxu0
  %1531 = vmatprep.mubr.f32.mxu0 %v1137
  %1532 = vmatmul.mubr.f32.gmra.mrb[0].mxu0 %v1136
  %v1533 = vpop.f32.mrb[0].mxu0
  %v1534 = vadd.f32 %v1445, %v1533
  %v1535 = vpop.f32.mrb[0].mxu0
  %1536 = vmatprep.mubr.f32.mxu0 %v1141
  %1537 = vmatmul.mubr.f32.gmra.mrb[0].mxu0 %v1140
  %v1538 = vpop.f32.mrb[0].mxu0
  %v1539 = vadd.f32 %v1445, %v1538
  %v1540 = vpop.f32.mrb[0].mxu0
  %1541 = vmatprep.mubr.f32.mxu0 %v1145
  %1542 = vmatmul.mubr.f32.gmra.mrb[0].mxu0 %v1144
  %v1543 = vpop.f32.mrb[0].mxu0
  %v1544 = vadd.f32 %v1445, %v1543
  %v1545 = vpop.f32.mrb[0].mxu0
  %1546 = vmatprep.mubr.f32.mxu0 %v1149
  %1547 = vmatmul.mubr.f32.gmra.mrb[0].mxu0 %v1148
  %v1548 = vpop.f32.mrb[0].mxu0
  %v1549 = vadd.f32 %v1445, %v1548
  %v1550 = vpop.f32.mrb[0].mxu0
  %1551 = vmatprep.mubr.f32.mxu0 %v1153
  %1552 = vmatmul.mubr.f32.gmra.mrb[0].mxu0 %v1152
  %v1553 = vpop.f32.mrb[0].mxu0
  %v1554 = vadd.f32 %v1445, %v1553
  %v1555 = vpop.f32.mrb[0].mxu0
  %1556 = vmatprep.mubr.f32.mxu0 %v1157
  %1557 = vmatmul.mubr.f32.gmra.mrb[0].mxu0 %v1156
  %v1558 = vpop.f32.mrb[0].mxu0
  %v1559 = vadd.f32 %v1445, %v1558
  %v1560 = vpop.f32.mrb[0].mxu0
  %1561 = vmatprep.mubr.f32.mxu0 %v1161
  %1562 = vmatmul.mubr.f32.gmra.mrb[0].mxu0 %v1160
  %v1563 = vpop.f32.mrb[0].mxu0
  %v1564 = vadd.f32 %v1445, %v1563
  %v1565 = vpop.f32.mrb[0].mxu0
  %1566 = vmatprep.mubr.f32.mxu0 %v1165
  %1567 = vmatmul.mubr.f32.gmra.mrb[0].mxu0 %v1164
  %v1568 = vpop.f32.mrb[0].mxu0
  %v1569 = vadd.f32 %v1445, %v1568
  %v1570 = vpop.f32.mrb[0].mxu0
  %1571 = vmatprep.mubr.f32.mxu0 %v1169
  %1572 = vmatmul.mubr.f32.gmra.mrb[0].mxu0 %v1168
  %v1573 = vpop.f32.mrb[0].mxu0
  %v1574 = vadd.f32 %v1445, %v1573
  %v1575 = vpop.f32.mrb[0].mxu0
  %1576 = vmatprep.mubr.f32.mxu0 %v1173
  %1577 = vmatmul.mubr.f32.gmra.mrb[0].mxu0 %v1172
  %v1578 = vpop.f32.mrb[0].mxu0
  %v1579 = vadd.f32 %v1445, %v1578
  %v1580 = vpop.f32.mrb[0].mxu0
  %1581 = vmatprep.mubr.f32.mxu0 %v1177
  %1582 = vmatmul.mubr.f32.gmra.mrb[0].mxu0 %v1176
  %v1583 = vpop.f32.mrb[0].mxu0
  %v1584 = vadd.f32 %v1445, %v1583
  %v1585 = vpop.f32.mrb[0].mxu0
  %1586 = vmatprep.mubr.f32.mxu0 %v1181
  %1587 = vmatmul.mubr.f32.gmra.mrb[0].mxu0 %v1180
  %v1588 = vpop.f32.mrb[0].mxu0
  %v1589 = vadd.f32 %v1445, %v1588
  %v1590 = vpop.f32.mrb[0].mxu0
  %1591 = vmatprep.mubr.f32.mxu0 %v1185
  %1592 = vmatmul.mubr.f32.gmra.mrb[0].mxu0 %v1184
  %v1593 = vpop.f32.mrb[0].mxu0
  %v1594 = vadd.f32 %v1445, %v1593
  %v1595 = vpop.f32.mrb[0].mxu0
  %1596 = vmatprep.mubr.f32.mxu0 %v1189
  %1597 = vmatmul.mubr.f32.gmra.mrb[0].mxu0 %v1188
  %v1598 = vpop.f32.mrb[0].mxu0
  %v1599 = vadd.f32 %v1445, %v1598
  %v1600 = vpop.f32.mrb[0].mxu0
  %1601 = vmatprep.mubr.f32.mxu0 %v1193
  %1602 = vmatmul.mubr.f32.gmra.mrb[0].mxu0 %v1192
  %v1603 = vpop.f32.mrb[0].mxu0
  %v1604 = vadd.f32 %v1445, %v1603
  %v1605 = vpop.f32.mrb[0].mxu0
  %1606 = vmatprep.mubr.f32.mxu0 %v1197
  %1607 = vmatmul.mubr.f32.gmra.mrb[0].mxu0 %v1196
  %v1608 = vpop.f32.mrb[0].mxu0
  %v1609 = vadd.f32 %v1445, %v1608
  %v1610 = vpop.f32.mrb[0].mxu0
  %1611 = vmatprep.mubr.f32.mxu0 %v1201
  %1612 = vmatmul.mubr.f32.gmra.mrb[0].mxu0 %v1200
  %v1613 = vpop.f32.mrb[0].mxu0
  %v1614 = vadd.f32 %v1445, %v1613
  %v1615 = vpop.f32.mrb[0].mxu0
  %1616 = vmatprep.mubr.f32.mxu0 %v1205
  %1617 = vmatmul.mubr.f32.gmra.mrb[0].mxu0 %v1204
  %v1618 = vpop.f32.mrb[0].mxu0
  %v1619 = vadd.f32 %v1445, %v1618
  %v1620 = vpop.f32.mrb[0].mxu0
  %1621 = vmatprep.mubr.f32.mxu0 %v1209
  %1622 = vmatmul.mubr.f32.gmra.mrb[0].mxu0 %v1208
  %v1623 = vpop.f32.mrb[0].mxu0
  %v1624 = vadd.f32 %v1445, %v1623
  %v1625 = vpop.f32.mrb[0].mxu0
  %1626 = vmatprep.mubr.f32.mxu0 %v1213
  %1627 = vmatmul.mubr.f32.gmra.mrb[0].mxu0 %v1212
  %v1628 = vpop.f32.mrb[0].mxu0
  %v1629 = vadd.f32 %v1445, %v1628
  %v1630 = vpop.f32.mrb[0].mxu0
  %1631 = vmatprep.mubr.f32.mxu0 %v1217
  %1632 = vmatmul.mubr.f32.gmra.mrb[0].mxu0 %v1216
  %v1633 = vpop.f32.mrb[0].mxu0
  %v1634 = vadd.f32 %v1445, %v1633
  %v1635 = vpop.f32.mrb[0].mxu0
  %1636 = vmatprep.mubr.f32.mxu0 %v1221
  %1637 = vmatmul.mubr.f32.gmra.mrb[0].mxu0 %v1220
  %v1638 = vpop.f32.mrb[0].mxu0
  %v1639 = vadd.f32 %v1445, %v1638
  %v1640 = vpop.f32.mrb[0].mxu0
  %1641 = vmatprep.mubr.f32.mxu0 %v1225
  %1642 = vmatmul.mubr.f32.gmra.mrb[0].mxu0 %v1224
  %v1643 = vpop.f32.mrb[0].mxu0
  %v1644 = vadd.f32 %v1445, %v1643
  %v1645 = vpop.f32.mrb[0].mxu0
  %1646 = vmatprep.mubr.f32.mxu0 %v1229
  %1647 = vmatmul.mubr.f32.gmra.mrb[0].mxu0 %v1228
  %v1648 = vpop.f32.mrb[0].mxu0
  %v1649 = vadd.f32 %v1445, %v1648
  %v1650 = vpop.f32.mrb[0].mxu0
  %1651 = vmatprep.mubr.f32.mxu0 %v1233
  %1652 = vmatmul.mubr.f32.gmra.mrb[0].mxu0 %v1232
  %v1653 = vpop.f32.mrb[0].mxu0
  %v1654 = vadd.f32 %v1445, %v1653
  %v1655 = vpop.f32.mrb[0].mxu0
  %1656 = vmatprep.mubr.f32.mxu0 %v1237
  %1657 = vmatmul.mubr.f32.gmra.mrb[0].mxu0 %v1236
  %v1658 = vpop.f32.mrb[0].mxu0
  %v1659 = vadd.f32 %v1445, %v1658
  %v1660 = vpop.f32.mrb[0].mxu0
  %1661 = vmatprep.mubr.f32.mxu0 %v1241
  %1662 = vmatmul.mubr.f32.gmra.mrb[0].mxu0 %v1240
  %v1663 = vpop.f32.mrb[0].mxu0
  %v1664 = vadd.f32 %v1445, %v1663
  %v1665 = vpop.f32.mrb[0].mxu0
  %1666 = vmatprep.mubr.f32.mxu0 %v1245
  %1667 = vmatmul.mubr.f32.gmra.mrb[0].mxu0 %v1244
  %v1668 = vpop.f32.mrb[0].mxu0
  %v1669 = vadd.f32 %v1445, %v1668
  %v1670 = vpop.f32.mrb[0].mxu0
  %1671 = vmatprep.mubr.f32.mxu0 %v1249
  %1672 = vmatmul.mubr.f32.gmra.mrb[0].mxu0 %v1248
  %v1673 = vpop.f32.mrb[0].mxu0
  %v1674 = vadd.f32 %v1445, %v1673
  %v1675 = vpop.f32.mrb[0].mxu0
  %1676 = vmatprep.mubr.f32.mxu0 %v1253
  %1677 = vmatmul.mubr.f32.gmra.mrb[0].mxu0 %v1252
  %v1678 = vpop.f32.mrb[0].mxu0
  %v1679 = vadd.f32 %v1445, %v1678
  %v1680 = vpop.f32.mrb[0].mxu0
  %1681 = vmatprep.mubr.f32.mxu0 %v1257
  %1682 = vmatmul.mubr.f32.gmra.mrb[0].mxu0 %v1256
  %v1683 = vpop.f32.mrb[0].mxu0
  %v1684 = vadd.f32 %v1445, %v1683
  %v1685 = vpop.f32.mrb[0].mxu0
  %1686 = vmatprep.mubr.f32.mxu0 %v1261
  %1687 = vmatmul.mubr.f32.gmra.mrb[0].mxu0 %v1260
  %v1688 = vpop.f32.mrb[0].mxu0
  %v1689 = vadd.f32 %v1445, %v1688
  %v1690 = vpop.f32.mrb[0].mxu0
  %1691 = vmatprep.mubr.f32.mxu0 %v1265
  %1692 = vmatmul.mubr.f32.gmra.mrb[0].mxu0 %v1264
  %v1693 = vpop.f32.mrb[0].mxu0
  %v1694 = vadd.f32 %v1445, %v1693
  %v1695 = vpop.f32.mrb[0].mxu0
  %1696 = vmatprep.mubr.f32.mxu0 %v1269
  %1697 = vmatmul.mubr.f32.gmra.mrb[0].mxu0 %v1268
  %v1698 = vpop.f32.mrb[0].mxu0
  %v1699 = vadd.f32 %v1445, %v1698
  %v1700 = vpop.f32.mrb[0].mxu0
  %1701 = vmatprep.mubr.f32.mxu0 %v1273
  %1702 = vmatmul.mubr.f32.gmra.mrb[0].mxu0 %v1272
  %v1703 = vpop.f32.mrb[0].mxu0
  %v1704 = vadd.f32 %v1445, %v1703
  %v1705 = vpop.f32.mrb[0].mxu0
  %1706 = vmatprep.mubr.f32.mxu0 %v1277
  %1707 = vmatmul.mubr.f32.gmra.mrb[0].mxu0 %v1276
  %v1708 = vpop.f32.mrb[0].mxu0
  %v1709 = vadd.f32 %v1445, %v1708
  %v1710 = vpop.f32.mrb[0].mxu0
  %1711 = vmatprep.mubr.f32.mxu0 %v1281
  %1712 = vmatmul.mubr.f32.gmra.mrb[0].mxu0 %v1280
  %v1713 = vpop.f32.mrb[0].mxu0
  %v1714 = vadd.f32 %v1445, %v1713
  %v1715 = vpop.f32.mrb[0].mxu0
  %1716 = vmatprep.mubr.f32.mxu0 %v1285
  %1717 = vmatmul.mubr.f32.gmra.mrb[0].mxu0 %v1284
  %v1718 = vpop.f32.mrb[0].mxu0
  %v1719 = vadd.f32 %v1445, %v1718
  %v1720 = vpop.f32.mrb[0].mxu0
  %1721 = vmatprep.mubr.f32.mxu0 %v1289
  %1722 = vmatmul.mubr.f32.gmra.mrb[0].mxu0 %v1288
  %v1723 = vpop.f32.mrb[0].mxu0
  %v1724 = vadd.f32 %v1445, %v1723
  %v1725 = vpop.f32.mrb[0].mxu0
  %1726 = vmatprep.mubr.f32.mxu0 %v1293
  %1727 = vmatmul.mubr.f32.gmra.mrb[0].mxu0 %v1292
  %v1728 = vpop.f32.mrb[0].mxu0
  %v1729 = vadd.f32 %v1445, %v1728
  %v1730 = vpop.f32.mrb[0].mxu0
  %1731 = vmatprep.mubr.f32.mxu0 %v1297
  %1732 = vmatmul.mubr.f32.gmra.mrb[0].mxu0 %v1296
  %v1733 = vpop.f32.mrb[0].mxu0
  %v1734 = vadd.f32 %v1445, %v1733
  %v1735 = vpop.f32.mrb[0].mxu0
  %1736 = vmatprep.mubr.f32.mxu0 %v1301
  %1737 = vmatmul.mubr.f32.gmra.mrb[0].mxu0 %v1300
  %v1738 = vpop.f32.mrb[0].mxu0
  %v1739 = vadd.f32 %v1445, %v1738
  %v1740 = vpop.f32.mrb[0].mxu0
  %1741 = vmatprep.mubr.f32.mxu0 %v1305
  %1742 = vmatmul.mubr.f32.gmra.mrb[0].mxu0 %v1304
  %v1743 = vpop.f32.mrb[0].mxu0
  %v1744 = vadd.f32 %v1445, %v1743
  %v1745 = vpop.f32.mrb[0].mxu0
  %1746 = vmatprep.mubr.f32.mxu0 %v1309
  %1747 = vmatmul.mubr.f32.gmra.mrb[0].mxu0 %v1308
  %v1748 = vpop.f32.mrb[0].mxu0
  %v1749 = vadd.f32 %v1445, %v1748
  %v1750 = vpop.f32.mrb[0].mxu0
  %1751 = vmatprep.mubr.f32.mxu0 %v1313
  %1752 = vmatmul.mubr.f32.gmra.mrb[0].mxu0 %v1312
  %v1753 = vpop.f32.mrb[0].mxu0
  %v1754 = vadd.f32 %v1445, %v1753
  %v1755 = vpop.f32.mrb[0].mxu0
  %1756 = vmatprep.mubr.f32.mxu0 %v1317
  %1757 = vmatmul.mubr.f32.gmra.mrb[0].mxu0 %v1316
  %v1758 = vpop.f32.mrb[0].mxu0
  %v1759 = vadd.f32 %v1445, %v1758
  %v1760 = vpop.f32.mrb[0].mxu0
  %1761 = vmatprep.mubr.f32.mxu0 %v1321
  %1762 = vmatmul.mubr.f32.gmra.mrb[0].mxu0 %v1320
  %v1763 = vpop.f32.mrb[0].mxu0
  %v1764 = vadd.f32 %v1445, %v1763
  %v1765 = vpop.f32.mrb[0].mxu0
  %1766 = vmatprep.mubr.f32.mxu0 %v1325
  %1767 = vmatmul.mubr.f32.gmra.mrb[0].mxu0 %v1324
  %v1768 = vpop.f32.mrb[0].mxu0
  %v1769 = vadd.f32 %v1445, %v1768
  %v1770 = vpop.f32.mrb[0].mxu0
  %1771 = vmatprep.mubr.f32.mxu0 %v1329
  %1772 = vmatmul.mubr.f32.gmra.mrb[0].mxu0 %v1328
  %v1773 = vpop.f32.mrb[0].mxu0
  %v1774 = vadd.f32 %v1445, %v1773
  %v1775 = vpop.f32.mrb[0].mxu0
  %1776 = vmatprep.mubr.f32.mxu0 %v1333
  %1777 = vmatmul.mubr.f32.gmra.mrb[0].mxu0 %v1332
  %v1778 = vpop.f32.mrb[0].mxu0
  %v1779 = vadd.f32 %v1445, %v1778
  %v1780 = vpop.f32.mrb[0].mxu0
  %1781 = vmatprep.mubr.f32.mxu0 %v1337
  %1782 = vmatmul.mubr.f32.gmra.mrb[0].mxu0 %v1336
  %v1783 = vpop.f32.mrb[0].mxu0
  %v1784 = vadd.f32 %v1445, %v1783
  %v1785 = vpop.f32.mrb[0].mxu0
  %1786 = vmatprep.mubr.f32.mxu0 %v1341
  %1787 = vmatmul.mubr.f32.gmra.mrb[0].mxu0 %v1340
  %v1788 = vpop.f32.mrb[0].mxu0
  %v1789 = vadd.f32 %v1445, %v1788
  %v1790 = vpop.f32.mrb[0].mxu0
  %1791 = vmatprep.mubr.f32.mxu0 %v1345
  %1792 = vmatmul.mubr.f32.gmra.mrb[0].mxu0 %v1344
  %v1793 = vpop.f32.mrb[0].mxu0
  %v1794 = vadd.f32 %v1445, %v1793
  %v1795 = vpop.f32.mrb[0].mxu0
  %1796 = vmatprep.mubr.f32.mxu0 %v1349
  %1797 = vmatmul.mubr.f32.gmra.mrb[0].mxu0 %v1348
  %v1798 = vpop.f32.mrb[0].mxu0
  %v1799 = vadd.f32 %v1445, %v1798
  %v1800 = vpop.f32.mrb[0].mxu0
  %1801 = vmatprep.mubr.f32.mxu0 %v1353
  %1802 = vmatmul.mubr.f32.gmra.mrb[0].mxu0 %v1352
  %v1803 = vpop.f32.mrb[0].mxu0
  %v1804 = vadd.f32 %v1445, %v1803
  %v1805 = vpop.f32.mrb[0].mxu0
  %1806 = vmatprep.mubr.f32.mxu0 %v1357
  %1807 = vmatmul.mubr.f32.gmra.mrb[0].mxu0 %v1356
  %v1808 = vpop.f32.mrb[0].mxu0
  %v1809 = vadd.f32 %v1445, %v1808
  %v1810 = vpop.f32.mrb[0].mxu0
  %1811 = vmatprep.mubr.f32.mxu0 %v1361
  %1812 = vmatmul.mubr.f32.gmra.mrb[0].mxu0 %v1360
  %v1813 = vpop.f32.mrb[0].mxu0
  %v1814 = vadd.f32 %v1445, %v1813
  %v1815 = vpop.f32.mrb[0].mxu0
  %1816 = vmatprep.mubr.f32.mxu0 %v1365
  %1817 = vmatmul.mubr.f32.gmra.mrb[0].mxu0 %v1364
  %v1818 = vpop.f32.mrb[0].mxu0
  %v1819 = vadd.f32 %v1445, %v1818
  %v1820 = vpop.f32.mrb[0].mxu0
  %1821 = vmatprep.mubr.f32.mxu0 %v1369
  %1822 = vmatmul.mubr.f32.gmra.mrb[0].mxu0 %v1368
  %v1823 = vpop.f32.mrb[0].mxu0
  %v1824 = vadd.f32 %v1445, %v1823
  %v1825 = vpop.f32.mrb[0].mxu0
  %1826 = vmatprep.mubr.f32.mxu0 %v1373
  %1827 = vmatmul.mubr.f32.gmra.mrb[0].mxu0 %v1372
  %v1828 = vpop.f32.mrb[0].mxu0
  %v1829 = vadd.f32 %v1445, %v1828
  %v1830 = vpop.f32.mrb[0].mxu0
  %1831 = vdwg.mxu0
  %1832 = vmatprep.subr.mxu0 0.0
  %1833 = vmatpush1.msra.mxu0 %v1408
  %1834 = vmatprep.subr.mxu0 0.0
  %1835 = vmatpush1.msra.mxu0 %v1409
  %1836 = vmatprep.subr.mxu0 0.0
  %1837 = vmatpush1.msra.mxu0 %v1410
  %1838 = vmatprep.subr.mxu0 0.0
  %1839 = vmatpush1.msra.mxu0 %v1411
  %1840 = vmatprep.subr.mxu0 0.0
  %1841 = vmatpush1.msra.mxu0 %v1412
  %1842 = vmatprep.subr.mxu0 0.0
  %1843 = vmatpush1.msra.mxu0 %v1413
  %1844 = vmatprep.subr.mxu0 0.0
  %1845 = vmatpush1.msra.mxu0 %v1414
  %1846 = vmatprep.subr.mxu0 0.0
  %1847 = vmatpush1.msra.mxu0 %v1415
  %1848 = vmatprep.subr.mxu0 0.0
  %1849 = vmatpush1.msra.mxu0 %v1416
  %1850 = vmatprep.subr.mxu0 0.0
  %1851 = vmatpush1.msra.mxu0 %v1417
  %1852 = vmatprep.subr.mxu0 0.0
  %1853 = vmatpush1.msra.mxu0 %v1418
  %1854 = vmatprep.subr.mxu0 0.0
  %1855 = vmatpush1.msra.mxu0 %v1419
  %1856 = vmatprep.subr.mxu0 0.0
  %1857 = vmatpush1.msra.mxu0 %v1420
  %1858 = vmatprep.subr.mxu0 0.0
  %1859 = vmatpush1.msra.mxu0 %v1421
  %1860 = vmatprep.subr.mxu0 0.0
  %1861 = vmatpush1.msra.mxu0 %v1422
  %1862 = vmatprep.subr.mxu0 0.0
  %1863 = vmatpush1.msra.mxu0 %v1423
  %1864 = vmatprep.subr.mxu0 0.0
  %1865 = vmatpush1.msra.mxu0 %v1424
  %1866 = vmatprep.subr.mxu0 0.0
  %1867 = vmatpush1.msra.mxu0 %v1425
  %1868 = vmatprep.subr.mxu0 0.0
  %1869 = vmatpush1.msra.mxu0 %v1426
  %1870 = vmatprep.subr.mxu0 0.0
  %1871 = vmatpush1.msra.mxu0 %v1427
  %1872 = vmatprep.subr.mxu0 0.0
  %1873 = vmatpush1.msra.mxu0 %v1428
  %1874 = vmatprep.subr.mxu0 0.0
  %1875 = vmatpush1.msra.mxu0 %v1429
  %1876 = vmatprep.subr.mxu0 0.0
  %1877 = vmatpush1.msra.mxu0 %v1430
  %1878 = vmatprep.subr.mxu0 0.0
  %1879 = vmatpush1.msra.mxu0 %v1431
  %1880 = vmatprep.subr.mxu0 0.0
  %1881 = vmatpush1.msra.mxu0 %v1432
  %1882 = vmatprep.subr.mxu0 0.0
  %1883 = vmatpush1.msra.mxu0 %v1433
  %1884 = vmatprep.subr.mxu0 0.0
  %1885 = vmatpush1.msra.mxu0 %v1434
  %1886 = vmatprep.subr.mxu0 0.0
  %1887 = vmatpush1.msra.mxu0 %v1435
  %1888 = vmatprep.subr.mxu0 0.0
  %1889 = vmatpush1.msra.mxu0 %v1436
  %1890 = vmatprep.subr.mxu0 0.0
  %1891 = vmatpush1.msra.mxu0 %v1437
  %1892 = vmatprep.subr.mxu0 0.0
  %1893 = vmatpush1.msra.mxu0 %v1438
  %1894 = vmatprep.subr.mxu0 0.0
  %1895 = vmatpush1.msra.mxu0 %v1439
  %1896 = vmatprep.mubr.f32.mxu0 %v1123
  %1897 = vmatmul.mubr.f32.gmra.mrb[0].mxu0 %v1122
  %v1898 = vpop.f32.mrb[0].mxu0
  %v1899 = vadd.f32 %v1514, %v1898
  %v1900 = vpop.f32.mrb[0].mxu0
  %1901 = vmatprep.mubr.f32.mxu0 %v1127
  %1902 = vmatmul.mubr.f32.gmra.mrb[0].mxu0 %v1126
  %v1903 = vpop.f32.mrb[0].mxu0
  %v1904 = vadd.f32 %v1519, %v1903
  %v1905 = vpop.f32.mrb[0].mxu0
  %1906 = vmatprep.mubr.f32.mxu0 %v1131
  %1907 = vmatmul.mubr.f32.gmra.mrb[0].mxu0 %v1130
  %v1908 = vpop.f32.mrb[0].mxu0
  %v1909 = vadd.f32 %v1524, %v1908
  %v1910 = vpop.f32.mrb[0].mxu0
  %1911 = vmatprep.mubr.f32.mxu0 %v1135
  %1912 = vmatmul.mubr.f32.gmra.mrb[0].mxu0 %v1134
  %v1913 = vpop.f32.mrb[0].mxu0
  %v1914 = vadd.f32 %v1529, %v1913
  %v1915 = vpop.f32.mrb[0].mxu0
  %1916 = vmatprep.mubr.f32.mxu0 %v1139
  %1917 = vmatmul.mubr.f32.gmra.mrb[0].mxu0 %v1138
  %v1918 = vpop.f32.mrb[0].mxu0
  %v1919 = vadd.f32 %v1534, %v1918
  %v1920 = vpop.f32.mrb[0].mxu0
  %1921 = vmatprep.mubr.f32.mxu0 %v1143
  %1922 = vmatmul.mubr.f32.gmra.mrb[0].mxu0 %v1142
  %v1923 = vpop.f32.mrb[0].mxu0
  %v1924 = vadd.f32 %v1539, %v1923
  %v1925 = vpop.f32.mrb[0].mxu0
  %1926 = vmatprep.mubr.f32.mxu0 %v1147
  %1927 = vmatmul.mubr.f32.gmra.mrb[0].mxu0 %v1146
  %v1928 = vpop.f32.mrb[0].mxu0
  %v1929 = vadd.f32 %v1544, %v1928
  %v1930 = vpop.f32.mrb[0].mxu0
  %1931 = vmatprep.mubr.f32.mxu0 %v1151
  %1932 = vmatmul.mubr.f32.gmra.mrb[0].mxu0 %v1150
  %v1933 = vpop.f32.mrb[0].mxu0
  %v1934 = vadd.f32 %v1549, %v1933
  %v1935 = vpop.f32.mrb[0].mxu0
  %1936 = vmatprep.mubr.f32.mxu0 %v1155
  %1937 = vmatmul.mubr.f32.gmra.mrb[0].mxu0 %v1154
  %v1938 = vpop.f32.mrb[0].mxu0
  %v1939 = vadd.f32 %v1554, %v1938
  %v1940 = vpop.f32.mrb[0].mxu0
  %1941 = vmatprep.mubr.f32.mxu0 %v1159
  %1942 = vmatmul.mubr.f32.gmra.mrb[0].mxu0 %v1158
  %v1943 = vpop.f32.mrb[0].mxu0
  %v1944 = vadd.f32 %v1559, %v1943
  %v1945 = vpop.f32.mrb[0].mxu0
  %1946 = vmatprep.mubr.f32.mxu0 %v1163
  %1947 = vmatmul.mubr.f32.gmra.mrb[0].mxu0 %v1162
  %v1948 = vpop.f32.mrb[0].mxu0
  %v1949 = vadd.f32 %v1564, %v1948
  %v1950 = vpop.f32.mrb[0].mxu0
  %1951 = vmatprep.mubr.f32.mxu0 %v1167
  %1952 = vmatmul.mubr.f32.gmra.mrb[0].mxu0 %v1166
  %v1953 = vpop.f32.mrb[0].mxu0
  %v1954 = vadd.f32 %v1569, %v1953
  %v1955 = vpop.f32.mrb[0].mxu0
  %1956 = vmatprep.mubr.f32.mxu0 %v1171
  %1957 = vmatmul.mubr.f32.gmra.mrb[0].mxu0 %v1170
  %v1958 = vpop.f32.mrb[0].mxu0
  %v1959 = vadd.f32 %v1574, %v1958
  %v1960 = vpop.f32.mrb[0].mxu0
  %1961 = vmatprep.mubr.f32.mxu0 %v1175
  %1962 = vmatmul.mubr.f32.gmra.mrb[0].mxu0 %v1174
  %v1963 = vpop.f32.mrb[0].mxu0
  %v1964 = vadd.f32 %v1579, %v1963
  %v1965 = vpop.f32.mrb[0].mxu0
  %1966 = vmatprep.mubr.f32.mxu0 %v1179
  %1967 = vmatmul.mubr.f32.gmra.mrb[0].mxu0 %v1178
  %v1968 = vpop.f32.mrb[0].mxu0
  %v1969 = vadd.f32 %v1584, %v1968
  %v1970 = vpop.f32.mrb[0].mxu0
  %1971 = vmatprep.mubr.f32.mxu0 %v1183
  %1972 = vmatmul.mubr.f32.gmra.mrb[0].mxu0 %v1182
  %v1973 = vpop.f32.mrb[0].mxu0
  %v1974 = vadd.f32 %v1589, %v1973
  %v1975 = vpop.f32.mrb[0].mxu0
  %1976 = vmatprep.mubr.f32.mxu0 %v1187
  %1977 = vmatmul.mubr.f32.gmra.mrb[0].mxu0 %v1186
  %v1978 = vpop.f32.mrb[0].mxu0
  %v1979 = vadd.f32 %v1594, %v1978
  %v1980 = vpop.f32.mrb[0].mxu0
  %1981 = vmatprep.mubr.f32.mxu0 %v1191
  %1982 = vmatmul.mubr.f32.gmra.mrb[0].mxu0 %v1190
  %v1983 = vpop.f32.mrb[0].mxu0
  %v1984 = vadd.f32 %v1599, %v1983
  %v1985 = vpop.f32.mrb[0].mxu0
  %1986 = vmatprep.mubr.f32.mxu0 %v1195
  %1987 = vmatmul.mubr.f32.gmra.mrb[0].mxu0 %v1194
  %v1988 = vpop.f32.mrb[0].mxu0
  %v1989 = vadd.f32 %v1604, %v1988
  %v1990 = vpop.f32.mrb[0].mxu0
  %1991 = vmatprep.mubr.f32.mxu0 %v1199
  %1992 = vmatmul.mubr.f32.gmra.mrb[0].mxu0 %v1198
  %v1993 = vpop.f32.mrb[0].mxu0
  %v1994 = vadd.f32 %v1609, %v1993
  %v1995 = vpop.f32.mrb[0].mxu0
  %1996 = vmatprep.mubr.f32.mxu0 %v1203
  %1997 = vmatmul.mubr.f32.gmra.mrb[0].mxu0 %v1202
  %v1998 = vpop.f32.mrb[0].mxu0
  %v1999 = vadd.f32 %v1614, %v1998
  %v2000 = vpop.f32.mrb[0].mxu0
  %2001 = vmatprep.mubr.f32.mxu0 %v1207
  %2002 = vmatmul.mubr.f32.gmra.mrb[0].mxu0 %v1206
  %v2003 = vpop.f32.mrb[0].mxu0
  %v2004 = vadd.f32 %v1619, %v2003
  %v2005 = vpop.f32.mrb[0].mxu0
  %2006 = vmatprep.mubr.f32.mxu0 %v1211
  %2007 = vmatmul.mubr.f32.gmra.mrb[0].mxu0 %v1210
  %v2008 = vpop.f32.mrb[0].mxu0
  %v2009 = vadd.f32 %v1624, %v2008
  %v2010 = vpop.f32.mrb[0].mxu0
  %2011 = vmatprep.mubr.f32.mxu0 %v1215
  %2012 = vmatmul.mubr.f32.gmra.mrb[0].mxu0 %v1214
  %v2013 = vpop.f32.mrb[0].mxu0
  %v2014 = vadd.f32 %v1629, %v2013
  %v2015 = vpop.f32.mrb[0].mxu0
  %2016 = vmatprep.mubr.f32.mxu0 %v1219
  %2017 = vmatmul.mubr.f32.gmra.mrb[0].mxu0 %v1218
  %v2018 = vpop.f32.mrb[0].mxu0
  %v2019 = vadd.f32 %v1634, %v2018
  %v2020 = vpop.f32.mrb[0].mxu0
  %2021 = vmatprep.mubr.f32.mxu0 %v1223
  %2022 = vmatmul.mubr.f32.gmra.mrb[0].mxu0 %v1222
  %v2023 = vpop.f32.mrb[0].mxu0
  %v2024 = vadd.f32 %v1639, %v2023
  %v2025 = vpop.f32.mrb[0].mxu0
  %2026 = vmatprep.mubr.f32.mxu0 %v1227
  %2027 = vmatmul.mubr.f32.gmra.mrb[0].mxu0 %v1226
  %v2028 = vpop.f32.mrb[0].mxu0
  %v2029 = vadd.f32 %v1644, %v2028
  %v2030 = vpop.f32.mrb[0].mxu0
  %2031 = vmatprep.mubr.f32.mxu0 %v1231
  %2032 = vmatmul.mubr.f32.gmra.mrb[0].mxu0 %v1230
  %v2033 = vpop.f32.mrb[0].mxu0
  %v2034 = vadd.f32 %v1649, %v2033
  %v2035 = vpop.f32.mrb[0].mxu0
  %2036 = vmatprep.mubr.f32.mxu0 %v1235
  %2037 = vmatmul.mubr.f32.gmra.mrb[0].mxu0 %v1234
  %v2038 = vpop.f32.mrb[0].mxu0
  %v2039 = vadd.f32 %v1654, %v2038
  %v2040 = vpop.f32.mrb[0].mxu0
  %2041 = vmatprep.mubr.f32.mxu0 %v1239
  %2042 = vmatmul.mubr.f32.gmra.mrb[0].mxu0 %v1238
  %v2043 = vpop.f32.mrb[0].mxu0
  %v2044 = vadd.f32 %v1659, %v2043
  %v2045 = vpop.f32.mrb[0].mxu0
  %2046 = vmatprep.mubr.f32.mxu0 %v1243
  %2047 = vmatmul.mubr.f32.gmra.mrb[0].mxu0 %v1242
  %v2048 = vpop.f32.mrb[0].mxu0
  %v2049 = vadd.f32 %v1664, %v2048
  %v2050 = vpop.f32.mrb[0].mxu0
  %2051 = vmatprep.mubr.f32.mxu0 %v1247
  %2052 = vmatmul.mubr.f32.gmra.mrb[0].mxu0 %v1246
  %v2053 = vpop.f32.mrb[0].mxu0
  %v2054 = vadd.f32 %v1669, %v2053
  %v2055 = vpop.f32.mrb[0].mxu0
  %2056 = vmatprep.mubr.f32.mxu0 %v1251
  %2057 = vmatmul.mubr.f32.gmra.mrb[0].mxu0 %v1250
  %v2058 = vpop.f32.mrb[0].mxu0
  %v2059 = vadd.f32 %v1674, %v2058
  %v2060 = vpop.f32.mrb[0].mxu0
  %2061 = vmatprep.mubr.f32.mxu0 %v1255
  %2062 = vmatmul.mubr.f32.gmra.mrb[0].mxu0 %v1254
  %v2063 = vpop.f32.mrb[0].mxu0
  %v2064 = vadd.f32 %v1679, %v2063
  %v2065 = vpop.f32.mrb[0].mxu0
  %2066 = vmatprep.mubr.f32.mxu0 %v1259
  %2067 = vmatmul.mubr.f32.gmra.mrb[0].mxu0 %v1258
  %v2068 = vpop.f32.mrb[0].mxu0
  %v2069 = vadd.f32 %v1684, %v2068
  %v2070 = vpop.f32.mrb[0].mxu0
  %2071 = vmatprep.mubr.f32.mxu0 %v1263
  %2072 = vmatmul.mubr.f32.gmra.mrb[0].mxu0 %v1262
  %v2073 = vpop.f32.mrb[0].mxu0
  %v2074 = vadd.f32 %v1689, %v2073
  %v2075 = vpop.f32.mrb[0].mxu0
  %2076 = vmatprep.mubr.f32.mxu0 %v1267
  %2077 = vmatmul.mubr.f32.gmra.mrb[0].mxu0 %v1266
  %v2078 = vpop.f32.mrb[0].mxu0
  %v2079 = vadd.f32 %v1694, %v2078
  %v2080 = vpop.f32.mrb[0].mxu0
  %2081 = vmatprep.mubr.f32.mxu0 %v1271
  %2082 = vmatmul.mubr.f32.gmra.mrb[0].mxu0 %v1270
  %v2083 = vpop.f32.mrb[0].mxu0
  %v2084 = vadd.f32 %v1699, %v2083
  %v2085 = vpop.f32.mrb[0].mxu0
  %2086 = vmatprep.mubr.f32.mxu0 %v1275
  %2087 = vmatmul.mubr.f32.gmra.mrb[0].mxu0 %v1274
  %v2088 = vpop.f32.mrb[0].mxu0
  %v2089 = vadd.f32 %v1704, %v2088
  %v2090 = vpop.f32.mrb[0].mxu0
  %2091 = vmatprep.mubr.f32.mxu0 %v1279
  %2092 = vmatmul.mubr.f32.gmra.mrb[0].mxu0 %v1278
  %v2093 = vpop.f32.mrb[0].mxu0
  %v2094 = vadd.f32 %v1709, %v2093
  %v2095 = vpop.f32.mrb[0].mxu0
  %2096 = vmatprep.mubr.f32.mxu0 %v1283
  %2097 = vmatmul.mubr.f32.gmra.mrb[0].mxu0 %v1282
  %v2098 = vpop.f32.mrb[0].mxu0
  %v2099 = vadd.f32 %v1714, %v2098
  %v2100 = vpop.f32.mrb[0].mxu0
  %2101 = vmatprep.mubr.f32.mxu0 %v1287
  %2102 = vmatmul.mubr.f32.gmra.mrb[0].mxu0 %v1286
  %v2103 = vpop.f32.mrb[0].mxu0
  %v2104 = vadd.f32 %v1719, %v2103
  %v2105 = vpop.f32.mrb[0].mxu0
  %2106 = vmatprep.mubr.f32.mxu0 %v1291
  %2107 = vmatmul.mubr.f32.gmra.mrb[0].mxu0 %v1290
  %v2108 = vpop.f32.mrb[0].mxu0
  %v2109 = vadd.f32 %v1724, %v2108
  %v2110 = vpop.f32.mrb[0].mxu0
  %2111 = vmatprep.mubr.f32.mxu0 %v1295
  %2112 = vmatmul.mubr.f32.gmra.mrb[0].mxu0 %v1294
  %v2113 = vpop.f32.mrb[0].mxu0
  %v2114 = vadd.f32 %v1729, %v2113
  %v2115 = vpop.f32.mrb[0].mxu0
  %2116 = vmatprep.mubr.f32.mxu0 %v1299
  %2117 = vmatmul.mubr.f32.gmra.mrb[0].mxu0 %v1298
  %v2118 = vpop.f32.mrb[0].mxu0
  %v2119 = vadd.f32 %v1734, %v2118
  %v2120 = vpop.f32.mrb[0].mxu0
  %2121 = vmatprep.mubr.f32.mxu0 %v1303
  %2122 = vmatmul.mubr.f32.gmra.mrb[0].mxu0 %v1302
  %v2123 = vpop.f32.mrb[0].mxu0
  %v2124 = vadd.f32 %v1739, %v2123
  %v2125 = vpop.f32.mrb[0].mxu0
  %2126 = vmatprep.mubr.f32.mxu0 %v1307
  %2127 = vmatmul.mubr.f32.gmra.mrb[0].mxu0 %v1306
  %v2128 = vpop.f32.mrb[0].mxu0
  %v2129 = vadd.f32 %v1744, %v2128
  %v2130 = vpop.f32.mrb[0].mxu0
  %2131 = vmatprep.mubr.f32.mxu0 %v1311
  %2132 = vmatmul.mubr.f32.gmra.mrb[0].mxu0 %v1310
  %v2133 = vpop.f32.mrb[0].mxu0
  %v2134 = vadd.f32 %v1749, %v2133
  %v2135 = vpop.f32.mrb[0].mxu0
  %2136 = vmatprep.mubr.f32.mxu0 %v1315
  %2137 = vmatmul.mubr.f32.gmra.mrb[0].mxu0 %v1314
  %v2138 = vpop.f32.mrb[0].mxu0
  %v2139 = vadd.f32 %v1754, %v2138
  %v2140 = vpop.f32.mrb[0].mxu0
  %2141 = vmatprep.mubr.f32.mxu0 %v1319
  %2142 = vmatmul.mubr.f32.gmra.mrb[0].mxu0 %v1318
  %v2143 = vpop.f32.mrb[0].mxu0
  %v2144 = vadd.f32 %v1759, %v2143
  %v2145 = vpop.f32.mrb[0].mxu0
  %2146 = vmatprep.mubr.f32.mxu0 %v1323
  %2147 = vmatmul.mubr.f32.gmra.mrb[0].mxu0 %v1322
  %v2148 = vpop.f32.mrb[0].mxu0
  %v2149 = vadd.f32 %v1764, %v2148
  %v2150 = vpop.f32.mrb[0].mxu0
  %2151 = vmatprep.mubr.f32.mxu0 %v1327
  %2152 = vmatmul.mubr.f32.gmra.mrb[0].mxu0 %v1326
  %v2153 = vpop.f32.mrb[0].mxu0
  %v2154 = vadd.f32 %v1769, %v2153
  %v2155 = vpop.f32.mrb[0].mxu0
  %2156 = vmatprep.mubr.f32.mxu0 %v1331
  %2157 = vmatmul.mubr.f32.gmra.mrb[0].mxu0 %v1330
  %v2158 = vpop.f32.mrb[0].mxu0
  %v2159 = vadd.f32 %v1774, %v2158
  %v2160 = vpop.f32.mrb[0].mxu0
  %2161 = vmatprep.mubr.f32.mxu0 %v1335
  %2162 = vmatmul.mubr.f32.gmra.mrb[0].mxu0 %v1334
  %v2163 = vpop.f32.mrb[0].mxu0
  %v2164 = vadd.f32 %v1779, %v2163
  %v2165 = vpop.f32.mrb[0].mxu0
  %2166 = vmatprep.mubr.f32.mxu0 %v1339
  %2167 = vmatmul.mubr.f32.gmra.mrb[0].mxu0 %v1338
  %v2168 = vpop.f32.mrb[0].mxu0
  %v2169 = vadd.f32 %v1784, %v2168
  %v2170 = vpop.f32.mrb[0].mxu0
  %2171 = vmatprep.mubr.f32.mxu0 %v1343
  %2172 = vmatmul.mubr.f32.gmra.mrb[0].mxu0 %v1342
  %v2173 = vpop.f32.mrb[0].mxu0
  %v2174 = vadd.f32 %v1789, %v2173
  %v2175 = vpop.f32.mrb[0].mxu0
  %2176 = vmatprep.mubr.f32.mxu0 %v1347
  %2177 = vmatmul.mubr.f32.gmra.mrb[0].mxu0 %v1346
  %v2178 = vpop.f32.mrb[0].mxu0
  %v2179 = vadd.f32 %v1794, %v2178
  %v2180 = vpop.f32.mrb[0].mxu0
  %2181 = vmatprep.mubr.f32.mxu0 %v1351
  %2182 = vmatmul.mubr.f32.gmra.mrb[0].mxu0 %v1350
  %v2183 = vpop.f32.mrb[0].mxu0
  %v2184 = vadd.f32 %v1799, %v2183
  %v2185 = vpop.f32.mrb[0].mxu0
  %2186 = vmatprep.mubr.f32.mxu0 %v1355
  %2187 = vmatmul.mubr.f32.gmra.mrb[0].mxu0 %v1354
  %v2188 = vpop.f32.mrb[0].mxu0
  %v2189 = vadd.f32 %v1804, %v2188
  %v2190 = vpop.f32.mrb[0].mxu0
  %2191 = vmatprep.mubr.f32.mxu0 %v1359
  %2192 = vmatmul.mubr.f32.gmra.mrb[0].mxu0 %v1358
  %v2193 = vpop.f32.mrb[0].mxu0
  %v2194 = vadd.f32 %v1809, %v2193
  %v2195 = vpop.f32.mrb[0].mxu0
  %2196 = vmatprep.mubr.f32.mxu0 %v1363
  %2197 = vmatmul.mubr.f32.gmra.mrb[0].mxu0 %v1362
  %v2198 = vpop.f32.mrb[0].mxu0
  %v2199 = vadd.f32 %v1814, %v2198
  %v2200 = vpop.f32.mrb[0].mxu0
  %2201 = vmatprep.mubr.f32.mxu0 %v1367
  %2202 = vmatmul.mubr.f32.gmra.mrb[0].mxu0 %v1366
  %v2203 = vpop.f32.mrb[0].mxu0
  %v2204 = vadd.f32 %v1819, %v2203
  %v2205 = vpop.f32.mrb[0].mxu0
  %2206 = vmatprep.mubr.f32.mxu0 %v1371
  %2207 = vmatmul.mubr.f32.gmra.mrb[0].mxu0 %v1370
  %v2208 = vpop.f32.mrb[0].mxu0
  %v2209 = vadd.f32 %v1824, %v2208
  %v2210 = vpop.f32.mrb[0].mxu0
  %2211 = vmatprep.mubr.f32.mxu0 %v1375
  %2212 = vmatmul.mubr.f32.gmra.mrb[0].mxu0 %v1374
  %v2213 = vpop.f32.mrb[0].mxu0
  %v2214 = vadd.f32 %v1829, %v2213
  %v2215 = vpop.f32.mrb[0].mxu0
  %2216 = vdwg.mxu0
  %v2217 = vmax.f32 %v1899, 0.0
  %v2218 = vmax.f32 %v1904, 0.0
  %v2219 = vmax.f32 %v1909, 0.0
  %v2220 = vmax.f32 %v1914, 0.0
  %v2221 = vmax.f32 %v1919, 0.0
  %v2222 = vmax.f32 %v1924, 0.0
  %v2223 = vmax.f32 %v1929, 0.0
  %v2224 = vmax.f32 %v1934, 0.0
  %v2225 = vmax.f32 %v1939, 0.0
  %v2226 = vmax.f32 %v1944, 0.0
  %v2227 = vmax.f32 %v1949, 0.0
  %v2228 = vmax.f32 %v1954, 0.0
  %v2229 = vmax.f32 %v1959, 0.0
  %v2230 = vmax.f32 %v1964, 0.0
  %v2231 = vmax.f32 %v1969, 0.0
  %v2232 = vmax.f32 %v1974, 0.0
  %v2233 = vmax.f32 %v1979, 0.0
  %v2234 = vmax.f32 %v1984, 0.0
  %v2235 = vmax.f32 %v1989, 0.0
  %v2236 = vmax.f32 %v1994, 0.0
  %v2237 = vmax.f32 %v1999, 0.0
  %v2238 = vmax.f32 %v2004, 0.0
  %v2239 = vmax.f32 %v2009, 0.0
  %v2240 = vmax.f32 %v2014, 0.0
  %v2241 = vmax.f32 %v2019, 0.0
  %v2242 = vmax.f32 %v2024, 0.0
  %v2243 = vmax.f32 %v2029, 0.0
  %v2244 = vmax.f32 %v2034, 0.0
  %v2245 = vmax.f32 %v2039, 0.0
  %v2246 = vmax.f32 %v2044, 0.0
  %v2247 = vmax.f32 %v2049, 0.0
  %v2248 = vmax.f32 %v2054, 0.0
  %v2249 = vmax.f32 %v2059, 0.0
  %v2250 = vmax.f32 %v2064, 0.0
  %v2251 = vmax.f32 %v2069, 0.0
  %v2252 = vmax.f32 %v2074, 0.0
  %v2253 = vmax.f32 %v2079, 0.0
  %v2254 = vmax.f32 %v2084, 0.0
  %v2255 = vmax.f32 %v2089, 0.0
  %v2256 = vmax.f32 %v2094, 0.0
  %v2257 = vmax.f32 %v2099, 0.0
  %v2258 = vmax.f32 %v2104, 0.0
  %v2259 = vmax.f32 %v2109, 0.0
  %v2260 = vmax.f32 %v2114, 0.0
  %v2261 = vmax.f32 %v2119, 0.0
  %v2262 = vmax.f32 %v2124, 0.0
  %v2263 = vmax.f32 %v2129, 0.0
  %v2264 = vmax.f32 %v2134, 0.0
  %v2265 = vmax.f32 %v2139, 0.0
  %v2266 = vmax.f32 %v2144, 0.0
  %v2267 = vmax.f32 %v2149, 0.0
  %v2268 = vmax.f32 %v2154, 0.0
  %v2269 = vmax.f32 %v2159, 0.0
  %v2270 = vmax.f32 %v2164, 0.0
  %v2271 = vmax.f32 %v2169, 0.0
  %v2272 = vmax.f32 %v2174, 0.0
  %v2273 = vmax.f32 %v2179, 0.0
  %v2274 = vmax.f32 %v2184, 0.0
  %v2275 = vmax.f32 %v2189, 0.0
  %v2276 = vmax.f32 %v2194, 0.0
  %v2277 = vmax.f32 %v2199, 0.0
  %v2278 = vmax.f32 %v2204, 0.0
  %v2279 = vmax.f32 %v2209, 0.0
  %v2280 = vmax.f32 %v2214, 0.0
  %v2281 = vand.u32 2147483647, %v1899
  %v2282 = vand.u32 2147483647, %v1904
  %v2283 = vand.u32 2147483647, %v1909
  %v2284 = vand.u32 2147483647, %v1914
  %v2285 = vand.u32 2147483647, %v1919
  %v2286 = vand.u32 2147483647, %v1924
  %v2287 = vand.u32 2147483647, %v1929
  %v2288 = vand.u32 2147483647, %v1934
  %v2289 = vand.u32 2147483647, %v1939
  %v2290 = vand.u32 2147483647, %v1944
  %v2291 = vand.u32 2147483647, %v1949
  %v2292 = vand.u32 2147483647, %v1954
  %v2293 = vand.u32 2147483647, %v1959
  %v2294 = vand.u32 2147483647, %v1964
  %v2295 = vand.u32 2147483647, %v1969
  %v2296 = vand.u32 2147483647, %v1974
  %v2297 = vand.u32 2147483647, %v1979
  %v2298 = vand.u32 2147483647, %v1984
  %v2299 = vand.u32 2147483647, %v1989
  %v2300 = vand.u32 2147483647, %v1994
  %v2301 = vand.u32 2147483647, %v1999
  %v2302 = vand.u32 2147483647, %v2004
  %v2303 = vand.u32 2147483647, %v2009
  %v2304 = vand.u32 2147483647, %v2014
  %v2305 = vand.u32 2147483647, %v2019
  %v2306 = vand.u32 2147483647, %v2024
  %v2307 = vand.u32 2147483647, %v2029
  %v2308 = vand.u32 2147483647, %v2034
  %v2309 = vand.u32 2147483647, %v2039
  %v2310 = vand.u32 2147483647, %v2044
  %v2311 = vand.u32 2147483647, %v2049
  %v2312 = vand.u32 2147483647, %v2054
  %v2313 = vand.u32 2147483647, %v2059
  %v2314 = vand.u32 2147483647, %v2064
  %v2315 = vand.u32 2147483647, %v2069
  %v2316 = vand.u32 2147483647, %v2074
  %v2317 = vand.u32 2147483647, %v2079
  %v2318 = vand.u32 2147483647, %v2084
  %v2319 = vand.u32 2147483647, %v2089
  %v2320 = vand.u32 2147483647, %v2094
  %v2321 = vand.u32 2147483647, %v2099
  %v2322 = vand.u32 2147483647, %v2104
  %v2323 = vand.u32 2147483647, %v2109
  %v2324 = vand.u32 2147483647, %v2114
  %v2325 = vand.u32 2147483647, %v2119
  %v2326 = vand.u32 2147483647, %v2124
  %v2327 = vand.u32 2147483647, %v2129
  %v2328 = vand.u32 2147483647, %v2134
  %v2329 = vand.u32 2147483647, %v2139
  %v2330 = vand.u32 2147483647, %v2144
  %v2331 = vand.u32 2147483647, %v2149
  %v2332 = vand.u32 2147483647, %v2154
  %v2333 = vand.u32 2147483647, %v2159
  %v2334 = vand.u32 2147483647, %v2164
  %v2335 = vand.u32 2147483647, %v2169
  %v2336 = vand.u32 2147483647, %v2174
  %v2337 = vand.u32 2147483647, %v2179
  %v2338 = vand.u32 2147483647, %v2184
  %v2339 = vand.u32 2147483647, %v2189
  %v2340 = vand.u32 2147483647, %v2194
  %v2341 = vand.u32 2147483647, %v2199
  %v2342 = vand.u32 2147483647, %v2204
  %v2343 = vand.u32 2147483647, %v2209
  %v2344 = vand.u32 2147483647, %v2214
  %v2345 = vsub.f32 0.0, %v2281
  %v2346 = vsub.f32 0.0, %v2282
  %v2347 = vsub.f32 0.0, %v2283
  %v2348 = vsub.f32 0.0, %v2284
  %v2349 = vsub.f32 0.0, %v2285
  %v2350 = vsub.f32 0.0, %v2286
  %v2351 = vsub.f32 0.0, %v2287
  %v2352 = vsub.f32 0.0, %v2288
  %v2353 = vsub.f32 0.0, %v2289
  %v2354 = vsub.f32 0.0, %v2290
  %v2355 = vsub.f32 0.0, %v2291
  %v2356 = vsub.f32 0.0, %v2292
  %v2357 = vsub.f32 0.0, %v2293
  %v2358 = vsub.f32 0.0, %v2294
  %v2359 = vsub.f32 0.0, %v2295
  %v2360 = vsub.f32 0.0, %v2296
  %v2361 = vsub.f32 0.0, %v2297
  %v2362 = vsub.f32 0.0, %v2298
  %v2363 = vsub.f32 0.0, %v2299
  %v2364 = vsub.f32 0.0, %v2300
  %v2365 = vsub.f32 0.0, %v2301
  %v2366 = vsub.f32 0.0, %v2302
  %v2367 = vsub.f32 0.0, %v2303
  %v2368 = vsub.f32 0.0, %v2304
  %v2369 = vsub.f32 0.0, %v2305
  %v2370 = vsub.f32 0.0, %v2306
  %v2371 = vsub.f32 0.0, %v2307
  %v2372 = vsub.f32 0.0, %v2308
  %v2373 = vsub.f32 0.0, %v2309
  %v2374 = vsub.f32 0.0, %v2310
  %v2375 = vsub.f32 0.0, %v2311
  %v2376 = vsub.f32 0.0, %v2312
  %v2377 = vsub.f32 0.0, %v2313
  %v2378 = vsub.f32 0.0, %v2314
  %v2379 = vsub.f32 0.0, %v2315
  %v2380 = vsub.f32 0.0, %v2316
  %v2381 = vsub.f32 0.0, %v2317
  %v2382 = vsub.f32 0.0, %v2318
  %v2383 = vsub.f32 0.0, %v2319
  %v2384 = vsub.f32 0.0, %v2320
  %v2385 = vsub.f32 0.0, %v2321
  %v2386 = vsub.f32 0.0, %v2322
  %v2387 = vsub.f32 0.0, %v2323
  %v2388 = vsub.f32 0.0, %v2324
  %v2389 = vsub.f32 0.0, %v2325
  %v2390 = vsub.f32 0.0, %v2326
  %v2391 = vsub.f32 0.0, %v2327
  %v2392 = vsub.f32 0.0, %v2328
  %v2393 = vsub.f32 0.0, %v2329
  %v2394 = vsub.f32 0.0, %v2330
  %v2395 = vsub.f32 0.0, %v2331
  %v2396 = vsub.f32 0.0, %v2332
  %v2397 = vsub.f32 0.0, %v2333
  %v2398 = vsub.f32 0.0, %v2334
  %v2399 = vsub.f32 0.0, %v2335
  %v2400 = vsub.f32 0.0, %v2336
  %v2401 = vsub.f32 0.0, %v2337
  %v2402 = vsub.f32 0.0, %v2338
  %v2403 = vsub.f32 0.0, %v2339
  %v2404 = vsub.f32 0.0, %v2340
  %v2405 = vsub.f32 0.0, %v2341
  %v2406 = vsub.f32 0.0, %v2342
  %v2407 = vsub.f32 0.0, %v2343
  %v2408 = vsub.f32 0.0, %v2344
  %v2409 = vmul.f32 %v2345, 1.442695
  %v2410 = vpow.pop %v2409
  %v2411 = vmul.f32 %v2346, 1.442695
  %v2412 = vpow.pop %v2411
  %v2413 = vmul.f32 %v2347, 1.442695
  %v2414 = vpow.pop %v2413
  %v2415 = vmul.f32 %v2348, 1.442695
  %v2416 = vpow.pop %v2415
  %v2417 = vmul.f32 %v2349, 1.442695
  %v2418 = vpow.pop %v2417
  %v2419 = vmul.f32 %v2350, 1.442695
  %v2420 = vpow.pop %v2419
  %v2421 = vmul.f32 %v2351, 1.442695
  %v2422 = vpow.pop %v2421
  %v2423 = vmul.f32 %v2352, 1.442695
  %v2424 = vpow.pop %v2423
  %v2425 = vmul.f32 %v2353, 1.442695
  %v2426 = vpow.pop %v2425
  %v2427 = vmul.f32 %v2354, 1.442695
  %v2428 = vpow.pop %v2427
  %v2429 = vmul.f32 %v2355, 1.442695
  %v2430 = vpow.pop %v2429
  %v2431 = vmul.f32 %v2356, 1.442695
  %v2432 = vpow.pop %v2431
  %v2433 = vmul.f32 %v2357, 1.442695
  %v2434 = vpow.pop %v2433
  %v2435 = vmul.f32 %v2358, 1.442695
  %v2436 = vpow.pop %v2435
  %v2437 = vmul.f32 %v2359, 1.442695
  %v2438 = vpow.pop %v2437
  %v2439 = vmul.f32 %v2360, 1.442695
  %v2440 = vpow.pop %v2439
  %v2441 = vmul.f32 %v2361, 1.442695
  %v2442 = vpow.pop %v2441
  %v2443 = vmul.f32 %v2362, 1.442695
  %v2444 = vpow.pop %v2443
  %v2445 = vmul.f32 %v2363, 1.442695
  %v2446 = vpow.pop %v2445
  %v2447 = vmul.f32 %v2364, 1.442695
  %v2448 = vpow.pop %v2447
  %v2449 = vmul.f32 %v2365, 1.442695
  %v2450 = vpow.pop %v2449
  %v2451 = vmul.f32 %v2366, 1.442695
  %v2452 = vpow.pop %v2451
  %v2453 = vmul.f32 %v2367, 1.442695
  %v2454 = vpow.pop %v2453
  %v2455 = vmul.f32 %v2368, 1.442695
  %v2456 = vpow.pop %v2455
  %v2457 = vmul.f32 %v2369, 1.442695
  %v2458 = vpow.pop %v2457
  %v2459 = vmul.f32 %v2370, 1.442695
  %v2460 = vpow.pop %v2459
  %v2461 = vmul.f32 %v2371, 1.442695
  %v2462 = vpow.pop %v2461
  %v2463 = vmul.f32 %v2372, 1.442695
  %v2464 = vpow.pop %v2463
  %v2465 = vmul.f32 %v2373, 1.442695
  %v2466 = vpow.pop %v2465
  %v2467 = vmul.f32 %v2374, 1.442695
  %v2468 = vpow.pop %v2467
  %v2469 = vmul.f32 %v2375, 1.442695
  %v2470 = vpow.pop %v2469
  %v2471 = vmul.f32 %v2376, 1.442695
  %v2472 = vpow.pop %v2471
  %v2473 = vmul.f32 %v2377, 1.442695
  %v2474 = vpow.pop %v2473
  %v2475 = vmul.f32 %v2378, 1.442695
  %v2476 = vpow.pop %v2475
  %v2477 = vmul.f32 %v2379, 1.442695
  %v2478 = vpow.pop %v2477
  %v2479 = vmul.f32 %v2380, 1.442695
  %v2480 = vpow.pop %v2479
  %v2481 = vmul.f32 %v2381, 1.442695
  %v2482 = vpow.pop %v2481
  %v2483 = vmul.f32 %v2382, 1.442695
  %v2484 = vpow.pop %v2483
  %v2485 = vmul.f32 %v2383, 1.442695
  %v2486 = vpow.pop %v2485
  %v2487 = vmul.f32 %v2384, 1.442695
  %v2488 = vpow.pop %v2487
  %v2489 = vmul.f32 %v2385, 1.442695
  %v2490 = vpow.pop %v2489
  %v2491 = vmul.f32 %v2386, 1.442695
  %v2492 = vpow.pop %v2491
  %v2493 = vmul.f32 %v2387, 1.442695
  %v2494 = vpow.pop %v2493
  %v2495 = vmul.f32 %v2388, 1.442695
  %v2496 = vpow.pop %v2495
  %v2497 = vmul.f32 %v2389, 1.442695
  %v2498 = vpow.pop %v2497
  %v2499 = vmul.f32 %v2390, 1.442695
  %v2500 = vpow.pop %v2499
  %v2501 = vmul.f32 %v2391, 1.442695
  %v2502 = vpow.pop %v2501
  %v2503 = vmul.f32 %v2392, 1.442695
  %v2504 = vpow.pop %v2503
  %v2505 = vmul.f32 %v2393, 1.442695
  %v2506 = vpow.pop %v2505
  %v2507 = vmul.f32 %v2394, 1.442695
  %v2508 = vpow.pop %v2507
  %v2509 = vmul.f32 %v2395, 1.442695
  %v2510 = vpow.pop %v2509
  %v2511 = vmul.f32 %v2396, 1.442695
  %v2512 = vpow.pop %v2511
  %v2513 = vmul.f32 %v2397, 1.442695
  %v2514 = vpow.pop %v2513
  %v2515 = vmul.f32 %v2398, 1.442695
  %v2516 = vpow.pop %v2515
  %v2517 = vmul.f32 %v2399, 1.442695
  %v2518 = vpow.pop %v2517
  %v2519 = vmul.f32 %v2400, 1.442695
  %v2520 = vpow.pop %v2519
  %v2521 = vmul.f32 %v2401, 1.442695
  %v2522 = vpow.pop %v2521
  %v2523 = vmul.f32 %v2402, 1.442695
  %v2524 = vpow.pop %v2523
  %v2525 = vmul.f32 %v2403, 1.442695
  %v2526 = vpow.pop %v2525
  %v2527 = vmul.f32 %v2404, 1.442695
  %v2528 = vpow.pop %v2527
  %v2529 = vmul.f32 %v2405, 1.442695
  %v2530 = vpow.pop %v2529
  %v2531 = vmul.f32 %v2406, 1.442695
  %v2532 = vpow.pop %v2531
  %v2533 = vmul.f32 %v2407, 1.442695
  %v2534 = vpow.pop %v2533
  %v2535 = vmul.f32 %v2408, 1.442695
  %v2536 = vpow.pop %v2535
  %v2537 = vadd.f32 %v2410, 1.0
  %v2538 = vlog2.pop %v2537
  %v2539 = vmul.f32 %v2538, 0.6931472
  %v2540 = vmul.f32 -0.5, %v2410
  %v2541 = vadd.f32 %v2540, 1.0
  %v2542 = vmul.f32 %v2541, %v2410
  %v2543 = vand.u32 2147483647, %v2410
  %vm2544 = vcmp.lt.f32.partialorder %v2543, 0.0004427343
  %v2545 = vsel %vm2544, %v2542, %v2539
  %v2546 = vadd.f32 %v2412, 1.0
  %v2547 = vlog2.pop %v2546
  %v2548 = vmul.f32 %v2547, 0.6931472
  %v2549 = vmul.f32 -0.5, %v2412
  %v2550 = vadd.f32 %v2549, 1.0
  %v2551 = vmul.f32 %v2550, %v2412
  %v2552 = vand.u32 2147483647, %v2412
  %vm2553 = vcmp.lt.f32.partialorder %v2552, 0.0004427343
  %v2554 = vsel %vm2553, %v2551, %v2548
  %v2555 = vadd.f32 %v2414, 1.0
  %v2556 = vlog2.pop %v2555
  %v2557 = vmul.f32 %v2556, 0.6931472
  %v2558 = vmul.f32 -0.5, %v2414
  %v2559 = vadd.f32 %v2558, 1.0
  %v2560 = vmul.f32 %v2559, %v2414
  %v2561 = vand.u32 2147483647, %v2414
  %vm2562 = vcmp.lt.f32.partialorder %v2561, 0.0004427343
  %v2563 = vsel %vm2562, %v2560, %v2557
  %v2564 = vadd.f32 %v2416, 1.0
  %v2565 = vlog2.pop %v2564
  %v2566 = vmul.f32 %v2565, 0.6931472
  %v2567 = vmul.f32 -0.5, %v2416
  %v2568 = vadd.f32 %v2567, 1.0
  %v2569 = vmul.f32 %v2568, %v2416
  %v2570 = vand.u32 2147483647, %v2416
  %vm2571 = vcmp.lt.f32.partialorder %v2570, 0.0004427343
  %v2572 = vsel %vm2571, %v2569, %v2566
  %v2573 = vadd.f32 %v2418, 1.0
  %v2574 = vlog2.pop %v2573
  %v2575 = vmul.f32 %v2574, 0.6931472
  %v2576 = vmul.f32 -0.5, %v2418
  %v2577 = vadd.f32 %v2576, 1.0
  %v2578 = vmul.f32 %v2577, %v2418
  %v2579 = vand.u32 2147483647, %v2418
  %vm2580 = vcmp.lt.f32.partialorder %v2579, 0.0004427343
  %v2581 = vsel %vm2580, %v2578, %v2575
  %v2582 = vadd.f32 %v2420, 1.0
  %v2583 = vlog2.pop %v2582
  %v2584 = vmul.f32 %v2583, 0.6931472
  %v2585 = vmul.f32 -0.5, %v2420
  %v2586 = vadd.f32 %v2585, 1.0
  %v2587 = vmul.f32 %v2586, %v2420
  %v2588 = vand.u32 2147483647, %v2420
  %vm2589 = vcmp.lt.f32.partialorder %v2588, 0.0004427343
  %v2590 = vsel %vm2589, %v2587, %v2584
  %v2591 = vadd.f32 %v2422, 1.0
  %v2592 = vlog2.pop %v2591
  %v2593 = vmul.f32 %v2592, 0.6931472
  %v2594 = vmul.f32 -0.5, %v2422
  %v2595 = vadd.f32 %v2594, 1.0
  %v2596 = vmul.f32 %v2595, %v2422
  %v2597 = vand.u32 2147483647, %v2422
  %vm2598 = vcmp.lt.f32.partialorder %v2597, 0.0004427343
  %v2599 = vsel %vm2598, %v2596, %v2593
  %v2600 = vadd.f32 %v2424, 1.0
  %v2601 = vlog2.pop %v2600
  %v2602 = vmul.f32 %v2601, 0.6931472
  %v2603 = vmul.f32 -0.5, %v2424
  %v2604 = vadd.f32 %v2603, 1.0
  %v2605 = vmul.f32 %v2604, %v2424
  %v2606 = vand.u32 2147483647, %v2424
  %vm2607 = vcmp.lt.f32.partialorder %v2606, 0.0004427343
  %v2608 = vsel %vm2607, %v2605, %v2602
  %v2609 = vadd.f32 %v2426, 1.0
  %v2610 = vlog2.pop %v2609
  %v2611 = vmul.f32 %v2610, 0.6931472
  %v2612 = vmul.f32 -0.5, %v2426
  %v2613 = vadd.f32 %v2612, 1.0
  %v2614 = vmul.f32 %v2613, %v2426
  %v2615 = vand.u32 2147483647, %v2426
  %vm2616 = vcmp.lt.f32.partialorder %v2615, 0.0004427343
  %v2617 = vsel %vm2616, %v2614, %v2611
  %v2618 = vadd.f32 %v2428, 1.0
  %v2619 = vlog2.pop %v2618
  %v2620 = vmul.f32 %v2619, 0.6931472
  %v2621 = vmul.f32 -0.5, %v2428
  %v2622 = vadd.f32 %v2621, 1.0
  %v2623 = vmul.f32 %v2622, %v2428
  %v2624 = vand.u32 2147483647, %v2428
  %vm2625 = vcmp.lt.f32.partialorder %v2624, 0.0004427343
  %v2626 = vsel %vm2625, %v2623, %v2620
  %v2627 = vadd.f32 %v2430, 1.0
  %v2628 = vlog2.pop %v2627
  %v2629 = vmul.f32 %v2628, 0.6931472
  %v2630 = vmul.f32 -0.5, %v2430
  %v2631 = vadd.f32 %v2630, 1.0
  %v2632 = vmul.f32 %v2631, %v2430
  %v2633 = vand.u32 2147483647, %v2430
  %vm2634 = vcmp.lt.f32.partialorder %v2633, 0.0004427343
  %v2635 = vsel %vm2634, %v2632, %v2629
  %v2636 = vadd.f32 %v2432, 1.0
  %v2637 = vlog2.pop %v2636
  %v2638 = vmul.f32 %v2637, 0.6931472
  %v2639 = vmul.f32 -0.5, %v2432
  %v2640 = vadd.f32 %v2639, 1.0
  %v2641 = vmul.f32 %v2640, %v2432
  %v2642 = vand.u32 2147483647, %v2432
  %vm2643 = vcmp.lt.f32.partialorder %v2642, 0.0004427343
  %v2644 = vsel %vm2643, %v2641, %v2638
  %v2645 = vadd.f32 %v2434, 1.0
  %v2646 = vlog2.pop %v2645
  %v2647 = vmul.f32 %v2646, 0.6931472
  %v2648 = vmul.f32 -0.5, %v2434
  %v2649 = vadd.f32 %v2648, 1.0
  %v2650 = vmul.f32 %v2649, %v2434
  %v2651 = vand.u32 2147483647, %v2434
  %vm2652 = vcmp.lt.f32.partialorder %v2651, 0.0004427343
  %v2653 = vsel %vm2652, %v2650, %v2647
  %v2654 = vadd.f32 %v2436, 1.0
  %v2655 = vlog2.pop %v2654
  %v2656 = vmul.f32 %v2655, 0.6931472
  %v2657 = vmul.f32 -0.5, %v2436
  %v2658 = vadd.f32 %v2657, 1.0
  %v2659 = vmul.f32 %v2658, %v2436
  %v2660 = vand.u32 2147483647, %v2436
  %vm2661 = vcmp.lt.f32.partialorder %v2660, 0.0004427343
  %v2662 = vsel %vm2661, %v2659, %v2656
  %v2663 = vadd.f32 %v2438, 1.0
  %v2664 = vlog2.pop %v2663
  %v2665 = vmul.f32 %v2664, 0.6931472
  %v2666 = vmul.f32 -0.5, %v2438
  %v2667 = vadd.f32 %v2666, 1.0
  %v2668 = vmul.f32 %v2667, %v2438
  %v2669 = vand.u32 2147483647, %v2438
  %vm2670 = vcmp.lt.f32.partialorder %v2669, 0.0004427343
  %v2671 = vsel %vm2670, %v2668, %v2665
  %v2672 = vadd.f32 %v2440, 1.0
  %v2673 = vlog2.pop %v2672
  %v2674 = vmul.f32 %v2673, 0.6931472
  %v2675 = vmul.f32 -0.5, %v2440
  %v2676 = vadd.f32 %v2675, 1.0
  %v2677 = vmul.f32 %v2676, %v2440
  %v2678 = vand.u32 2147483647, %v2440
  %vm2679 = vcmp.lt.f32.partialorder %v2678, 0.0004427343
  %v2680 = vsel %vm2679, %v2677, %v2674
  %v2681 = vadd.f32 %v2442, 1.0
  %v2682 = vlog2.pop %v2681
  %v2683 = vmul.f32 %v2682, 0.6931472
  %v2684 = vmul.f32 -0.5, %v2442
  %v2685 = vadd.f32 %v2684, 1.0
  %v2686 = vmul.f32 %v2685, %v2442
  %v2687 = vand.u32 2147483647, %v2442
  %vm2688 = vcmp.lt.f32.partialorder %v2687, 0.0004427343
  %v2689 = vsel %vm2688, %v2686, %v2683
  %v2690 = vadd.f32 %v2444, 1.0
  %v2691 = vlog2.pop %v2690
  %v2692 = vmul.f32 %v2691, 0.6931472
  %v2693 = vmul.f32 -0.5, %v2444
  %v2694 = vadd.f32 %v2693, 1.0
  %v2695 = vmul.f32 %v2694, %v2444
  %v2696 = vand.u32 2147483647, %v2444
  %vm2697 = vcmp.lt.f32.partialorder %v2696, 0.0004427343
  %v2698 = vsel %vm2697, %v2695, %v2692
  %v2699 = vadd.f32 %v2446, 1.0
  %v2700 = vlog2.pop %v2699
  %v2701 = vmul.f32 %v2700, 0.6931472
  %v2702 = vmul.f32 -0.5, %v2446
  %v2703 = vadd.f32 %v2702, 1.0
  %v2704 = vmul.f32 %v2703, %v2446
  %v2705 = vand.u32 2147483647, %v2446
  %vm2706 = vcmp.lt.f32.partialorder %v2705, 0.0004427343
  %v2707 = vsel %vm2706, %v2704, %v2701
  %v2708 = vadd.f32 %v2448, 1.0
  %v2709 = vlog2.pop %v2708
  %v2710 = vmul.f32 %v2709, 0.6931472
  %v2711 = vmul.f32 -0.5, %v2448
  %v2712 = vadd.f32 %v2711, 1.0
  %v2713 = vmul.f32 %v2712, %v2448
  %v2714 = vand.u32 2147483647, %v2448
  %vm2715 = vcmp.lt.f32.partialorder %v2714, 0.0004427343
  %v2716 = vsel %vm2715, %v2713, %v2710
  %v2717 = vadd.f32 %v2450, 1.0
  %v2718 = vlog2.pop %v2717
  %v2719 = vmul.f32 %v2718, 0.6931472
  %v2720 = vmul.f32 -0.5, %v2450
  %v2721 = vadd.f32 %v2720, 1.0
  %v2722 = vmul.f32 %v2721, %v2450
  %v2723 = vand.u32 2147483647, %v2450
  %vm2724 = vcmp.lt.f32.partialorder %v2723, 0.0004427343
  %v2725 = vsel %vm2724, %v2722, %v2719
  %v2726 = vadd.f32 %v2452, 1.0
  %v2727 = vlog2.pop %v2726
  %v2728 = vmul.f32 %v2727, 0.6931472
  %v2729 = vmul.f32 -0.5, %v2452
  %v2730 = vadd.f32 %v2729, 1.0
  %v2731 = vmul.f32 %v2730, %v2452
  %v2732 = vand.u32 2147483647, %v2452
  %vm2733 = vcmp.lt.f32.partialorder %v2732, 0.0004427343
  %v2734 = vsel %vm2733, %v2731, %v2728
  %v2735 = vadd.f32 %v2454, 1.0
  %v2736 = vlog2.pop %v2735
  %v2737 = vmul.f32 %v2736, 0.6931472
  %v2738 = vmul.f32 -0.5, %v2454
  %v2739 = vadd.f32 %v2738, 1.0
  %v2740 = vmul.f32 %v2739, %v2454
  %v2741 = vand.u32 2147483647, %v2454
  %vm2742 = vcmp.lt.f32.partialorder %v2741, 0.0004427343
  %v2743 = vsel %vm2742, %v2740, %v2737
  %v2744 = vadd.f32 %v2456, 1.0
  %v2745 = vlog2.pop %v2744
  %v2746 = vmul.f32 %v2745, 0.6931472
  %v2747 = vmul.f32 -0.5, %v2456
  %v2748 = vadd.f32 %v2747, 1.0
  %v2749 = vmul.f32 %v2748, %v2456
  %v2750 = vand.u32 2147483647, %v2456
  %vm2751 = vcmp.lt.f32.partialorder %v2750, 0.0004427343
  %v2752 = vsel %vm2751, %v2749, %v2746
  %v2753 = vadd.f32 %v2458, 1.0
  %v2754 = vlog2.pop %v2753
  %v2755 = vmul.f32 %v2754, 0.6931472
  %v2756 = vmul.f32 -0.5, %v2458
  %v2757 = vadd.f32 %v2756, 1.0
  %v2758 = vmul.f32 %v2757, %v2458
  %v2759 = vand.u32 2147483647, %v2458
  %vm2760 = vcmp.lt.f32.partialorder %v2759, 0.0004427343
  %v2761 = vsel %vm2760, %v2758, %v2755
  %v2762 = vadd.f32 %v2460, 1.0
  %v2763 = vlog2.pop %v2762
  %v2764 = vmul.f32 %v2763, 0.6931472
  %v2765 = vmul.f32 -0.5, %v2460
  %v2766 = vadd.f32 %v2765, 1.0
  %v2767 = vmul.f32 %v2766, %v2460
  %v2768 = vand.u32 2147483647, %v2460
  %vm2769 = vcmp.lt.f32.partialorder %v2768, 0.0004427343
  %v2770 = vsel %vm2769, %v2767, %v2764
  %v2771 = vadd.f32 %v2462, 1.0
  %v2772 = vlog2.pop %v2771
  %v2773 = vmul.f32 %v2772, 0.6931472
  %v2774 = vmul.f32 -0.5, %v2462
  %v2775 = vadd.f32 %v2774, 1.0
  %v2776 = vmul.f32 %v2775, %v2462
  %v2777 = vand.u32 2147483647, %v2462
  %vm2778 = vcmp.lt.f32.partialorder %v2777, 0.0004427343
  %v2779 = vsel %vm2778, %v2776, %v2773
  %v2780 = vadd.f32 %v2464, 1.0
  %v2781 = vlog2.pop %v2780
  %v2782 = vmul.f32 %v2781, 0.6931472
  %v2783 = vmul.f32 -0.5, %v2464
  %v2784 = vadd.f32 %v2783, 1.0
  %v2785 = vmul.f32 %v2784, %v2464
  %v2786 = vand.u32 2147483647, %v2464
  %vm2787 = vcmp.lt.f32.partialorder %v2786, 0.0004427343
  %v2788 = vsel %vm2787, %v2785, %v2782
  %v2789 = vadd.f32 %v2466, 1.0
  %v2790 = vlog2.pop %v2789
  %v2791 = vmul.f32 %v2790, 0.6931472
  %v2792 = vmul.f32 -0.5, %v2466
  %v2793 = vadd.f32 %v2792, 1.0
  %v2794 = vmul.f32 %v2793, %v2466
  %v2795 = vand.u32 2147483647, %v2466
  %vm2796 = vcmp.lt.f32.partialorder %v2795, 0.0004427343
  %v2797 = vsel %vm2796, %v2794, %v2791
  %v2798 = vadd.f32 %v2468, 1.0
  %v2799 = vlog2.pop %v2798
  %v2800 = vmul.f32 %v2799, 0.6931472
  %v2801 = vmul.f32 -0.5, %v2468
  %v2802 = vadd.f32 %v2801, 1.0
  %v2803 = vmul.f32 %v2802, %v2468
  %v2804 = vand.u32 2147483647, %v2468
  %vm2805 = vcmp.lt.f32.partialorder %v2804, 0.0004427343
  %v2806 = vsel %vm2805, %v2803, %v2800
  %v2807 = vadd.f32 %v2470, 1.0
  %v2808 = vlog2.pop %v2807
  %v2809 = vmul.f32 %v2808, 0.6931472
  %v2810 = vmul.f32 -0.5, %v2470
  %v2811 = vadd.f32 %v2810, 1.0
  %v2812 = vmul.f32 %v2811, %v2470
  %v2813 = vand.u32 2147483647, %v2470
  %vm2814 = vcmp.lt.f32.partialorder %v2813, 0.0004427343
  %v2815 = vsel %vm2814, %v2812, %v2809
  %v2816 = vadd.f32 %v2472, 1.0
  %v2817 = vlog2.pop %v2816
  %v2818 = vmul.f32 %v2817, 0.6931472
  %v2819 = vmul.f32 -0.5, %v2472
  %v2820 = vadd.f32 %v2819, 1.0
  %v2821 = vmul.f32 %v2820, %v2472
  %v2822 = vand.u32 2147483647, %v2472
  %vm2823 = vcmp.lt.f32.partialorder %v2822, 0.0004427343
  %v2824 = vsel %vm2823, %v2821, %v2818
  %v2825 = vadd.f32 %v2474, 1.0
  %v2826 = vlog2.pop %v2825
  %v2827 = vmul.f32 %v2826, 0.6931472
  %v2828 = vmul.f32 -0.5, %v2474
  %v2829 = vadd.f32 %v2828, 1.0
  %v2830 = vmul.f32 %v2829, %v2474
  %v2831 = vand.u32 2147483647, %v2474
  %vm2832 = vcmp.lt.f32.partialorder %v2831, 0.0004427343
  %v2833 = vsel %vm2832, %v2830, %v2827
  %v2834 = vadd.f32 %v2476, 1.0
  %v2835 = vlog2.pop %v2834
  %v2836 = vmul.f32 %v2835, 0.6931472
  %v2837 = vmul.f32 -0.5, %v2476
  %v2838 = vadd.f32 %v2837, 1.0
  %v2839 = vmul.f32 %v2838, %v2476
  %v2840 = vand.u32 2147483647, %v2476
  %vm2841 = vcmp.lt.f32.partialorder %v2840, 0.0004427343
  %v2842 = vsel %vm2841, %v2839, %v2836
  %v2843 = vadd.f32 %v2478, 1.0
  %v2844 = vlog2.pop %v2843
  %v2845 = vmul.f32 %v2844, 0.6931472
  %v2846 = vmul.f32 -0.5, %v2478
  %v2847 = vadd.f32 %v2846, 1.0
  %v2848 = vmul.f32 %v2847, %v2478
  %v2849 = vand.u32 2147483647, %v2478
  %vm2850 = vcmp.lt.f32.partialorder %v2849, 0.0004427343
  %v2851 = vsel %vm2850, %v2848, %v2845
  %v2852 = vadd.f32 %v2480, 1.0
  %v2853 = vlog2.pop %v2852
  %v2854 = vmul.f32 %v2853, 0.6931472
  %v2855 = vmul.f32 -0.5, %v2480
  %v2856 = vadd.f32 %v2855, 1.0
  %v2857 = vmul.f32 %v2856, %v2480
  %v2858 = vand.u32 2147483647, %v2480
  %vm2859 = vcmp.lt.f32.partialorder %v2858, 0.0004427343
  %v2860 = vsel %vm2859, %v2857, %v2854
  %v2861 = vadd.f32 %v2482, 1.0
  %v2862 = vlog2.pop %v2861
  %v2863 = vmul.f32 %v2862, 0.6931472
  %v2864 = vmul.f32 -0.5, %v2482
  %v2865 = vadd.f32 %v2864, 1.0
  %v2866 = vmul.f32 %v2865, %v2482
  %v2867 = vand.u32 2147483647, %v2482
  %vm2868 = vcmp.lt.f32.partialorder %v2867, 0.0004427343
  %v2869 = vsel %vm2868, %v2866, %v2863
  %v2870 = vadd.f32 %v2484, 1.0
  %v2871 = vlog2.pop %v2870
  %v2872 = vmul.f32 %v2871, 0.6931472
  %v2873 = vmul.f32 -0.5, %v2484
  %v2874 = vadd.f32 %v2873, 1.0
  %v2875 = vmul.f32 %v2874, %v2484
  %v2876 = vand.u32 2147483647, %v2484
  %vm2877 = vcmp.lt.f32.partialorder %v2876, 0.0004427343
  %v2878 = vsel %vm2877, %v2875, %v2872
  %v2879 = vadd.f32 %v2486, 1.0
  %v2880 = vlog2.pop %v2879
  %v2881 = vmul.f32 %v2880, 0.6931472
  %v2882 = vmul.f32 -0.5, %v2486
  %v2883 = vadd.f32 %v2882, 1.0
  %v2884 = vmul.f32 %v2883, %v2486
  %v2885 = vand.u32 2147483647, %v2486
  %vm2886 = vcmp.lt.f32.partialorder %v2885, 0.0004427343
  %v2887 = vsel %vm2886, %v2884, %v2881
  %v2888 = vadd.f32 %v2488, 1.0
  %v2889 = vlog2.pop %v2888
  %v2890 = vmul.f32 %v2889, 0.6931472
  %v2891 = vmul.f32 -0.5, %v2488
  %v2892 = vadd.f32 %v2891, 1.0
  %v2893 = vmul.f32 %v2892, %v2488
  %v2894 = vand.u32 2147483647, %v2488
  %vm2895 = vcmp.lt.f32.partialorder %v2894, 0.0004427343
  %v2896 = vsel %vm2895, %v2893, %v2890
  %v2897 = vadd.f32 %v2490, 1.0
  %v2898 = vlog2.pop %v2897
  %v2899 = vmul.f32 %v2898, 0.6931472
  %v2900 = vmul.f32 -0.5, %v2490
  %v2901 = vadd.f32 %v2900, 1.0
  %v2902 = vmul.f32 %v2901, %v2490
  %v2903 = vand.u32 2147483647, %v2490
  %vm2904 = vcmp.lt.f32.partialorder %v2903, 0.0004427343
  %v2905 = vsel %vm2904, %v2902, %v2899
  %v2906 = vadd.f32 %v2492, 1.0
  %v2907 = vlog2.pop %v2906
  %v2908 = vmul.f32 %v2907, 0.6931472
  %v2909 = vmul.f32 -0.5, %v2492
  %v2910 = vadd.f32 %v2909, 1.0
  %v2911 = vmul.f32 %v2910, %v2492
  %v2912 = vand.u32 2147483647, %v2492
  %vm2913 = vcmp.lt.f32.partialorder %v2912, 0.0004427343
  %v2914 = vsel %vm2913, %v2911, %v2908
  %v2915 = vadd.f32 %v2494, 1.0
  %v2916 = vlog2.pop %v2915
  %v2917 = vmul.f32 %v2916, 0.6931472
  %v2918 = vmul.f32 -0.5, %v2494
  %v2919 = vadd.f32 %v2918, 1.0
  %v2920 = vmul.f32 %v2919, %v2494
  %v2921 = vand.u32 2147483647, %v2494
  %vm2922 = vcmp.lt.f32.partialorder %v2921, 0.0004427343
  %v2923 = vsel %vm2922, %v2920, %v2917
  %v2924 = vadd.f32 %v2496, 1.0
  %v2925 = vlog2.pop %v2924
  %v2926 = vmul.f32 %v2925, 0.6931472
  %v2927 = vmul.f32 -0.5, %v2496
  %v2928 = vadd.f32 %v2927, 1.0
  %v2929 = vmul.f32 %v2928, %v2496
  %v2930 = vand.u32 2147483647, %v2496
  %vm2931 = vcmp.lt.f32.partialorder %v2930, 0.0004427343
  %v2932 = vsel %vm2931, %v2929, %v2926
  %v2933 = vadd.f32 %v2498, 1.0
  %v2934 = vlog2.pop %v2933
  %v2935 = vmul.f32 %v2934, 0.6931472
  %v2936 = vmul.f32 -0.5, %v2498
  %v2937 = vadd.f32 %v2936, 1.0
  %v2938 = vmul.f32 %v2937, %v2498
  %v2939 = vand.u32 2147483647, %v2498
  %vm2940 = vcmp.lt.f32.partialorder %v2939, 0.0004427343
  %v2941 = vsel %vm2940, %v2938, %v2935
  %v2942 = vadd.f32 %v2500, 1.0
  %v2943 = vlog2.pop %v2942
  %v2944 = vmul.f32 %v2943, 0.6931472
  %v2945 = vmul.f32 -0.5, %v2500
  %v2946 = vadd.f32 %v2945, 1.0
  %v2947 = vmul.f32 %v2946, %v2500
  %v2948 = vand.u32 2147483647, %v2500
  %vm2949 = vcmp.lt.f32.partialorder %v2948, 0.0004427343
  %v2950 = vsel %vm2949, %v2947, %v2944
  %v2951 = vadd.f32 %v2502, 1.0
  %v2952 = vlog2.pop %v2951
  %v2953 = vmul.f32 %v2952, 0.6931472
  %v2954 = vmul.f32 -0.5, %v2502
  %v2955 = vadd.f32 %v2954, 1.0
  %v2956 = vmul.f32 %v2955, %v2502
  %v2957 = vand.u32 2147483647, %v2502
  %vm2958 = vcmp.lt.f32.partialorder %v2957, 0.0004427343
  %v2959 = vsel %vm2958, %v2956, %v2953
  %v2960 = vadd.f32 %v2504, 1.0
  %v2961 = vlog2.pop %v2960
  %v2962 = vmul.f32 %v2961, 0.6931472
  %v2963 = vmul.f32 -0.5, %v2504
  %v2964 = vadd.f32 %v2963, 1.0
  %v2965 = vmul.f32 %v2964, %v2504
  %v2966 = vand.u32 2147483647, %v2504
  %vm2967 = vcmp.lt.f32.partialorder %v2966, 0.0004427343
  %v2968 = vsel %vm2967, %v2965, %v2962
  %v2969 = vadd.f32 %v2506, 1.0
  %v2970 = vlog2.pop %v2969
  %v2971 = vmul.f32 %v2970, 0.6931472
  %v2972 = vmul.f32 -0.5, %v2506
  %v2973 = vadd.f32 %v2972, 1.0
  %v2974 = vmul.f32 %v2973, %v2506
  %v2975 = vand.u32 2147483647, %v2506
  %vm2976 = vcmp.lt.f32.partialorder %v2975, 0.0004427343
  %v2977 = vsel %vm2976, %v2974, %v2971
  %v2978 = vadd.f32 %v2508, 1.0
  %v2979 = vlog2.pop %v2978
  %v2980 = vmul.f32 %v2979, 0.6931472
  %v2981 = vmul.f32 -0.5, %v2508
  %v2982 = vadd.f32 %v2981, 1.0
  %v2983 = vmul.f32 %v2982, %v2508
  %v2984 = vand.u32 2147483647, %v2508
  %vm2985 = vcmp.lt.f32.partialorder %v2984, 0.0004427343
  %v2986 = vsel %vm2985, %v2983, %v2980
  %v2987 = vadd.f32 %v2510, 1.0
  %v2988 = vlog2.pop %v2987
  %v2989 = vmul.f32 %v2988, 0.6931472
  %v2990 = vmul.f32 -0.5, %v2510
  %v2991 = vadd.f32 %v2990, 1.0
  %v2992 = vmul.f32 %v2991, %v2510
  %v2993 = vand.u32 2147483647, %v2510
  %vm2994 = vcmp.lt.f32.partialorder %v2993, 0.0004427343
  %v2995 = vsel %vm2994, %v2992, %v2989
  %v2996 = vadd.f32 %v2512, 1.0
  %v2997 = vlog2.pop %v2996
  %v2998 = vmul.f32 %v2997, 0.6931472
  %v2999 = vmul.f32 -0.5, %v2512
  %v3000 = vadd.f32 %v2999, 1.0
  %v3001 = vmul.f32 %v3000, %v2512
  %v3002 = vand.u32 2147483647, %v2512
  %vm3003 = vcmp.lt.f32.partialorder %v3002, 0.0004427343
  %v3004 = vsel %vm3003, %v3001, %v2998
  %v3005 = vadd.f32 %v2514, 1.0
  %v3006 = vlog2.pop %v3005
  %v3007 = vmul.f32 %v3006, 0.6931472
  %v3008 = vmul.f32 -0.5, %v2514
  %v3009 = vadd.f32 %v3008, 1.0
  %v3010 = vmul.f32 %v3009, %v2514
  %v3011 = vand.u32 2147483647, %v2514
  %vm3012 = vcmp.lt.f32.partialorder %v3011, 0.0004427343
  %v3013 = vsel %vm3012, %v3010, %v3007
  %v3014 = vadd.f32 %v2516, 1.0
  %v3015 = vlog2.pop %v3014
  %v3016 = vmul.f32 %v3015, 0.6931472
  %v3017 = vmul.f32 -0.5, %v2516
  %v3018 = vadd.f32 %v3017, 1.0
  %v3019 = vmul.f32 %v3018, %v2516
  %v3020 = vand.u32 2147483647, %v2516
  %vm3021 = vcmp.lt.f32.partialorder %v3020, 0.0004427343
  %v3022 = vsel %vm3021, %v3019, %v3016
  %v3023 = vadd.f32 %v2518, 1.0
  %v3024 = vlog2.pop %v3023
  %v3025 = vmul.f32 %v3024, 0.6931472
  %v3026 = vmul.f32 -0.5, %v2518
  %v3027 = vadd.f32 %v3026, 1.0
  %v3028 = vmul.f32 %v3027, %v2518
  %v3029 = vand.u32 2147483647, %v2518
  %vm3030 = vcmp.lt.f32.partialorder %v3029, 0.0004427343
  %v3031 = vsel %vm3030, %v3028, %v3025
  %v3032 = vadd.f32 %v2520, 1.0
  %v3033 = vlog2.pop %v3032
  %v3034 = vmul.f32 %v3033, 0.6931472
  %v3035 = vmul.f32 -0.5, %v2520
  %v3036 = vadd.f32 %v3035, 1.0
  %v3037 = vmul.f32 %v3036, %v2520
  %v3038 = vand.u32 2147483647, %v2520
  %vm3039 = vcmp.lt.f32.partialorder %v3038, 0.0004427343
  %v3040 = vsel %vm3039, %v3037, %v3034
  %v3041 = vadd.f32 %v2522, 1.0
  %v3042 = vlog2.pop %v3041
  %v3043 = vmul.f32 %v3042, 0.6931472
  %v3044 = vmul.f32 -0.5, %v2522
  %v3045 = vadd.f32 %v3044, 1.0
  %v3046 = vmul.f32 %v3045, %v2522
  %v3047 = vand.u32 2147483647, %v2522
  %vm3048 = vcmp.lt.f32.partialorder %v3047, 0.0004427343
  %v3049 = vsel %vm3048, %v3046, %v3043
  %v3050 = vadd.f32 %v2524, 1.0
  %v3051 = vlog2.pop %v3050
  %v3052 = vmul.f32 %v3051, 0.6931472
  %v3053 = vmul.f32 -0.5, %v2524
  %v3054 = vadd.f32 %v3053, 1.0
  %v3055 = vmul.f32 %v3054, %v2524
  %v3056 = vand.u32 2147483647, %v2524
  %vm3057 = vcmp.lt.f32.partialorder %v3056, 0.0004427343
  %v3058 = vsel %vm3057, %v3055, %v3052
  %v3059 = vadd.f32 %v2526, 1.0
  %v3060 = vlog2.pop %v3059
  %v3061 = vmul.f32 %v3060, 0.6931472
  %v3062 = vmul.f32 -0.5, %v2526
  %v3063 = vadd.f32 %v3062, 1.0
  %v3064 = vmul.f32 %v3063, %v2526
  %v3065 = vand.u32 2147483647, %v2526
  %vm3066 = vcmp.lt.f32.partialorder %v3065, 0.0004427343
  %v3067 = vsel %vm3066, %v3064, %v3061
  %v3068 = vadd.f32 %v2528, 1.0
  %v3069 = vlog2.pop %v3068
  %v3070 = vmul.f32 %v3069, 0.6931472
  %v3071 = vmul.f32 -0.5, %v2528
  %v3072 = vadd.f32 %v3071, 1.0
  %v3073 = vmul.f32 %v3072, %v2528
  %v3074 = vand.u32 2147483647, %v2528
  %vm3075 = vcmp.lt.f32.partialorder %v3074, 0.0004427343
  %v3076 = vsel %vm3075, %v3073, %v3070
  %v3077 = vadd.f32 %v2530, 1.0
  %v3078 = vlog2.pop %v3077
  %v3079 = vmul.f32 %v3078, 0.6931472
  %v3080 = vmul.f32 -0.5, %v2530
  %v3081 = vadd.f32 %v3080, 1.0
  %v3082 = vmul.f32 %v3081, %v2530
  %v3083 = vand.u32 2147483647, %v2530
  %vm3084 = vcmp.lt.f32.partialorder %v3083, 0.0004427343
  %v3085 = vsel %vm3084, %v3082, %v3079
  %v3086 = vadd.f32 %v2532, 1.0
  %v3087 = vlog2.pop %v3086
  %v3088 = vmul.f32 %v3087, 0.6931472
  %v3089 = vmul.f32 -0.5, %v2532
  %v3090 = vadd.f32 %v3089, 1.0
  %v3091 = vmul.f32 %v3090, %v2532
  %v3092 = vand.u32 2147483647, %v2532
  %vm3093 = vcmp.lt.f32.partialorder %v3092, 0.0004427343
  %v3094 = vsel %vm3093, %v3091, %v3088
  %v3095 = vadd.f32 %v2534, 1.0
  %v3096 = vlog2.pop %v3095
  %v3097 = vmul.f32 %v3096, 0.6931472
  %v3098 = vmul.f32 -0.5, %v2534
  %v3099 = vadd.f32 %v3098, 1.0
  %v3100 = vmul.f32 %v3099, %v2534
  %v3101 = vand.u32 2147483647, %v2534
  %vm3102 = vcmp.lt.f32.partialorder %v3101, 0.0004427343
  %v3103 = vsel %vm3102, %v3100, %v3097
  %v3104 = vadd.f32 %v2536, 1.0
  %v3105 = vlog2.pop %v3104
  %v3106 = vmul.f32 %v3105, 0.6931472
  %v3107 = vmul.f32 -0.5, %v2536
  %v3108 = vadd.f32 %v3107, 1.0
  %v3109 = vmul.f32 %v3108, %v2536
  %v3110 = vand.u32 2147483647, %v2536
  %vm3111 = vcmp.lt.f32.partialorder %v3110, 0.0004427343
  %v3112 = vsel %vm3111, %v3109, %v3106
  %v3113 = vadd.f32 %v2217, %v2545
  %v3114 = vadd.f32 %v2218, %v2554
  %v3115 = vadd.f32 %v2219, %v2563
  %v3116 = vadd.f32 %v2220, %v2572
  %v3117 = vadd.f32 %v2221, %v2581
  %v3118 = vadd.f32 %v2222, %v2590
  %v3119 = vadd.f32 %v2223, %v2599
  %v3120 = vadd.f32 %v2224, %v2608
  %v3121 = vadd.f32 %v2225, %v2617
  %v3122 = vadd.f32 %v2226, %v2626
  %v3123 = vadd.f32 %v2227, %v2635
  %v3124 = vadd.f32 %v2228, %v2644
  %v3125 = vadd.f32 %v2229, %v2653
  %v3126 = vadd.f32 %v2230, %v2662
  %v3127 = vadd.f32 %v2231, %v2671
  %v3128 = vadd.f32 %v2232, %v2680
  %v3129 = vadd.f32 %v2233, %v2689
  %v3130 = vadd.f32 %v2234, %v2698
  %v3131 = vadd.f32 %v2235, %v2707
  %v3132 = vadd.f32 %v2236, %v2716
  %v3133 = vadd.f32 %v2237, %v2725
  %v3134 = vadd.f32 %v2238, %v2734
  %v3135 = vadd.f32 %v2239, %v2743
  %v3136 = vadd.f32 %v2240, %v2752
  %v3137 = vadd.f32 %v2241, %v2761
  %v3138 = vadd.f32 %v2242, %v2770
  %v3139 = vadd.f32 %v2243, %v2779
  %v3140 = vadd.f32 %v2244, %v2788
  %v3141 = vadd.f32 %v2245, %v2797
  %v3142 = vadd.f32 %v2246, %v2806
  %v3143 = vadd.f32 %v2247, %v2815
  %v3144 = vadd.f32 %v2248, %v2824
  %v3145 = vadd.f32 %v2249, %v2833
  %v3146 = vadd.f32 %v2250, %v2842
  %v3147 = vadd.f32 %v2251, %v2851
  %v3148 = vadd.f32 %v2252, %v2860
  %v3149 = vadd.f32 %v2253, %v2869
  %v3150 = vadd.f32 %v2254, %v2878
  %v3151 = vadd.f32 %v2255, %v2887
  %v3152 = vadd.f32 %v2256, %v2896
  %v3153 = vadd.f32 %v2257, %v2905
  %v3154 = vadd.f32 %v2258, %v2914
  %v3155 = vadd.f32 %v2259, %v2923
  %v3156 = vadd.f32 %v2260, %v2932
  %v3157 = vadd.f32 %v2261, %v2941
  %v3158 = vadd.f32 %v2262, %v2950
  %v3159 = vadd.f32 %v2263, %v2959
  %v3160 = vadd.f32 %v2264, %v2968
  %v3161 = vadd.f32 %v2265, %v2977
  %v3162 = vadd.f32 %v2266, %v2986
  %v3163 = vadd.f32 %v2267, %v2995
  %v3164 = vadd.f32 %v2268, %v3004
  %v3165 = vadd.f32 %v2269, %v3013
  %v3166 = vadd.f32 %v2270, %v3022
  %v3167 = vadd.f32 %v2271, %v3031
  %v3168 = vadd.f32 %v2272, %v3040
  %v3169 = vadd.f32 %v2273, %v3049
  %v3170 = vadd.f32 %v2274, %v3058
  %v3171 = vadd.f32 %v2275, %v3067
  %v3172 = vadd.f32 %v2276, %v3076
  %v3173 = vadd.f32 %v2277, %v3085
  %v3174 = vadd.f32 %v2278, %v3094
  %v3175 = vadd.f32 %v2279, %v3103
  %v3176 = vadd.f32 %v2280, %v3112
  %v3177 = vsub.f32 0.0, %v3113
  %v3178 = vsub.f32 0.0, %v3114
  %v3179 = vsub.f32 0.0, %v3115
  %v3180 = vsub.f32 0.0, %v3116
  %v3181 = vsub.f32 0.0, %v3117
  %v3182 = vsub.f32 0.0, %v3118
  %v3183 = vsub.f32 0.0, %v3119
  %v3184 = vsub.f32 0.0, %v3120
  %v3185 = vsub.f32 0.0, %v3121
  %v3186 = vsub.f32 0.0, %v3122
  %v3187 = vsub.f32 0.0, %v3123
  %v3188 = vsub.f32 0.0, %v3124
  %v3189 = vsub.f32 0.0, %v3125
  %v3190 = vsub.f32 0.0, %v3126
  %v3191 = vsub.f32 0.0, %v3127
  %v3192 = vsub.f32 0.0, %v3128
  %v3193 = vsub.f32 0.0, %v3129
  %v3194 = vsub.f32 0.0, %v3130
  %v3195 = vsub.f32 0.0, %v3131
  %v3196 = vsub.f32 0.0, %v3132
  %v3197 = vsub.f32 0.0, %v3133
  %v3198 = vsub.f32 0.0, %v3134
  %v3199 = vsub.f32 0.0, %v3135
  %v3200 = vsub.f32 0.0, %v3136
  %v3201 = vsub.f32 0.0, %v3137
  %v3202 = vsub.f32 0.0, %v3138
  %v3203 = vsub.f32 0.0, %v3139
  %v3204 = vsub.f32 0.0, %v3140
  %v3205 = vsub.f32 0.0, %v3141
  %v3206 = vsub.f32 0.0, %v3142
  %v3207 = vsub.f32 0.0, %v3143
  %v3208 = vsub.f32 0.0, %v3144
  %v3209 = vsub.f32 0.0, %v3145
  %v3210 = vsub.f32 0.0, %v3146
  %v3211 = vsub.f32 0.0, %v3147
  %v3212 = vsub.f32 0.0, %v3148
  %v3213 = vsub.f32 0.0, %v3149
  %v3214 = vsub.f32 0.0, %v3150
  %v3215 = vsub.f32 0.0, %v3151
  %v3216 = vsub.f32 0.0, %v3152
  %v3217 = vsub.f32 0.0, %v3153
  %v3218 = vsub.f32 0.0, %v3154
  %v3219 = vsub.f32 0.0, %v3155
  %v3220 = vsub.f32 0.0, %v3156
  %v3221 = vsub.f32 0.0, %v3157
  %v3222 = vsub.f32 0.0, %v3158
  %v3223 = vsub.f32 0.0, %v3159
  %v3224 = vsub.f32 0.0, %v3160
  %v3225 = vsub.f32 0.0, %v3161
  %v3226 = vsub.f32 0.0, %v3162
  %v3227 = vsub.f32 0.0, %v3163
  %v3228 = vsub.f32 0.0, %v3164
  %v3229 = vsub.f32 0.0, %v3165
  %v3230 = vsub.f32 0.0, %v3166
  %v3231 = vsub.f32 0.0, %v3167
  %v3232 = vsub.f32 0.0, %v3168
  %v3233 = vsub.f32 0.0, %v3169
  %v3234 = vsub.f32 0.0, %v3170
  %v3235 = vsub.f32 0.0, %v3171
  %v3236 = vsub.f32 0.0, %v3172
  %v3237 = vsub.f32 0.0, %v3173
  %v3238 = vsub.f32 0.0, %v3174
  %v3239 = vsub.f32 0.0, %v3175
  %v3240 = vsub.f32 0.0, %v3176
  %v3241 = vlaneseq
  %v3242 = vand.u32 %v3241, 127
  %vm3243 = vcmp.eq.s32.totalorder %v3242, 0
  %3245 = vset.pattern.permute.xlu0 0
  %3246 = vperm.xlu0 %3245, %v1899
  %v3247 = vpop.permute.xlu0 %3246
  %3250 = vset.pattern.permute.xlu0 0
  %3251 = vperm.xlu0 %3250, %v1904
  %v3252 = vpop.permute.xlu0 %3251
  %3255 = vset.pattern.permute.xlu0 0
  %3256 = vperm.xlu0 %3255, %v1909
  %v3257 = vpop.permute.xlu0 %3256
  %3260 = vset.pattern.permute.xlu0 0
  %3261 = vperm.xlu0 %3260, %v1914
  %v3262 = vpop.permute.xlu0 %3261
  %3265 = vset.pattern.permute.xlu0 0
  %3266 = vperm.xlu0 %3265, %v1919
  %v3267 = vpop.permute.xlu0 %3266
  %3270 = vset.pattern.permute.xlu0 0
  %3271 = vperm.xlu0 %3270, %v1924
  %v3272 = vpop.permute.xlu0 %3271
  %3275 = vset.pattern.permute.xlu0 0
  %3276 = vperm.xlu0 %3275, %v1929
  %v3277 = vpop.permute.xlu0 %3276
  %3280 = vset.pattern.permute.xlu0 0
  %3281 = vperm.xlu0 %3280, %v1934
  %v3282 = vpop.permute.xlu0 %3281
  %3285 = vset.pattern.permute.xlu0 0
  %3286 = vperm.xlu0 %3285, %v1939
  %v3287 = vpop.permute.xlu0 %3286
  %3290 = vset.pattern.permute.xlu0 0
  %3291 = vperm.xlu0 %3290, %v1944
  %v3292 = vpop.permute.xlu0 %3291
  %3295 = vset.pattern.permute.xlu0 0
  %3296 = vperm.xlu0 %3295, %v1949
  %v3297 = vpop.permute.xlu0 %3296
  %3300 = vset.pattern.permute.xlu0 0
  %3301 = vperm.xlu0 %3300, %v1954
  %v3302 = vpop.permute.xlu0 %3301
  %3305 = vset.pattern.permute.xlu0 0
  %3306 = vperm.xlu0 %3305, %v1959
  %v3307 = vpop.permute.xlu0 %3306
  %3310 = vset.pattern.permute.xlu0 0
  %3311 = vperm.xlu0 %3310, %v1964
  %v3312 = vpop.permute.xlu0 %3311
  %3315 = vset.pattern.permute.xlu0 0
  %3316 = vperm.xlu0 %3315, %v1969
  %v3317 = vpop.permute.xlu0 %3316
  %3320 = vset.pattern.permute.xlu0 0
  %3321 = vperm.xlu0 %3320, %v1974
  %v3322 = vpop.permute.xlu0 %3321
  %3325 = vset.pattern.permute.xlu0 0
  %3326 = vperm.xlu0 %3325, %v1979
  %v3327 = vpop.permute.xlu0 %3326
  %3330 = vset.pattern.permute.xlu0 0
  %3331 = vperm.xlu0 %3330, %v1984
  %v3332 = vpop.permute.xlu0 %3331
  %3335 = vset.pattern.permute.xlu0 0
  %3336 = vperm.xlu0 %3335, %v1989
  %v3337 = vpop.permute.xlu0 %3336
  %3340 = vset.pattern.permute.xlu0 0
  %3341 = vperm.xlu0 %3340, %v1994
  %v3342 = vpop.permute.xlu0 %3341
  %3345 = vset.pattern.permute.xlu0 0
  %3346 = vperm.xlu0 %3345, %v1999
  %v3347 = vpop.permute.xlu0 %3346
  %3350 = vset.pattern.permute.xlu0 0
  %3351 = vperm.xlu0 %3350, %v2004
  %v3352 = vpop.permute.xlu0 %3351
  %3355 = vset.pattern.permute.xlu0 0
  %3356 = vperm.xlu0 %3355, %v2009
  %v3357 = vpop.permute.xlu0 %3356
  %3360 = vset.pattern.permute.xlu0 0
  %3361 = vperm.xlu0 %3360, %v2014
  %v3362 = vpop.permute.xlu0 %3361
  %3365 = vset.pattern.permute.xlu0 0
  %3366 = vperm.xlu0 %3365, %v2019
  %v3367 = vpop.permute.xlu0 %3366
  %3370 = vset.pattern.permute.xlu0 0
  %3371 = vperm.xlu0 %3370, %v2024
  %v3372 = vpop.permute.xlu0 %3371
  %3375 = vset.pattern.permute.xlu0 0
  %3376 = vperm.xlu0 %3375, %v2029
  %v3377 = vpop.permute.xlu0 %3376
  %3380 = vset.pattern.permute.xlu0 0
  %3381 = vperm.xlu0 %3380, %v2034
  %v3382 = vpop.permute.xlu0 %3381
  %3385 = vset.pattern.permute.xlu0 0
  %3386 = vperm.xlu0 %3385, %v2039
  %v3387 = vpop.permute.xlu0 %3386
  %3390 = vset.pattern.permute.xlu0 0
  %3391 = vperm.xlu0 %3390, %v2044
  %v3392 = vpop.permute.xlu0 %3391
  %3395 = vset.pattern.permute.xlu0 0
  %3396 = vperm.xlu0 %3395, %v2049
  %v3397 = vpop.permute.xlu0 %3396
  %3400 = vset.pattern.permute.xlu0 0
  %3401 = vperm.xlu0 %3400, %v2054
  %v3402 = vpop.permute.xlu0 %3401
  %3405 = vset.pattern.permute.xlu0 0
  %3406 = vperm.xlu0 %3405, %v2059
  %v3407 = vpop.permute.xlu0 %3406
  %3410 = vset.pattern.permute.xlu0 0
  %3411 = vperm.xlu0 %3410, %v2064
  %v3412 = vpop.permute.xlu0 %3411
  %3415 = vset.pattern.permute.xlu0 0
  %3416 = vperm.xlu0 %3415, %v2069
  %v3417 = vpop.permute.xlu0 %3416
  %3420 = vset.pattern.permute.xlu0 0
  %3421 = vperm.xlu0 %3420, %v2074
  %v3422 = vpop.permute.xlu0 %3421
  %3425 = vset.pattern.permute.xlu0 0
  %3426 = vperm.xlu0 %3425, %v2079
  %v3427 = vpop.permute.xlu0 %3426
  %3430 = vset.pattern.permute.xlu0 0
  %3431 = vperm.xlu0 %3430, %v2084
  %v3432 = vpop.permute.xlu0 %3431
  %3435 = vset.pattern.permute.xlu0 0
  %3436 = vperm.xlu0 %3435, %v2089
  %v3437 = vpop.permute.xlu0 %3436
  %3440 = vset.pattern.permute.xlu0 0
  %3441 = vperm.xlu0 %3440, %v2094
  %v3442 = vpop.permute.xlu0 %3441
  %3445 = vset.pattern.permute.xlu0 0
  %3446 = vperm.xlu0 %3445, %v2099
  %v3447 = vpop.permute.xlu0 %3446
  %3450 = vset.pattern.permute.xlu0 0
  %3451 = vperm.xlu0 %3450, %v2104
  %v3452 = vpop.permute.xlu0 %3451
  %3455 = vset.pattern.permute.xlu0 0
  %3456 = vperm.xlu0 %3455, %v2109
  %v3457 = vpop.permute.xlu0 %3456
  %3460 = vset.pattern.permute.xlu0 0
  %3461 = vperm.xlu0 %3460, %v2114
  %v3462 = vpop.permute.xlu0 %3461
  %3465 = vset.pattern.permute.xlu0 0
  %3466 = vperm.xlu0 %3465, %v2119
  %v3467 = vpop.permute.xlu0 %3466
  %3470 = vset.pattern.permute.xlu0 0
  %3471 = vperm.xlu0 %3470, %v2124
  %v3472 = vpop.permute.xlu0 %3471
  %3475 = vset.pattern.permute.xlu0 0
  %3476 = vperm.xlu0 %3475, %v2129
  %v3477 = vpop.permute.xlu0 %3476
  %3480 = vset.pattern.permute.xlu0 0
  %3481 = vperm.xlu0 %3480, %v2134
  %v3482 = vpop.permute.xlu0 %3481
  %3485 = vset.pattern.permute.xlu0 0
  %3486 = vperm.xlu0 %3485, %v2139
  %v3487 = vpop.permute.xlu0 %3486
  %3490 = vset.pattern.permute.xlu0 0
  %3491 = vperm.xlu0 %3490, %v2144
  %v3492 = vpop.permute.xlu0 %3491
  %3495 = vset.pattern.permute.xlu0 0
  %3496 = vperm.xlu0 %3495, %v2149
  %v3497 = vpop.permute.xlu0 %3496
  %3500 = vset.pattern.permute.xlu0 0
  %3501 = vperm.xlu0 %3500, %v2154
  %v3502 = vpop.permute.xlu0 %3501
  %3505 = vset.pattern.permute.xlu0 0
  %3506 = vperm.xlu0 %3505, %v2159
  %v3507 = vpop.permute.xlu0 %3506
  %3510 = vset.pattern.permute.xlu0 0
  %3511 = vperm.xlu0 %3510, %v2164
  %v3512 = vpop.permute.xlu0 %3511
  %3515 = vset.pattern.permute.xlu0 0
  %3516 = vperm.xlu0 %3515, %v2169
  %v3517 = vpop.permute.xlu0 %3516
  %3520 = vset.pattern.permute.xlu0 0
  %3521 = vperm.xlu0 %3520, %v2174
  %v3522 = vpop.permute.xlu0 %3521
  %3525 = vset.pattern.permute.xlu0 0
  %3526 = vperm.xlu0 %3525, %v2179
  %v3527 = vpop.permute.xlu0 %3526
  %3530 = vset.pattern.permute.xlu0 0
  %3531 = vperm.xlu0 %3530, %v2184
  %v3532 = vpop.permute.xlu0 %3531
  %3535 = vset.pattern.permute.xlu0 0
  %3536 = vperm.xlu0 %3535, %v2189
  %v3537 = vpop.permute.xlu0 %3536
  %3540 = vset.pattern.permute.xlu0 0
  %3541 = vperm.xlu0 %3540, %v2194
  %v3542 = vpop.permute.xlu0 %3541
  %3545 = vset.pattern.permute.xlu0 0
  %3546 = vperm.xlu0 %3545, %v2199
  %v3547 = vpop.permute.xlu0 %3546
  %3550 = vset.pattern.permute.xlu0 0
  %3551 = vperm.xlu0 %3550, %v2204
  %v3552 = vpop.permute.xlu0 %3551
  %3555 = vset.pattern.permute.xlu0 0
  %3556 = vperm.xlu0 %3555, %v2209
  %v3557 = vpop.permute.xlu0 %3556
  %3560 = vset.pattern.permute.xlu0 0
  %3561 = vperm.xlu0 %3560, %v2214
  %v3562 = vpop.permute.xlu0 %3561
  %v3564 = vsel %vm3243, %v3247, 0.0
  %v3565 = vsel %vm3243, %v3252, 0.0
  %v3566 = vsel %vm3243, %v3257, 0.0
  %v3567 = vsel %vm3243, %v3262, 0.0
  %v3568 = vsel %vm3243, %v3267, 0.0
  %v3569 = vsel %vm3243, %v3272, 0.0
  %v3570 = vsel %vm3243, %v3277, 0.0
  %v3571 = vsel %vm3243, %v3282, 0.0
  %v3572 = vsel %vm3243, %v3287, 0.0
  %v3573 = vsel %vm3243, %v3292, 0.0
  %v3574 = vsel %vm3243, %v3297, 0.0
  %v3575 = vsel %vm3243, %v3302, 0.0
  %v3576 = vsel %vm3243, %v3307, 0.0
  %v3577 = vsel %vm3243, %v3312, 0.0
  %v3578 = vsel %vm3243, %v3317, 0.0
  %v3579 = vsel %vm3243, %v3322, 0.0
  %v3580 = vsel %vm3243, %v3327, 0.0
  %v3581 = vsel %vm3243, %v3332, 0.0
  %v3582 = vsel %vm3243, %v3337, 0.0
  %v3583 = vsel %vm3243, %v3342, 0.0
  %v3584 = vsel %vm3243, %v3347, 0.0
  %v3585 = vsel %vm3243, %v3352, 0.0
  %v3586 = vsel %vm3243, %v3357, 0.0
  %v3587 = vsel %vm3243, %v3362, 0.0
  %v3588 = vsel %vm3243, %v3367, 0.0
  %v3589 = vsel %vm3243, %v3372, 0.0
  %v3590 = vsel %vm3243, %v3377, 0.0
  %v3591 = vsel %vm3243, %v3382, 0.0
  %v3592 = vsel %vm3243, %v3387, 0.0
  %v3593 = vsel %vm3243, %v3392, 0.0
  %v3594 = vsel %vm3243, %v3397, 0.0
  %v3595 = vsel %vm3243, %v3402, 0.0
  %v3596 = vsel %vm3243, %v3407, 0.0
  %v3597 = vsel %vm3243, %v3412, 0.0
  %v3598 = vsel %vm3243, %v3417, 0.0
  %v3599 = vsel %vm3243, %v3422, 0.0
  %v3600 = vsel %vm3243, %v3427, 0.0
  %v3601 = vsel %vm3243, %v3432, 0.0
  %v3602 = vsel %vm3243, %v3437, 0.0
  %v3603 = vsel %vm3243, %v3442, 0.0
  %v3604 = vsel %vm3243, %v3447, 0.0
  %v3605 = vsel %vm3243, %v3452, 0.0
  %v3606 = vsel %vm3243, %v3457, 0.0
  %v3607 = vsel %vm3243, %v3462, 0.0
  %v3608 = vsel %vm3243, %v3467, 0.0
  %v3609 = vsel %vm3243, %v3472, 0.0
  %v3610 = vsel %vm3243, %v3477, 0.0
  %v3611 = vsel %vm3243, %v3482, 0.0
  %v3612 = vsel %vm3243, %v3487, 0.0
  %v3613 = vsel %vm3243, %v3492, 0.0
  %v3614 = vsel %vm3243, %v3497, 0.0
  %v3615 = vsel %vm3243, %v3502, 0.0
  %v3616 = vsel %vm3243, %v3507, 0.0
  %v3617 = vsel %vm3243, %v3512, 0.0
  %v3618 = vsel %vm3243, %v3517, 0.0
  %v3619 = vsel %vm3243, %v3522, 0.0
  %v3620 = vsel %vm3243, %v3527, 0.0
  %v3621 = vsel %vm3243, %v3532, 0.0
  %v3622 = vsel %vm3243, %v3537, 0.0
  %v3623 = vsel %vm3243, %v3542, 0.0
  %v3624 = vsel %vm3243, %v3547, 0.0
  %v3625 = vsel %vm3243, %v3552, 0.0
  %v3626 = vsel %vm3243, %v3557, 0.0
  %v3627 = vsel %vm3243, %v3562, 0.0
  %3629 = vset.pattern.permute.xlu0 0
  %3630 = vperm.xlu0 %3629, %v3177
  %v3631 = vpop.permute.xlu0 %3630
  %3634 = vset.pattern.permute.xlu0 0
  %3635 = vperm.xlu0 %3634, %v3178
  %v3636 = vpop.permute.xlu0 %3635
  %3639 = vset.pattern.permute.xlu0 0
  %3640 = vperm.xlu0 %3639, %v3179
  %v3641 = vpop.permute.xlu0 %3640
  %3644 = vset.pattern.permute.xlu0 0
  %3645 = vperm.xlu0 %3644, %v3180
  %v3646 = vpop.permute.xlu0 %3645
  %3649 = vset.pattern.permute.xlu0 0
  %3650 = vperm.xlu0 %3649, %v3181
  %v3651 = vpop.permute.xlu0 %3650
  %3654 = vset.pattern.permute.xlu0 0
  %3655 = vperm.xlu0 %3654, %v3182
  %v3656 = vpop.permute.xlu0 %3655
  %3659 = vset.pattern.permute.xlu0 0
  %3660 = vperm.xlu0 %3659, %v3183
  %v3661 = vpop.permute.xlu0 %3660
  %3664 = vset.pattern.permute.xlu0 0
  %3665 = vperm.xlu0 %3664, %v3184
  %v3666 = vpop.permute.xlu0 %3665
  %3669 = vset.pattern.permute.xlu0 0
  %3670 = vperm.xlu0 %3669, %v3185
  %v3671 = vpop.permute.xlu0 %3670
  %3674 = vset.pattern.permute.xlu0 0
  %3675 = vperm.xlu0 %3674, %v3186
  %v3676 = vpop.permute.xlu0 %3675
  %3679 = vset.pattern.permute.xlu0 0
  %3680 = vperm.xlu0 %3679, %v3187
  %v3681 = vpop.permute.xlu0 %3680
  %3684 = vset.pattern.permute.xlu0 0
  %3685 = vperm.xlu0 %3684, %v3188
  %v3686 = vpop.permute.xlu0 %3685
  %3689 = vset.pattern.permute.xlu0 0
  %3690 = vperm.xlu0 %3689, %v3189
  %v3691 = vpop.permute.xlu0 %3690
  %3694 = vset.pattern.permute.xlu0 0
  %3695 = vperm.xlu0 %3694, %v3190
  %v3696 = vpop.permute.xlu0 %3695
  %3699 = vset.pattern.permute.xlu0 0
  %3700 = vperm.xlu0 %3699, %v3191
  %v3701 = vpop.permute.xlu0 %3700
  %3704 = vset.pattern.permute.xlu0 0
  %3705 = vperm.xlu0 %3704, %v3192
  %v3706 = vpop.permute.xlu0 %3705
  %3709 = vset.pattern.permute.xlu0 0
  %3710 = vperm.xlu0 %3709, %v3193
  %v3711 = vpop.permute.xlu0 %3710
  %3714 = vset.pattern.permute.xlu0 0
  %3715 = vperm.xlu0 %3714, %v3194
  %v3716 = vpop.permute.xlu0 %3715
  %3719 = vset.pattern.permute.xlu0 0
  %3720 = vperm.xlu0 %3719, %v3195
  %v3721 = vpop.permute.xlu0 %3720
  %3724 = vset.pattern.permute.xlu0 0
  %3725 = vperm.xlu0 %3724, %v3196
  %v3726 = vpop.permute.xlu0 %3725
  %3729 = vset.pattern.permute.xlu0 0
  %3730 = vperm.xlu0 %3729, %v3197
  %v3731 = vpop.permute.xlu0 %3730
  %3734 = vset.pattern.permute.xlu0 0
  %3735 = vperm.xlu0 %3734, %v3198
  %v3736 = vpop.permute.xlu0 %3735
  %3739 = vset.pattern.permute.xlu0 0
  %3740 = vperm.xlu0 %3739, %v3199
  %v3741 = vpop.permute.xlu0 %3740
  %3744 = vset.pattern.permute.xlu0 0
  %3745 = vperm.xlu0 %3744, %v3200
  %v3746 = vpop.permute.xlu0 %3745
  %3749 = vset.pattern.permute.xlu0 0
  %3750 = vperm.xlu0 %3749, %v3201
  %v3751 = vpop.permute.xlu0 %3750
  %3754 = vset.pattern.permute.xlu0 0
  %3755 = vperm.xlu0 %3754, %v3202
  %v3756 = vpop.permute.xlu0 %3755
  %3759 = vset.pattern.permute.xlu0 0
  %3760 = vperm.xlu0 %3759, %v3203
  %v3761 = vpop.permute.xlu0 %3760
  %3764 = vset.pattern.permute.xlu0 0
  %3765 = vperm.xlu0 %3764, %v3204
  %v3766 = vpop.permute.xlu0 %3765
  %3769 = vset.pattern.permute.xlu0 0
  %3770 = vperm.xlu0 %3769, %v3205
  %v3771 = vpop.permute.xlu0 %3770
  %3774 = vset.pattern.permute.xlu0 0
  %3775 = vperm.xlu0 %3774, %v3206
  %v3776 = vpop.permute.xlu0 %3775
  %3779 = vset.pattern.permute.xlu0 0
  %3780 = vperm.xlu0 %3779, %v3207
  %v3781 = vpop.permute.xlu0 %3780
  %3784 = vset.pattern.permute.xlu0 0
  %3785 = vperm.xlu0 %3784, %v3208
  %v3786 = vpop.permute.xlu0 %3785
  %3789 = vset.pattern.permute.xlu0 0
  %3790 = vperm.xlu0 %3789, %v3209
  %v3791 = vpop.permute.xlu0 %3790
  %3794 = vset.pattern.permute.xlu0 0
  %3795 = vperm.xlu0 %3794, %v3210
  %v3796 = vpop.permute.xlu0 %3795
  %3799 = vset.pattern.permute.xlu0 0
  %3800 = vperm.xlu0 %3799, %v3211
  %v3801 = vpop.permute.xlu0 %3800
  %3804 = vset.pattern.permute.xlu0 0
  %3805 = vperm.xlu0 %3804, %v3212
  %v3806 = vpop.permute.xlu0 %3805
  %3809 = vset.pattern.permute.xlu0 0
  %3810 = vperm.xlu0 %3809, %v3213
  %v3811 = vpop.permute.xlu0 %3810
  %3814 = vset.pattern.permute.xlu0 0
  %3815 = vperm.xlu0 %3814, %v3214
  %v3816 = vpop.permute.xlu0 %3815
  %3819 = vset.pattern.permute.xlu0 0
  %3820 = vperm.xlu0 %3819, %v3215
  %v3821 = vpop.permute.xlu0 %3820
  %3824 = vset.pattern.permute.xlu0 0
  %3825 = vperm.xlu0 %3824, %v3216
  %v3826 = vpop.permute.xlu0 %3825
  %3829 = vset.pattern.permute.xlu0 0
  %3830 = vperm.xlu0 %3829, %v3217
  %v3831 = vpop.permute.xlu0 %3830
  %3834 = vset.pattern.permute.xlu0 0
  %3835 = vperm.xlu0 %3834, %v3218
  %v3836 = vpop.permute.xlu0 %3835
  %3839 = vset.pattern.permute.xlu0 0
  %3840 = vperm.xlu0 %3839, %v3219
  %v3841 = vpop.permute.xlu0 %3840
  %3844 = vset.pattern.permute.xlu0 0
  %3845 = vperm.xlu0 %3844, %v3220
  %v3846 = vpop.permute.xlu0 %3845
  %3849 = vset.pattern.permute.xlu0 0
  %3850 = vperm.xlu0 %3849, %v3221
  %v3851 = vpop.permute.xlu0 %3850
  %3854 = vset.pattern.permute.xlu0 0
  %3855 = vperm.xlu0 %3854, %v3222
  %v3856 = vpop.permute.xlu0 %3855
  %3859 = vset.pattern.permute.xlu0 0
  %3860 = vperm.xlu0 %3859, %v3223
  %v3861 = vpop.permute.xlu0 %3860
  %3864 = vset.pattern.permute.xlu0 0
  %3865 = vperm.xlu0 %3864, %v3224
  %v3866 = vpop.permute.xlu0 %3865
  %3869 = vset.pattern.permute.xlu0 0
  %3870 = vperm.xlu0 %3869, %v3225
  %v3871 = vpop.permute.xlu0 %3870
  %3874 = vset.pattern.permute.xlu0 0
  %3875 = vperm.xlu0 %3874, %v3226
  %v3876 = vpop.permute.xlu0 %3875
  %3879 = vset.pattern.permute.xlu0 0
  %3880 = vperm.xlu0 %3879, %v3227
  %v3881 = vpop.permute.xlu0 %3880
  %3884 = vset.pattern.permute.xlu0 0
  %3885 = vperm.xlu0 %3884, %v3228
  %v3886 = vpop.permute.xlu0 %3885
  %3889 = vset.pattern.permute.xlu0 0
  %3890 = vperm.xlu0 %3889, %v3229
  %v3891 = vpop.permute.xlu0 %3890
  %3894 = vset.pattern.permute.xlu0 0
  %3895 = vperm.xlu0 %3894, %v3230
  %v3896 = vpop.permute.xlu0 %3895
  %3899 = vset.pattern.permute.xlu0 0
  %3900 = vperm.xlu0 %3899, %v3231
  %v3901 = vpop.permute.xlu0 %3900
  %3904 = vset.pattern.permute.xlu0 0
  %3905 = vperm.xlu0 %3904, %v3232
  %v3906 = vpop.permute.xlu0 %3905
  %3909 = vset.pattern.permute.xlu0 0
  %3910 = vperm.xlu0 %3909, %v3233
  %v3911 = vpop.permute.xlu0 %3910
  %3914 = vset.pattern.permute.xlu0 0
  %3915 = vperm.xlu0 %3914, %v3234
  %v3916 = vpop.permute.xlu0 %3915
  %3919 = vset.pattern.permute.xlu0 0
  %3920 = vperm.xlu0 %3919, %v3235
  %v3921 = vpop.permute.xlu0 %3920
  %3924 = vset.pattern.permute.xlu0 0
  %3925 = vperm.xlu0 %3924, %v3236
  %v3926 = vpop.permute.xlu0 %3925
  %3929 = vset.pattern.permute.xlu0 0
  %3930 = vperm.xlu0 %3929, %v3237
  %v3931 = vpop.permute.xlu0 %3930
  %3934 = vset.pattern.permute.xlu0 0
  %3935 = vperm.xlu0 %3934, %v3238
  %v3936 = vpop.permute.xlu0 %3935
  %3939 = vset.pattern.permute.xlu0 0
  %3940 = vperm.xlu0 %3939, %v3239
  %v3941 = vpop.permute.xlu0 %3940
  %3944 = vset.pattern.permute.xlu0 0
  %3945 = vperm.xlu0 %3944, %v3240
  %v3946 = vpop.permute.xlu0 %3945
  %v3948 = vadd.f32 %v3631, %v3564
  %v3949 = vadd.f32 %v3636, %v3565
  %v3950 = vadd.f32 %v3641, %v3566
  %v3951 = vadd.f32 %v3646, %v3567
  %v3952 = vadd.f32 %v3651, %v3568
  %v3953 = vadd.f32 %v3656, %v3569
  %v3954 = vadd.f32 %v3661, %v3570
  %v3955 = vadd.f32 %v3666, %v3571
  %v3956 = vadd.f32 %v3671, %v3572
  %v3957 = vadd.f32 %v3676, %v3573
  %v3958 = vadd.f32 %v3681, %v3574
  %v3959 = vadd.f32 %v3686, %v3575
  %v3960 = vadd.f32 %v3691, %v3576
  %v3961 = vadd.f32 %v3696, %v3577
  %v3962 = vadd.f32 %v3701, %v3578
  %v3963 = vadd.f32 %v3706, %v3579
  %v3964 = vadd.f32 %v3711, %v3580
  %v3965 = vadd.f32 %v3716, %v3581
  %v3966 = vadd.f32 %v3721, %v3582
  %v3967 = vadd.f32 %v3726, %v3583
  %v3968 = vadd.f32 %v3731, %v3584
  %v3969 = vadd.f32 %v3736, %v3585
  %v3970 = vadd.f32 %v3741, %v3586
  %v3971 = vadd.f32 %v3746, %v3587
  %v3972 = vadd.f32 %v3751, %v3588
  %v3973 = vadd.f32 %v3756, %v3589
  %v3974 = vadd.f32 %v3761, %v3590
  %v3975 = vadd.f32 %v3766, %v3591
  %v3976 = vadd.f32 %v3771, %v3592
  %v3977 = vadd.f32 %v3776, %v3593
  %v3978 = vadd.f32 %v3781, %v3594
  %v3979 = vadd.f32 %v3786, %v3595
  %v3980 = vadd.f32 %v3791, %v3596
  %v3981 = vadd.f32 %v3796, %v3597
  %v3982 = vadd.f32 %v3801, %v3598
  %v3983 = vadd.f32 %v3806, %v3599
  %v3984 = vadd.f32 %v3811, %v3600
  %v3985 = vadd.f32 %v3816, %v3601
  %v3986 = vadd.f32 %v3821, %v3602
  %v3987 = vadd.f32 %v3826, %v3603
  %v3988 = vadd.f32 %v3831, %v3604
  %v3989 = vadd.f32 %v3836, %v3605
  %v3990 = vadd.f32 %v3841, %v3606
  %v3991 = vadd.f32 %v3846, %v3607
  %v3992 = vadd.f32 %v3851, %v3608
  %v3993 = vadd.f32 %v3856, %v3609
  %v3994 = vadd.f32 %v3861, %v3610
  %v3995 = vadd.f32 %v3866, %v3611
  %v3996 = vadd.f32 %v3871, %v3612
  %v3997 = vadd.f32 %v3876, %v3613
  %v3998 = vadd.f32 %v3881, %v3614
  %v3999 = vadd.f32 %v3886, %v3615
  %v4000 = vadd.f32 %v3891, %v3616
  %v4001 = vadd.f32 %v3896, %v3617
  %v4002 = vadd.f32 %v3901, %v3618
  %v4003 = vadd.f32 %v3906, %v3619
  %v4004 = vadd.f32 %v3911, %v3620
  %v4005 = vadd.f32 %v3916, %v3621
  %v4006 = vadd.f32 %v3921, %v3622
  %v4007 = vadd.f32 %v3926, %v3623
  %v4008 = vadd.f32 %v3931, %v3624
  %v4009 = vadd.f32 %v3936, %v3625
  %v4010 = vadd.f32 %v3941, %v3626
  %v4011 = vadd.f32 %v3946, %v3627
  %vm4012 = vcmask 15360
  %4013 = vst.msk [vmem:[%s5] sm:$0xff] %vm4012, %v3948
  %4014 = vst.msk [vmem:[%s5 + $0x8] sm:$0xff] %vm4012, %v3949
  %4015 = vst.msk [vmem:[%s5 + $0x10] sm:$0xff] %vm4012, %v3950
  %4016 = vst.msk [vmem:[%s5 + $0x18] sm:$0xff] %vm4012, %v3951
  %4017 = vst.msk [vmem:[%s5 + $0x20] sm:$0xff] %vm4012, %v3952
  %4018 = vst.msk [vmem:[%s5 + $0x28] sm:$0xff] %vm4012, %v3953
  %4019 = vst.msk [vmem:[%s5 + $0x30] sm:$0xff] %vm4012, %v3954
  %4020 = vst.msk [vmem:[%s5 + $0x38] sm:$0xff] %vm4012, %v3955
  %4021 = vst.msk [vmem:[%s5 + $0x40] sm:$0xff] %vm4012, %v3956
  %4022 = vst.msk [vmem:[%s5 + $0x48] sm:$0xff] %vm4012, %v3957
  %4023 = vst.msk [vmem:[%s5 + $0x50] sm:$0xff] %vm4012, %v3958
  %4024 = vst.msk [vmem:[%s5 + $0x58] sm:$0xff] %vm4012, %v3959
  %4025 = vst.msk [vmem:[%s5 + $0x60] sm:$0xff] %vm4012, %v3960
  %4026 = vst.msk [vmem:[%s5 + $0x68] sm:$0xff] %vm4012, %v3961
  %4027 = vst.msk [vmem:[%s5 + $0x70] sm:$0xff] %vm4012, %v3962
  %4028 = vst.msk [vmem:[%s5 + $0x78] sm:$0xff] %vm4012, %v3963
  %4029 = vst.msk [vmem:[%s5 + $0x80] sm:$0xff] %vm4012, %v3964
  %4030 = vst.msk [vmem:[%s5 + $0x88] sm:$0xff] %vm4012, %v3965
  %4031 = vst.msk [vmem:[%s5 + $0x90] sm:$0xff] %vm4012, %v3966
  %4032 = vst.msk [vmem:[%s5 + $0x98] sm:$0xff] %vm4012, %v3967
  %4033 = vst.msk [vmem:[%s5 + $0xa0] sm:$0xff] %vm4012, %v3968
  %4034 = vst.msk [vmem:[%s5 + $0xa8] sm:$0xff] %vm4012, %v3969
  %4035 = vst.msk [vmem:[%s5 + $0xb0] sm:$0xff] %vm4012, %v3970
  %4036 = vst.msk [vmem:[%s5 + $0xb8] sm:$0xff] %vm4012, %v3971
  %4037 = vst.msk [vmem:[%s5 + $0xc0] sm:$0xff] %vm4012, %v3972
  %4038 = vst.msk [vmem:[%s5 + $0xc8] sm:$0xff] %vm4012, %v3973
  %4039 = vst.msk [vmem:[%s5 + $0xd0] sm:$0xff] %vm4012, %v3974
  %4040 = vst.msk [vmem:[%s5 + $0xd8] sm:$0xff] %vm4012, %v3975
  %4041 = vst.msk [vmem:[%s5 + $0xe0] sm:$0xff] %vm4012, %v3976
  %4042 = vst.msk [vmem:[%s5 + $0xe8] sm:$0xff] %vm4012, %v3977
  %4043 = vst.msk [vmem:[%s5 + $0xf0] sm:$0xff] %vm4012, %v3978
  %4044 = vst.msk [vmem:[%s5 + $0xf8] sm:$0xff] %vm4012, %v3979
  %4045 = vst.msk [vmem:[%s5 + $0x100] sm:$0xff] %vm4012, %v3980
  %4046 = vst.msk [vmem:[%s5 + $0x108] sm:$0xff] %vm4012, %v3981
  %4047 = vst.msk [vmem:[%s5 + $0x110] sm:$0xff] %vm4012, %v3982
  %4048 = vst.msk [vmem:[%s5 + $0x118] sm:$0xff] %vm4012, %v3983
  %4049 = vst.msk [vmem:[%s5 + $0x120] sm:$0xff] %vm4012, %v3984
  %4050 = vst.msk [vmem:[%s5 + $0x128] sm:$0xff] %vm4012, %v3985
  %4051 = vst.msk [vmem:[%s5 + $0x130] sm:$0xff] %vm4012, %v3986
  %4052 = vst.msk [vmem:[%s5 + $0x138] sm:$0xff] %vm4012, %v3987
  %4053 = vst.msk [vmem:[%s5 + $0x140] sm:$0xff] %vm4012, %v3988
  %4054 = vst.msk [vmem:[%s5 + $0x148] sm:$0xff] %vm4012, %v3989
  %4055 = vst.msk [vmem:[%s5 + $0x150] sm:$0xff] %vm4012, %v3990
  %4056 = vst.msk [vmem:[%s5 + $0x158] sm:$0xff] %vm4012, %v3991
  %4057 = vst.msk [vmem:[%s5 + $0x160] sm:$0xff] %vm4012, %v3992
  %4058 = vst.msk [vmem:[%s5 + $0x168] sm:$0xff] %vm4012, %v3993
  %4059 = vst.msk [vmem:[%s5 + $0x170] sm:$0xff] %vm4012, %v3994
  %4060 = vst.msk [vmem:[%s5 + $0x178] sm:$0xff] %vm4012, %v3995
  %4061 = vst.msk [vmem:[%s5 + $0x180] sm:$0xff] %vm4012, %v3996
  %4062 = vst.msk [vmem:[%s5 + $0x188] sm:$0xff] %vm4012, %v3997
  %4063 = vst.msk [vmem:[%s5 + $0x190] sm:$0xff] %vm4012, %v3998
  %4064 = vst.msk [vmem:[%s5 + $0x198] sm:$0xff] %vm4012, %v3999
  %4065 = vst.msk [vmem:[%s5 + $0x1a0] sm:$0xff] %vm4012, %v4000
  %4066 = vst.msk [vmem:[%s5 + $0x1a8] sm:$0xff] %vm4012, %v4001
  %4067 = vst.msk [vmem:[%s5 + $0x1b0] sm:$0xff] %vm4012, %v4002
  %4068 = vst.msk [vmem:[%s5 + $0x1b8] sm:$0xff] %vm4012, %v4003
  %4069 = vst.msk [vmem:[%s5 + $0x1c0] sm:$0xff] %vm4012, %v4004
  %4070 = vst.msk [vmem:[%s5 + $0x1c8] sm:$0xff] %vm4012, %v4005
  %4071 = vst.msk [vmem:[%s5 + $0x1d0] sm:$0xff] %vm4012, %v4006
  %4072 = vst.msk [vmem:[%s5 + $0x1d8] sm:$0xff] %vm4012, %v4007
  %4073 = vst.msk [vmem:[%s5 + $0x1e0] sm:$0xff] %vm4012, %v4008
  %4074 = vst.msk [vmem:[%s5 + $0x1e8] sm:$0xff] %vm4012, %v4009
  %4075 = vst.msk [vmem:[%s5 + $0x1f0] sm:$0xff] %vm4012, %v4010
  %4076 = vst.msk [vmem:[%s5 + $0x1f8] sm:$0xff] %vm4012, %v4011
  // Predicated region
  $region22: #{tpu_custom_call.1} parent=0 // pred_check
    _
  $region23: #{tpu_custom_call.1} parent=0 // pred_check_branch
    %4078 = sbr.rel (0) target = $region25
  $region24: #{tpu_custom_call.1} parent=0 // pred_region
    _
  $region25: #{tpu_custom_call.1} parent=0 // pred_fallthru
    _
  // Predicated region
  $region26: #{tpu_custom_call.1} parent=0 // pred_check
    _
  $region27: #{tpu_custom_call.1} parent=0 // pred_check_branch
    %4080 = sbr.rel (0) target = $region29
  $region28: #{tpu_custom_call.1} parent=0 // pred_region
    _
  $region29: #{tpu_custom_call.1} parent=0 // pred_fallthru
    _

</llo_original>
